<compile_context>
chip_gen: v7x
topology: tpu7x:2x2x1
jax: 0.10.0
libtpu: 0.0.40
codegen_flags: <defaults>
</compile_context>

<pallas_src>
import jax
import jax.numpy as jnp
from jax.experimental import pallas as pl
from jax.experimental.pallas import tpu as pltpu


def _neg_limit(dtype):
    # Identity element for max (correct -inf padding; int-safe as well).
    if jnp.issubdtype(dtype, jnp.floating):
        return float("-inf")
    return int(jnp.iinfo(dtype).min)


def spp_kernel(x_ref, o_ref, pad_ref):
    # x_ref  : (1, H, W, TC)       channel-last input tile (C on lanes)
    # o_ref  : (1, 4, H, W, TC)    slabs: [x, mp5(x), mp9(x), mp13(x)]
    # pad_ref: (H+4, W+4, TC)      scratch with a 2-wide -inf halo on all sides
    H, W, TC = x_ref.shape[1], x_ref.shape[2], x_ref.shape[3]
    dt = x_ref.dtype
    neg = _neg_limit(dt)

    # Refill only the halo strips (interior is overwritten by every pool call;
    # refilled every grid step so megacore sharding of the grid is safe).
    pad_ref[0:2, :, :] = jnp.full((2, W + 4, TC), neg, dt)
    pad_ref[H + 2:H + 4, :, :] = jnp.full((2, W + 4, TC), neg, dt)
    pad_ref[2:2 + H, 0:2, :] = jnp.full((H, 2, TC), neg, dt)
    pad_ref[2:2 + H, W + 2:W + 4, :] = jnp.full((H, 2, TC), neg, dt)

    def maxpool5_same(v):
        # 5x5, stride 1, pad 2, -inf padding == nn.MaxPool2d(5, 1, 2),
        # done separably: 1-D 5-tap max along W, then 1-D 5-tap max along H.
        pad_ref[2:2 + H, 2:2 + W, :] = v
        t = pad_ref[2:2 + H, 0:W, :]                   # tap d=0 initializes
        for d in range(1, 5):
            t = jnp.maximum(t, pad_ref[2:2 + H, d:d + W, :])
        pad_ref[2:2 + H, 2:2 + W, :] = t               # halo stays -inf
        u = pad_ref[0:H, 2:2 + W, :]
        for d in range(1, 5):
            u = jnp.maximum(u, pad_ref[d:d + H, 2:2 + W, :])
        return u

    x = x_ref[0]
    x1 = maxpool5_same(x)    # == MaxPool2d(5, 1, 2)
    x2 = maxpool5_same(x1)   # == MaxPool2d(9, 1, 4)
    x3 = maxpool5_same(x2)   # == MaxPool2d(13, 1, 6)

    o_ref[0, 0] = x
    o_ref[0, 1] = x1
    o_ref[0, 2] = x2
    o_ref[0, 3] = x3


def _pick_c_tile(C, H, W, itemsize, budget_bytes=24 << 20):
    # Largest lane-dense channel tile whose double-buffered in/out blocks plus
    # scratch fit a conservative VMEM budget (safe on v7x's 64 MiB).
    def vmem_need(tc):
        tile = H * W * tc * itemsize
        scratch = (H + 4) * (W + 4) * tc * itemsize
        return 10 * tile + scratch          # 2x in + 2x(4x) out + scratch
    cands = [t for t in (1024, 768, 512, 384, 256, 128) if C % t == 0]
    if not cands:
        return C
    for t in cands:
        if vmem_need(t) <= budget_bytes:
            return t
    return cands[-1]


def spp(x, *, c_tile=None):
    """x: (N, C, H, W) -> (N, 4C, H, W) == concat([x, mp5, mp9, mp13], dim=1)."""
    N, C, H, W = x.shape
    itemsize = jnp.dtype(x.dtype).itemsize
    tc = c_tile if c_tile is not None else _pick_c_tile(C, H, W, itemsize)
    assert C % tc == 0, (C, tc)

    tile = H * W * tc * itemsize
    scratch = (H + 4) * (W + 4) * tc * itemsize
    need = 10 * tile + scratch
    vmem_limit = int(min(max(need * 5 // 4, 32 << 20), 60 << 20))

    # Layout plumbing outside the kernel: put C on lanes.
    x_nhwc = jnp.transpose(x, (0, 2, 3, 1))           # (N, H, W, C)

    out5 = pl.pallas_call(
        spp_kernel,
        out_shape=jax.ShapeDtypeStruct((N, 4, H, W, C), x.dtype),
        grid=(N, C // tc),
        in_specs=[pl.BlockSpec((1, H, W, tc), lambda n, c: (n, 0, 0, c))],
        out_specs=pl.BlockSpec((1, 4, H, W, tc), lambda n, c: (n, 0, 0, 0, c)),
        scratch_shapes=[pltpu.VMEM((H + 4, W + 4, tc), x.dtype)],
        compiler_params=pltpu.CompilerParams(
            dimension_semantics=("parallel", "parallel"),
            vmem_limit_bytes=vmem_limit),
    )(x_nhwc)

    # (N, 4, H, W, C) -> (N, 4, C, H, W) -> (N, 4C, H, W): channel-concat order
    # [x, x1, x2, x3] exactly as torch.cat(..., dim=1).
    return jnp.transpose(out5, (0, 1, 4, 2, 3)).reshape(N, 4 * C, H, W)


def _spp_reference(x):
    # Pure-JAX reference mirroring the PyTorch module exactly.
    def mp(v, k, p):
        return jax.lax.reduce_window(
            v, -jnp.inf, jax.lax.max,
            window_dimensions=(1, 1, k, k),
            window_strides=(1, 1, 1, 1),
            padding=((0, 0), (0, 0), (p, p), (p, p)))
    return jnp.concatenate([x, mp(x, 5, 2), mp(x, 9, 4), mp(x, 13, 6)], axis=1)


if __name__ == "__main__":
    # Small toy shape consistent with the module.
    x = jax.random.normal(jax.random.PRNGKey(0), (2, 4, 16, 16), dtype=jnp.float32)
    out = spp(x)
    jax.block_until_ready(out)
    assert out.shape == (2, 16, 16, 16), out.shape
    assert jnp.allclose(out, _spp_reference(x)), "Pallas SPP mismatch (small)"

    # Lane-dense, channel-tiled path (C multiple of 128; c_tile < C -> grid=(1, 2)).
    x2 = jax.random.normal(jax.random.PRNGKey(1), (1, 256, 19, 19), dtype=jnp.float32)
    out2 = spp(x2, c_tile=128)
    jax.block_until_ready(out2)
    assert out2.shape == (1, 1024, 19, 19), out2.shape
    assert jnp.allclose(out2, _spp_reference(x2)), "Pallas SPP mismatch (tiled)"

    print("KERNEL_OK")
</pallas_src>

<mosaic_0001>
module attributes {stable_mosaic.version = 11 : i64} {
  func.func @spp_kernel(%arg0: i32, %arg1: i32, %arg2: memref<1x16x16x4xf32, #tpu.memory_space<vmem>>, %arg3: memref<1x4x16x16x4xf32, #tpu.memory_space<vmem>>, %arg4: memref<20x20x4xf32, #tpu.memory_space<vmem>>) attributes {dimension_semantics = [#tpu.dimension_semantics<parallel>, #tpu.dimension_semantics<parallel>], iteration_bounds = array<i64: 2, 1>, scalar_prefetch = 0 : i64, scratch_operands = 1 : i64, tpu.core_type = #tpu.core_type<tc>, window_params = [{transform_indices = @transform_0, window_bounds = array<i64: 1, 16, 16, 4>}, {transform_indices = @transform_1, window_bounds = array<i64: 1, 4, 16, 16, 4>}]} {
    %cst = arith.constant 0xFF800000 : f32
    %0 = vector.broadcast %cst : f32 to vector<2x20x4xf32>
    %c0 = arith.constant 0 : index
    %c0_0 = arith.constant 0 : index
    %c0_1 = arith.constant 0 : index
    %1 = vector.load %arg4[%c0, %c0_0, %c0_1] : memref<20x20x4xf32, #tpu.memory_space<vmem>>, vector<2x20x4xf32>
    tpu.vector_store %arg4[%c0, %c0_0, %c0_1], %0 {strides = array<i32>} : memref<20x20x4xf32, #tpu.memory_space<vmem>>, vector<2x20x4xf32>,
    %cst_2 = arith.constant 0xFF800000 : f32
    %2 = vector.broadcast %cst_2 : f32 to vector<2x20x4xf32>
    %c18 = arith.constant 18 : index
    %c0_3 = arith.constant 0 : index
    %c0_4 = arith.constant 0 : index
    %3 = vector.load %arg4[%c18, %c0_3, %c0_4] : memref<20x20x4xf32, #tpu.memory_space<vmem>>, vector<2x20x4xf32>
    tpu.vector_store %arg4[%c18, %c0_3, %c0_4], %2 {strides = array<i32>} : memref<20x20x4xf32, #tpu.memory_space<vmem>>, vector<2x20x4xf32>,
    %cst_5 = arith.constant 0xFF800000 : f32
    %4 = vector.broadcast %cst_5 : f32 to vector<16x2x4xf32>
    %c2 = arith.constant 2 : index
    %c0_6 = arith.constant 0 : index
    %c0_7 = arith.constant 0 : index
    %5 = vector.load %arg4[%c2, %c0_6, %c0_7] : memref<20x20x4xf32, #tpu.memory_space<vmem>>, vector<16x2x4xf32>
    tpu.vector_store %arg4[%c2, %c0_6, %c0_7], %4 {strides = array<i32>} : memref<20x20x4xf32, #tpu.memory_space<vmem>>, vector<16x2x4xf32>,
    %cst_8 = arith.constant 0xFF800000 : f32
    %6 = vector.broadcast %cst_8 : f32 to vector<16x2x4xf32>
    %c2_9 = arith.constant 2 : index
    %c18_10 = arith.constant 18 : index
    %c0_11 = arith.constant 0 : index
    %7 = vector.load %arg4[%c2_9, %c18_10, %c0_11] : memref<20x20x4xf32, #tpu.memory_space<vmem>>, vector<16x2x4xf32>
    tpu.vector_store %arg4[%c2_9, %c18_10, %c0_11], %6 {strides = array<i32>} : memref<20x20x4xf32, #tpu.memory_space<vmem>>, vector<16x2x4xf32>,
    %c0_12 = arith.constant 0 : index
    %c0_13 = arith.constant 0 : index
    %c0_14 = arith.constant 0 : index
    %c0_15 = arith.constant 0 : index
    %8 = vector.load %arg2[%c0_12, %c0_13, %c0_14, %c0_15] : memref<1x16x16x4xf32, #tpu.memory_space<vmem>>, vector<1x16x16x4xf32>
    %9 = vector.shape_cast %8 : vector<1x16x16x4xf32> to vector<16x16x4xf32>
    %c2_16 = arith.constant 2 : index
    %c2_17 = arith.constant 2 : index
    %c0_18 = arith.constant 0 : index
    %10 = vector.load %arg4[%c2_16, %c2_17, %c0_18] : memref<20x20x4xf32, #tpu.memory_space<vmem>>, vector<16x16x4xf32>
    tpu.vector_store %arg4[%c2_16, %c2_17, %c0_18], %9 {strides = array<i32>} : memref<20x20x4xf32, #tpu.memory_space<vmem>>, vector<16x16x4xf32>,
    %c2_19 = arith.constant 2 : index
    %c0_20 = arith.constant 0 : index
    %c0_21 = arith.constant 0 : index
    %11 = vector.load %arg4[%c2_19, %c0_20, %c0_21] : memref<20x20x4xf32, #tpu.memory_space<vmem>>, vector<16x16x4xf32>
    %c2_22 = arith.constant 2 : index
    %c1 = arith.constant 1 : index
    %c0_23 = arith.constant 0 : index
    %12 = vector.load %arg4[%c2_22, %c1, %c0_23] : memref<20x20x4xf32, #tpu.memory_space<vmem>>, vector<16x16x4xf32>
    %13 = arith.maximumf %11, %12 : vector<16x16x4xf32>
    %c2_24 = arith.constant 2 : index
    %c2_25 = arith.constant 2 : index
    %c0_26 = arith.constant 0 : index
    %14 = vector.load %arg4[%c2_24, %c2_25, %c0_26] : memref<20x20x4xf32, #tpu.memory_space<vmem>>, vector<16x16x4xf32>
    %15 = arith.maximumf %13, %14 : vector<16x16x4xf32>
    %c2_27 = arith.constant 2 : index
    %c3 = arith.constant 3 : index
    %c0_28 = arith.constant 0 : index
    %16 = vector.load %arg4[%c2_27, %c3, %c0_28] : memref<20x20x4xf32, #tpu.memory_space<vmem>>, vector<16x16x4xf32>
    %17 = arith.maximumf %15, %16 : vector<16x16x4xf32>
    %c2_29 = arith.constant 2 : index
    %c4 = arith.constant 4 : index
    %c0_30 = arith.constant 0 : index
    %18 = vector.load %arg4[%c2_29, %c4, %c0_30] : memref<20x20x4xf32, #tpu.memory_space<vmem>>, vector<16x16x4xf32>
    %19 = arith.maximumf %17, %18 : vector<16x16x4xf32>
    %c2_31 = arith.constant 2 : index
    %c2_32 = arith.constant 2 : index
    %c0_33 = arith.constant 0 : index
    %20 = vector.load %arg4[%c2_31, %c2_32, %c0_33] : memref<20x20x4xf32, #tpu.memory_space<vmem>>, vector<16x16x4xf32>
    tpu.vector_store %arg4[%c2_31, %c2_32, %c0_33], %19 {strides = array<i32>} : memref<20x20x4xf32, #tpu.memory_space<vmem>>, vector<16x16x4xf32>,
    %c0_34 = arith.constant 0 : index
    %c2_35 = arith.constant 2 : index
    %c0_36 = arith.constant 0 : index
    %21 = vector.load %arg4[%c0_34, %c2_35, %c0_36] : memref<20x20x4xf32, #tpu.memory_space<vmem>>, vector<16x16x4xf32>
    %c1_37 = arith.constant 1 : index
    %c2_38 = arith.constant 2 : index
    %c0_39 = arith.constant 0 : index
    %22 = vector.load %arg4[%c1_37, %c2_38, %c0_39] : memref<20x20x4xf32, #tpu.memory_space<vmem>>, vector<16x16x4xf32>
    %23 = arith.maximumf %21, %22 : vector<16x16x4xf32>
    %c2_40 = arith.constant 2 : index
    %c2_41 = arith.constant 2 : index
    %c0_42 = arith.constant 0 : index
    %24 = vector.load %arg4[%c2_40, %c2_41, %c0_42] : memref<20x20x4xf32, #tpu.memory_space<vmem>>, vector<16x16x4xf32>
    %25 = arith.maximumf %23, %24 : vector<16x16x4xf32>
    %c3_43 = arith.constant 3 : index
    %c2_44 = arith.constant 2 : index
    %c0_45 = arith.constant 0 : index
    %26 = vector.load %arg4[%c3_43, %c2_44, %c0_45] : memref<20x20x4xf32, #tpu.memory_space<vmem>>, vector<16x16x4xf32>
    %27 = arith.maximumf %25, %26 : vector<16x16x4xf32>
    %c4_46 = arith.constant 4 : index
    %c2_47 = arith.constant 2 : index
    %c0_48 = arith.constant 0 : index
    %28 = vector.load %arg4[%c4_46, %c2_47, %c0_48] : memref<20x20x4xf32, #tpu.memory_space<vmem>>, vector<16x16x4xf32>
    %29 = arith.maximumf %27, %28 : vector<16x16x4xf32>
    %c2_49 = arith.constant 2 : index
    %c2_50 = arith.constant 2 : index
    %c0_51 = arith.constant 0 : index
    %30 = vector.load %arg4[%c2_49, %c2_50, %c0_51] : memref<20x20x4xf32, #tpu.memory_space<vmem>>, vector<16x16x4xf32>
    tpu.vector_store %arg4[%c2_49, %c2_50, %c0_51], %29 {strides = array<i32>} : memref<20x20x4xf32, #tpu.memory_space<vmem>>, vector<16x16x4xf32>,
    %c2_52 = arith.constant 2 : index
    %c0_53 = arith.constant 0 : index
    %c0_54 = arith.constant 0 : index
    %31 = vector.load %arg4[%c2_52, %c0_53, %c0_54] : memref<20x20x4xf32, #tpu.memory_space<vmem>>, vector<16x16x4xf32>
    %c2_55 = arith.constant 2 : index
    %c1_56 = arith.constant 1 : index
    %c0_57 = arith.constant 0 : index
    %32 = vector.load %arg4[%c2_55, %c1_56, %c0_57] : memref<20x20x4xf32, #tpu.memory_space<vmem>>, vector<16x16x4xf32>
    %33 = arith.maximumf %31, %32 : vector<16x16x4xf32>
    %c2_58 = arith.constant 2 : index
    %c2_59 = arith.constant 2 : index
    %c0_60 = arith.constant 0 : index
    %34 = vector.load %arg4[%c2_58, %c2_59, %c0_60] : memref<20x20x4xf32, #tpu.memory_space<vmem>>, vector<16x16x4xf32>
    %35 = arith.maximumf %33, %34 : vector<16x16x4xf32>
    %c2_61 = arith.constant 2 : index
    %c3_62 = arith.constant 3 : index
    %c0_63 = arith.constant 0 : index
    %36 = vector.load %arg4[%c2_61, %c3_62, %c0_63] : memref<20x20x4xf32, #tpu.memory_space<vmem>>, vector<16x16x4xf32>
    %37 = arith.maximumf %35, %36 : vector<16x16x4xf32>
    %c2_64 = arith.constant 2 : index
    %c4_65 = arith.constant 4 : index
    %c0_66 = arith.constant 0 : index
    %38 = vector.load %arg4[%c2_64, %c4_65, %c0_66] : memref<20x20x4xf32, #tpu.memory_space<vmem>>, vector<16x16x4xf32>
    %39 = arith.maximumf %37, %38 : vector<16x16x4xf32>
    %c2_67 = arith.constant 2 : index
    %c2_68 = arith.constant 2 : index
    %c0_69 = arith.constant 0 : index
    %40 = vector.load %arg4[%c2_67, %c2_68, %c0_69] : memref<20x20x4xf32, #tpu.memory_space<vmem>>, vector<16x16x4xf32>
    tpu.vector_store %arg4[%c2_67, %c2_68, %c0_69], %39 {strides = array<i32>} : memref<20x20x4xf32, #tpu.memory_space<vmem>>, vector<16x16x4xf32>,
    %c0_70 = arith.constant 0 : index
    %c2_71 = arith.constant 2 : index
    %c0_72 = arith.constant 0 : index
    %41 = vector.load %arg4[%c0_70, %c2_71, %c0_72] : memref<20x20x4xf32, #tpu.memory_space<vmem>>, vector<16x16x4xf32>
    %c1_73 = arith.constant 1 : index
    %c2_74 = arith.constant 2 : index
    %c0_75 = arith.constant 0 : index
    %42 = vector.load %arg4[%c1_73, %c2_74, %c0_75] : memref<20x20x4xf32, #tpu.memory_space<vmem>>, vector<16x16x4xf32>
    %43 = arith.maximumf %41, %42 : vector<16x16x4xf32>
    %c2_76 = arith.constant 2 : index
    %c2_77 = arith.constant 2 : index
    %c0_78 = arith.constant 0 : index
    %44 = vector.load %arg4[%c2_76, %c2_77, %c0_78] : memref<20x20x4xf32, #tpu.memory_space<vmem>>, vector<16x16x4xf32>
    %45 = arith.maximumf %43, %44 : vector<16x16x4xf32>
    %c3_79 = arith.constant 3 : index
    %c2_80 = arith.constant 2 : index
    %c0_81 = arith.constant 0 : index
    %46 = vector.load %arg4[%c3_79, %c2_80, %c0_81] : memref<20x20x4xf32, #tpu.memory_space<vmem>>, vector<16x16x4xf32>
    %47 = arith.maximumf %45, %46 : vector<16x16x4xf32>
    %c4_82 = arith.constant 4 : index
    %c2_83 = arith.constant 2 : index
    %c0_84 = arith.constant 0 : index
    %48 = vector.load %arg4[%c4_82, %c2_83, %c0_84] : memref<20x20x4xf32, #tpu.memory_space<vmem>>, vector<16x16x4xf32>
    %49 = arith.maximumf %47, %48 : vector<16x16x4xf32>
    %c2_85 = arith.constant 2 : index
    %c2_86 = arith.constant 2 : index
    %c0_87 = arith.constant 0 : index
    %50 = vector.load %arg4[%c2_85, %c2_86, %c0_87] : memref<20x20x4xf32, #tpu.memory_space<vmem>>, vector<16x16x4xf32>
    tpu.vector_store %arg4[%c2_85, %c2_86, %c0_87], %49 {strides = array<i32>} : memref<20x20x4xf32, #tpu.memory_space<vmem>>, vector<16x16x4xf32>,
    %c2_88 = arith.constant 2 : index
    %c0_89 = arith.constant 0 : index
    %c0_90 = arith.constant 0 : index
    %51 = vector.load %arg4[%c2_88, %c0_89, %c0_90] : memref<20x20x4xf32, #tpu.memory_space<vmem>>, vector<16x16x4xf32>
    %c2_91 = arith.constant 2 : index
    %c1_92 = arith.constant 1 : index
    %c0_93 = arith.constant 0 : index
    %52 = vector.load %arg4[%c2_91, %c1_92, %c0_93] : memref<20x20x4xf32, #tpu.memory_space<vmem>>, vector<16x16x4xf32>
    %53 = arith.maximumf %51, %52 : vector<16x16x4xf32>
    %c2_94 = arith.constant 2 : index
    %c2_95 = arith.constant 2 : index
    %c0_96 = arith.constant 0 : index
    %54 = vector.load %arg4[%c2_94, %c2_95, %c0_96] : memref<20x20x4xf32, #tpu.memory_space<vmem>>, vector<16x16x4xf32>
    %55 = arith.maximumf %53, %54 : vector<16x16x4xf32>
    %c2_97 = arith.constant 2 : index
    %c3_98 = arith.constant 3 : index
    %c0_99 = arith.constant 0 : index
    %56 = vector.load %arg4[%c2_97, %c3_98, %c0_99] : memref<20x20x4xf32, #tpu.memory_space<vmem>>, vector<16x16x4xf32>
    %57 = arith.maximumf %55, %56 : vector<16x16x4xf32>
    %c2_100 = arith.constant 2 : index
    %c4_101 = arith.constant 4 : index
    %c0_102 = arith.constant 0 : index
    %58 = vector.load %arg4[%c2_100, %c4_101, %c0_102] : memref<20x20x4xf32, #tpu.memory_space<vmem>>, vector<16x16x4xf32>
    %59 = arith.maximumf %57, %58 : vector<16x16x4xf32>
    %c2_103 = arith.constant 2 : index
    %c2_104 = arith.constant 2 : index
    %c0_105 = arith.constant 0 : index
    %60 = vector.load %arg4[%c2_103, %c2_104, %c0_105] : memref<20x20x4xf32, #tpu.memory_space<vmem>>, vector<16x16x4xf32>
    tpu.vector_store %arg4[%c2_103, %c2_104, %c0_105], %59 {strides = array<i32>} : memref<20x20x4xf32, #tpu.memory_space<vmem>>, vector<16x16x4xf32>,
    %c0_106 = arith.constant 0 : index
    %c2_107 = arith.constant 2 : index
    %c0_108 = arith.constant 0 : index
    %61 = vector.load %arg4[%c0_106, %c2_107, %c0_108] : memref<20x20x4xf32, #tpu.memory_space<vmem>>, vector<16x16x4xf32>
    %c1_109 = arith.constant 1 : index
    %c2_110 = arith.constant 2 : index
    %c0_111 = arith.constant 0 : index
    %62 = vector.load %arg4[%c1_109, %c2_110, %c0_111] : memref<20x20x4xf32, #tpu.memory_space<vmem>>, vector<16x16x4xf32>
    %63 = arith.maximumf %61, %62 : vector<16x16x4xf32>
    %c2_112 = arith.constant 2 : index
    %c2_113 = arith.constant 2 : index
    %c0_114 = arith.constant 0 : index
    %64 = vector.load %arg4[%c2_112, %c2_113, %c0_114] : memref<20x20x4xf32, #tpu.memory_space<vmem>>, vector<16x16x4xf32>
    %65 = arith.maximumf %63, %64 : vector<16x16x4xf32>
    %c3_115 = arith.constant 3 : index
    %c2_116 = arith.constant 2 : index
    %c0_117 = arith.constant 0 : index
    %66 = vector.load %arg4[%c3_115, %c2_116, %c0_117] : memref<20x20x4xf32, #tpu.memory_space<vmem>>, vector<16x16x4xf32>
    %67 = arith.maximumf %65, %66 : vector<16x16x4xf32>
    %c4_118 = arith.constant 4 : index
    %c2_119 = arith.constant 2 : index
    %c0_120 = arith.constant 0 : index
    %68 = vector.load %arg4[%c4_118, %c2_119, %c0_120] : memref<20x20x4xf32, #tpu.memory_space<vmem>>, vector<16x16x4xf32>
    %69 = arith.maximumf %67, %68 : vector<16x16x4xf32>
    %c0_121 = arith.constant 0 : index
    %c0_122 = arith.constant 0 : index
    %c0_123 = arith.constant 0 : index
    %c0_124 = arith.constant 0 : index
    %c0_125 = arith.constant 0 : index
    %70 = vector.load %arg3[%c0_121, %c0_122, %c0_123, %c0_124, %c0_125] : memref<1x4x16x16x4xf32, #tpu.memory_space<vmem>>, vector<1x1x16x16x4xf32>
    %71 = vector.shape_cast %70 : vector<1x1x16x16x4xf32> to vector<16x16x4xf32>
    %72 = vector.shape_cast %9 : vector<16x16x4xf32> to vector<1x1x16x16x4xf32>
    tpu.vector_store %arg3[%c0_121, %c0_122, %c0_123, %c0_124, %c0_125], %72 {strides = array<i32>} : memref<1x4x16x16x4xf32, #tpu.memory_space<vmem>>, vector<1x1x16x16x4xf32>,
    %c0_126 = arith.constant 0 : index
    %c1_127 = arith.constant 1 : index
    %c0_128 = arith.constant 0 : index
    %c0_129 = arith.constant 0 : index
    %c0_130 = arith.constant 0 : index
    %73 = vector.load %arg3[%c0_126, %c1_127, %c0_128, %c0_129, %c0_130] : memref<1x4x16x16x4xf32, #tpu.memory_space<vmem>>, vector<1x1x16x16x4xf32>
    %74 = vector.shape_cast %73 : vector<1x1x16x16x4xf32> to vector<16x16x4xf32>
    %75 = vector.shape_cast %29 : vector<16x16x4xf32> to vector<1x1x16x16x4xf32>
    tpu.vector_store %arg3[%c0_126, %c1_127, %c0_128, %c0_129, %c0_130], %75 {strides = array<i32>} : memref<1x4x16x16x4xf32, #tpu.memory_space<vmem>>, vector<1x1x16x16x4xf32>,
    %c0_131 = arith.constant 0 : index
    %c2_132 = arith.constant 2 : index
    %c0_133 = arith.constant 0 : index
    %c0_134 = arith.constant 0 : index
    %c0_135 = arith.constant 0 : index
    %76 = vector.load %arg3[%c0_131, %c2_132, %c0_133, %c0_134, %c0_135] : memref<1x4x16x16x4xf32, #tpu.memory_space<vmem>>, vector<1x1x16x16x4xf32>
    %77 = vector.shape_cast %76 : vector<1x1x16x16x4xf32> to vector<16x16x4xf32>
    %78 = vector.shape_cast %49 : vector<16x16x4xf32> to vector<1x1x16x16x4xf32>
    tpu.vector_store %arg3[%c0_131, %c2_132, %c0_133, %c0_134, %c0_135], %78 {strides = array<i32>} : memref<1x4x16x16x4xf32, #tpu.memory_space<vmem>>, vector<1x1x16x16x4xf32>,
    %c0_136 = arith.constant 0 : index
    %c3_137 = arith.constant 3 : index
    %c0_138 = arith.constant 0 : index
    %c0_139 = arith.constant 0 : index
    %c0_140 = arith.constant 0 : index
    %79 = vector.load %arg3[%c0_136, %c3_137, %c0_138, %c0_139, %c0_140] : memref<1x4x16x16x4xf32, #tpu.memory_space<vmem>>, vector<1x1x16x16x4xf32>
    %80 = vector.shape_cast %79 : vector<1x1x16x16x4xf32> to vector<16x16x4xf32>
    %81 = vector.shape_cast %69 : vector<16x16x4xf32> to vector<1x1x16x16x4xf32>
    tpu.vector_store %arg3[%c0_136, %c3_137, %c0_138, %c0_139, %c0_140], %81 {strides = array<i32>} : memref<1x4x16x16x4xf32, #tpu.memory_space<vmem>>, vector<1x1x16x16x4xf32>,
    return
  }
  func.func @transform_0(%arg0: i32, %arg1: i32) -> (i32, i32, i32, i32) {
    %c0_i32 = arith.constant 0 : i32
    %c0_i32_0 = arith.constant 0 : i32
    %c0_i32_1 = arith.constant 0 : i32
    return %arg0, %c0_i32, %c0_i32_0, %arg1 : i32, i32, i32, i32
  }
  func.func @transform_1(%arg0: i32, %arg1: i32) -> (i32, i32, i32, i32, i32) {
    %c0_i32 = arith.constant 0 : i32
    %c0_i32_0 = arith.constant 0 : i32
    %c0_i32_1 = arith.constant 0 : i32
    %c0_i32_2 = arith.constant 0 : i32
    return %arg0, %c0_i32, %c0_i32_0, %c0_i32_1, %arg1 : i32, i32, i32, i32, i32
  }
}

</mosaic_0001>

<llo_original>
// kernel: tpu_custom_call.1
$region0: #{tpu_custom_call.1}
  #allocation0 [shape = 'u32[]', space=smem, size = 0x4, offset = 0x4, fixed_abs, tag = 'smem constant byte address 0x4 - core index']
  #allocation1 [shape = 'u32[144,128]{1,0:T(1,128)}', space=vmem, size = 0x12000, scoped, tag = 'internal scratch']
  #allocation2 [shape = 'f32[20,20,4]{2,1,0:T(8,128)}', space=vmem, size = 0x3c000, scoped, tag = 'scratch operand']
  %s0 = inlined_call_operand.vmem [shape: f32[2,16,16,4], index: 0, kind: input, shape index: {}]
  %s1 = inlined_call_operand.vmem [shape: f32[2,4,16,16,4], index: 1, kind: output, shape index: {}]
  %s2 = sld [smem:[#allocation0]]
  $region37: #{tpu_custom_call.1} parent=0
    _
  %s4 = ssub.s32 1, %s2
  %s5 = scalar_select 0, %s4, %s2
  loop: start=0, step=1, limit=4
  $region2: #{tpu_custom_call.1} parent=0 // loop_pre_header
    _
  $region3: #{tpu_custom_call.1} parent=0 // loop_header
    %s7 = sphi 0, %s11
    %p8 = scmp.ge.s32.totalorder %s7, 4
    %s14 = sphi 0, %s26
    %s15 = sphi 0, %s22
    %s16 = sphi 0, %s14
    %s17 = sphi 0, %s15
    %s18 = sphi 0, %s16
    %s19 = sphi 0, %s17
    %s31 = sphi 0, %s33
    %s34 = sphi 0, %s31
    %s35 = sphi 0, %s34
    %s51 = sphi 0, %s35
    %s59 = sphi 0, %s61
    %s62 = sphi 0, %s59
    %s63 = sphi 0, %s62
    %s79 = sphi 0, %s63
  $region4: #{tpu_custom_call.1} parent=0 // loop_header_branch
    %10 = sbr.rel (%p8) target = $region8
  $region5: #{tpu_custom_call.1} parent=0 // loop_body
    %s12 = ssub.s32 %s7, 1
    %s13 = ssub.s32 %s7, 2
    %s20 = sadd.s32 1, %s15
    %p21 = scmp.ge.s32.totalorder %s20, 1
    %s22 = scalar_select %p21, 0, %s20
    %s23 = sadd.s32 1, %s14
    %s24 = scalar_select %p21, %s23, %s14
    %p25 = scmp.ge.s32.totalorder %s24, 2
    %s26 = scalar_select %p25, 0, %s24
    %s27 = ssub.s32 %s14, %s26
    %s28 = ssub.s32 %s15, %s22
    %s29 = sor.u32 %s27, %s28
    %p30 = scmp.eq.s32.totalorder %s29, 0
    %s32 = sadd.s32 %s31, 1
    %s33 = scalar_select %p30, %s31, %s32
    %p36 = pneg %p30
    %p37 = scmp.eq.s32.totalorder %s7, 1
    %p38 = por %p36, %p37
    %p39 = scmp.ne.s32.totalorder %s31, %s34
    %p40 = scmp.eq.s32.totalorder %s7, 0
    %p41 = por %p39, %p40
    %p42 = scmp.ne.s32.totalorder %s31, %s34
    %p43 = scmp.eq.s32.totalorder %s12, 1
    %p44 = por %p42, %p43
    %p45 = scmp.ne.s32.totalorder %s34, %s35
    %p46 = scmp.eq.s32.totalorder %s12, 0
    %p47 = por %p45, %p46
    %p48 = scmp.ne.s32.totalorder %s34, %s35
    %p49 = scmp.eq.s32.totalorder %s13, 1
    %p50 = por %p48, %p49
    %p52 = scmp.ne.s32.totalorder %s35, %s51
    %p53 = scmp.eq.s32.totalorder %s13, 0
    %p54 = por %p52, %p53
    %s55 = ssub.s32 %s14, %s26
    %s56 = ssub.s32 %s15, %s22
    %s57 = sor.u32 %s55, %s56
    %p58 = scmp.eq.s32.totalorder %s57, 0
    %s60 = sadd.s32 %s59, 1
    %s61 = scalar_select %p58, %s59, %s60
    %p64 = pneg %p58
    %p65 = scmp.eq.s32.totalorder %s7, 1
    %p66 = por %p64, %p65
    %p67 = scmp.ne.s32.totalorder %s59, %s62
    %p68 = scmp.eq.s32.totalorder %s7, 0
    %p69 = por %p67, %p68
    %p70 = scmp.ne.s32.totalorder %s59, %s62
    %p71 = scmp.eq.s32.totalorder %s12, 1
    %p72 = por %p70, %p71
    %p73 = scmp.ne.s32.totalorder %s62, %s63
    %p74 = scmp.eq.s32.totalorder %s12, 0
    %p75 = por %p73, %p74
    %p76 = scmp.ne.s32.totalorder %s62, %s63
    %p77 = scmp.eq.s32.totalorder %s13, 1
    %p78 = por %p76, %p77
    %p80 = scmp.ne.s32.totalorder %s63, %s79
    %p81 = scmp.eq.s32.totalorder %s13, 0
    %p82 = por %p80, %p81
    %p83 = scmp.le.s32.totalorder 1, %s7
    %p84 = scmp.lt.s32.totalorder %s7, 3
    %p85 = pnand %p83, %p84
    %p86 = pneg %p85
    // Predicated region
    $region9: #{tpu_custom_call.1} parent=5 // pred_check
      _
    $region10: #{tpu_custom_call.1} parent=5 // pred_check_branch
      %88 = sbr.rel (%p85) target = $region12
    $region11: #{tpu_custom_call.1} parent=5 // pred_region
      %s89 = ssub.s32 %s7, 1
    $region12: #{tpu_custom_call.1} parent=5 // pred_fallthru
      _
    %p90 = scmp.lt.s32.totalorder %s7, 2
    // Predicated region
    $region13: #{tpu_custom_call.1} parent=5 // pred_check
      %p91 = pneg %p90
    $region14: #{tpu_custom_call.1} parent=5 // pred_check_branch
      %93 = sbr.rel (%p91) target = $region16
    $region15: #{tpu_custom_call.1} parent=5 // pred_region
      // Predicated region
      $region17: #{tpu_custom_call.1} parent=15 // pred_check
        %p94 = pneg %p41
      $region18: #{tpu_custom_call.1} parent=15 // pred_check_branch
        %96 = sbr.rel (%p94) target = $region20
      $region19: #{tpu_custom_call.1} parent=15 // pred_region
        %p97 = scmp.lt.s32.totalorder %s14, 1
        %s98 = scalar_select %p97, %s14, 1
        %p99 = scmp.lt.s32.totalorder %s15, 0
        %s100 = scalar_select %p99, %s15, 0
        %s101 = smul.addr %s98, 32
        %s102 = sadd.s32 %s100, %s101
        %s103 = smul.addr %s102, 8
        %s104 = scalar_lea.vmem %s0, %s103
      $region20: #{tpu_custom_call.1} parent=15 // pred_fallthru
        _
    $region16: #{tpu_custom_call.1} parent=5 // pred_fallthru
      _
    %p105 = scmp.le.s32.totalorder 1, %s7
    %p106 = scmp.lt.s32.totalorder %s7, 3
    %p107 = pnand %p105, %p106
    %p108 = pneg %p107
    // Predicated region
    $region21: #{tpu_custom_call.1} parent=5 // pred_check
      _
    $region22: #{tpu_custom_call.1} parent=5 // pred_check_branch
      %110 = sbr.rel (%p107) target = $region24
    $region23: #{tpu_custom_call.1} parent=5 // pred_region
      %s111 = ssub.s32 %s7, 1
      %p112 = scmp.lt.s32.totalorder %s16, 1
      %s113 = scalar_select %p112, %s16, 1
      %p114 = scmp.lt.s32.totalorder %s17, 0
      %s115 = scalar_select %p114, %s17, 0
      %s116 = smul.addr %s113, 32
      %s117 = sadd.s32 %s115, %s116
      %s118 = smul.addr %s117, 8
      %s119 = scalar_lea.vmem %s0, %s118
      %p120 = pneg %p47
      %p121 = pneg %p44
      %p122 = pneg %p75
      %p123 = pneg %p72
      %p124 = scmp.lt.s32.totalorder %s16, 1
      %s125 = scalar_select %p124, %s16, 1
      %p126 = scmp.lt.s32.totalorder %s17, 0
      %s127 = scalar_select %p126, %s17, 0
      %s128 = smul.addr %s125, 128
      %s129 = sadd.s32 %s127, %s128
      %s130 = smul.addr %s129, 8
      %s131 = scalar_lea.vmem %s1, %s130
      %p132 = scmp.lt.s32.totalorder %s16, 1
      %s133 = scalar_select %p132, %s16, 1
      %p134 = scmp.lt.s32.totalorder %s17, 0
      %s135 = scalar_select %p134, %s17, 0
      %s136 = smul.addr %s133, 32
      %s137 = sadd.s32 %s135, %s136
      %s138 = smul.addr %s137, 8
      %s139 = scalar_lea.vmem %s0, %s138
      %p140 = scmp.lt.s32.totalorder %s16, 1
      %s141 = scalar_select %p140, %s16, 1
      %p142 = scmp.lt.s32.totalorder %s17, 0
      %s143 = scalar_select %p142, %s17, 0
      %s144 = smul.addr %s141, 128
      %s145 = sadd.s32 %s143, %s144
      %s146 = smul.addr %s145, 8
      %s147 = scalar_lea.vmem %s1, %s146
      %vm148 = vcmask 31744
      %149 = vst.msk [vmem:[#allocation2] sm:$0xff] %vm148, -inf
      %150 = vst.msk [vmem:[#allocation2 + $0x8] sm:$0xff] %vm148, -inf
      %vm151 = vcmask 27648
      %152 = vst.msk [vmem:[#allocation2 + $0x10] sm:$0xf] %vm151, -inf
      %153 = vst.msk [vmem:[#allocation2 + $0x18] sm:$0xff] %vm148, -inf
      %154 = vst.msk [vmem:[#allocation2 + $0x20] sm:$0xff] %vm148, -inf
      %155 = vst.msk [vmem:[#allocation2 + $0x28] sm:$0xf] %vm151, -inf
      %s156 = scalar_lea.vmem [#allocation2], 432
      %157 = vst.msk [vmem:[%s156] sm:$0xff] %vm148, -inf
      %158 = vst.msk [vmem:[%s156 + $0x8] sm:$0xff] %vm148, -inf
      %159 = vst.msk [vmem:[%s156 + $0x10] sm:$0xf] %vm151, -inf
      %160 = vst.msk [vmem:[%s156 + $0x18] sm:$0xff] %vm148, -inf
      %161 = vst.msk [vmem:[%s156 + $0x20] sm:$0xff] %vm148, -inf
      %162 = vst.msk [vmem:[%s156 + $0x28] sm:$0xf] %vm151, -inf
      %s163 = scalar_lea.vmem [#allocation2], 48
      %vm164 = vcmask 25600
      %165 = vst.msk [vmem:[%s163] sm:$0x3] %vm164, -inf
      %166 = vst.msk [vmem:[%s163 + $0x18] sm:$0x3] %vm164, -inf
      %167 = vst.msk [vmem:[%s163 + $0x30] sm:$0x3] %vm164, -inf
      %168 = vst.msk [vmem:[%s163 + $0x48] sm:$0x3] %vm164, -inf
      %169 = vst.msk [vmem:[%s163 + $0x60] sm:$0x3] %vm164, -inf
      %170 = vst.msk [vmem:[%s163 + $0x78] sm:$0x3] %vm164, -inf
      %171 = vst.msk [vmem:[%s163 + $0x90] sm:$0x3] %vm164, -inf
      %172 = vst.msk [vmem:[%s163 + $0xa8] sm:$0x3] %vm164, -inf
      %173 = vst.msk [vmem:[%s163 + $0xc0] sm:$0x3] %vm164, -inf
      %174 = vst.msk [vmem:[%s163 + $0xd8] sm:$0x3] %vm164, -inf
      %175 = vst.msk [vmem:[%s163 + $0xf0] sm:$0x3] %vm164, -inf
      %176 = vst.msk [vmem:[%s163 + $0x108] sm:$0x3] %vm164, -inf
      %177 = vst.msk [vmem:[%s163 + $0x120] sm:$0x3] %vm164, -inf
      %178 = vst.msk [vmem:[%s163 + $0x138] sm:$0x3] %vm164, -inf
      %179 = vst.msk [vmem:[%s163 + $0x150] sm:$0x3] %vm164, -inf
      %180 = vst.msk [vmem:[%s163 + $0x168] sm:$0x3] %vm164, -inf
      %181 = vst.msk [vmem:[%s163 + $0x12] sm:$0x3] %vm164, -inf
      %182 = vst.msk [vmem:[%s163 + $0x2a] sm:$0x3] %vm164, -inf
      %183 = vst.msk [vmem:[%s163 + $0x42] sm:$0x3] %vm164, -inf
      %184 = vst.msk [vmem:[%s163 + $0x5a] sm:$0x3] %vm164, -inf
      %185 = vst.msk [vmem:[%s163 + $0x72] sm:$0x3] %vm164, -inf
      %186 = vst.msk [vmem:[%s163 + $0x8a] sm:$0x3] %vm164, -inf
      %187 = vst.msk [vmem:[%s163 + $0xa2] sm:$0x3] %vm164, -inf
      %188 = vst.msk [vmem:[%s163 + $0xba] sm:$0x3] %vm164, -inf
      %189 = vst.msk [vmem:[%s163 + $0xd2] sm:$0x3] %vm164, -inf
      %190 = vst.msk [vmem:[%s163 + $0xea] sm:$0x3] %vm164, -inf
      %191 = vst.msk [vmem:[%s163 + $0x102] sm:$0x3] %vm164, -inf
      %192 = vst.msk [vmem:[%s163 + $0x11a] sm:$0x3] %vm164, -inf
      %193 = vst.msk [vmem:[%s163 + $0x132] sm:$0x3] %vm164, -inf
      %194 = vst.msk [vmem:[%s163 + $0x14a] sm:$0x3] %vm164, -inf
      %195 = vst.msk [vmem:[%s163 + $0x162] sm:$0x3] %vm164, -inf
      %196 = vst.msk [vmem:[%s163 + $0x17a] sm:$0x3] %vm164, -inf
      %v197 = vld [vmem:[%s139] sm:$0xff]
      %v198 = vld [vmem:[%s139 + $0x8] sm:$0xff]
      %v199 = vld [vmem:[%s139 + $0x10] sm:$0xff]
      %v200 = vld [vmem:[%s139 + $0x18] sm:$0xff]
      %v201 = vld [vmem:[%s139 + $0x20] sm:$0xff]
      %v202 = vld [vmem:[%s139 + $0x28] sm:$0xff]
      %v203 = vld [vmem:[%s139 + $0x30] sm:$0xff]
      %v204 = vld [vmem:[%s139 + $0x38] sm:$0xff]
      %v205 = vld [vmem:[%s139 + $0x40] sm:$0xff]
      %v206 = vld [vmem:[%s139 + $0x48] sm:$0xff]
      %v207 = vld [vmem:[%s139 + $0x50] sm:$0xff]
      %v208 = vld [vmem:[%s139 + $0x58] sm:$0xff]
      %v209 = vld [vmem:[%s139 + $0x60] sm:$0xff]
      %v210 = vld [vmem:[%s139 + $0x68] sm:$0xff]
      %v211 = vld [vmem:[%s139 + $0x70] sm:$0xff]
      %v212 = vld [vmem:[%s139 + $0x78] sm:$0xff]
      %v213 = vld [vmem:[%s139 + $0x80] sm:$0xff]
      %v214 = vld [vmem:[%s139 + $0x88] sm:$0xff]
      %v215 = vld [vmem:[%s139 + $0x90] sm:$0xff]
      %v216 = vld [vmem:[%s139 + $0x98] sm:$0xff]
      %v217 = vld [vmem:[%s139 + $0xa0] sm:$0xff]
      %v218 = vld [vmem:[%s139 + $0xa8] sm:$0xff]
      %v219 = vld [vmem:[%s139 + $0xb0] sm:$0xff]
      %v220 = vld [vmem:[%s139 + $0xb8] sm:$0xff]
      %v221 = vld [vmem:[%s139 + $0xc0] sm:$0xff]
      %v222 = vld [vmem:[%s139 + $0xc8] sm:$0xff]
      %v223 = vld [vmem:[%s139 + $0xd0] sm:$0xff]
      %v224 = vld [vmem:[%s139 + $0xd8] sm:$0xff]
      %v225 = vld [vmem:[%s139 + $0xe0] sm:$0xff]
      %v226 = vld [vmem:[%s139 + $0xe8] sm:$0xff]
      %v227 = vld [vmem:[%s139 + $0xf0] sm:$0xff]
      %v228 = vld [vmem:[%s139 + $0xf8] sm:$0xff]
      %229 = vst.msk [vmem:[%s163 + $0x2] sm:$0xff] %vm148, %v197
      %230 = vst.msk [vmem:[%s163 + $0xa] sm:$0xff] %vm148, %v198
      %231 = vst.msk [vmem:[%s163 + $0x1a] sm:$0xff] %vm148, %v199
      %232 = vst.msk [vmem:[%s163 + $0x22] sm:$0xff] %vm148, %v200
      %233 = vst.msk [vmem:[%s163 + $0x32] sm:$0xff] %vm148, %v201
      %234 = vst.msk [vmem:[%s163 + $0x3a] sm:$0xff] %vm148, %v202
      %235 = vst.msk [vmem:[%s163 + $0x4a] sm:$0xff] %vm148, %v203
      %236 = vst.msk [vmem:[%s163 + $0x52] sm:$0xff] %vm148, %v204
      %237 = vst.msk [vmem:[%s163 + $0x62] sm:$0xff] %vm148, %v205
      %238 = vst.msk [vmem:[%s163 + $0x6a] sm:$0xff] %vm148, %v206
      %239 = vst.msk [vmem:[%s163 + $0x7a] sm:$0xff] %vm148, %v207
      %240 = vst.msk [vmem:[%s163 + $0x82] sm:$0xff] %vm148, %v208
      %241 = vst.msk [vmem:[%s163 + $0x92] sm:$0xff] %vm148, %v209
      %242 = vst.msk [vmem:[%s163 + $0x9a] sm:$0xff] %vm148, %v210
      %243 = vst.msk [vmem:[%s163 + $0xaa] sm:$0xff] %vm148, %v211
      %244 = vst.msk [vmem:[%s163 + $0xb2] sm:$0xff] %vm148, %v212
      %245 = vst.msk [vmem:[%s163 + $0xc2] sm:$0xff] %vm148, %v213
      %246 = vst.msk [vmem:[%s163 + $0xca] sm:$0xff] %vm148, %v214
      %247 = vst.msk [vmem:[%s163 + $0xda] sm:$0xff] %vm148, %v215
      %248 = vst.msk [vmem:[%s163 + $0xe2] sm:$0xff] %vm148, %v216
      %249 = vst.msk [vmem:[%s163 + $0xf2] sm:$0xff] %vm148, %v217
      %250 = vst.msk [vmem:[%s163 + $0xfa] sm:$0xff] %vm148, %v218
      %251 = vst.msk [vmem:[%s163 + $0x10a] sm:$0xff] %vm148, %v219
      %252 = vst.msk [vmem:[%s163 + $0x112] sm:$0xff] %vm148, %v220
      %253 = vst.msk [vmem:[%s163 + $0x122] sm:$0xff] %vm148, %v221
      %254 = vst.msk [vmem:[%s163 + $0x12a] sm:$0xff] %vm148, %v222
      %255 = vst.msk [vmem:[%s163 + $0x13a] sm:$0xff] %vm148, %v223
      %256 = vst.msk [vmem:[%s163 + $0x142] sm:$0xff] %vm148, %v224
      %257 = vst.msk [vmem:[%s163 + $0x152] sm:$0xff] %vm148, %v225
      %258 = vst.msk [vmem:[%s163 + $0x15a] sm:$0xff] %vm148, %v226
      %259 = vst.msk [vmem:[%s163 + $0x16a] sm:$0xff] %vm148, %v227
      %260 = vst.msk [vmem:[%s163 + $0x172] sm:$0xff] %vm148, %v228
      %v261 = vld [vmem:[%s163] sm:$0xff]
      %v262 = vld [vmem:[%s163 + $0x8] sm:$0xff]
      %v263 = vld [vmem:[%s163 + $0x18] sm:$0xff]
      %v264 = vld [vmem:[%s163 + $0x20] sm:$0xff]
      %v265 = vld [vmem:[%s163 + $0x30] sm:$0xff]
      %v266 = vld [vmem:[%s163 + $0x38] sm:$0xff]
      %v267 = vld [vmem:[%s163 + $0x48] sm:$0xff]
      %v268 = vld [vmem:[%s163 + $0x50] sm:$0xff]
      %v269 = vld [vmem:[%s163 + $0x60] sm:$0xff]
      %v270 = vld [vmem:[%s163 + $0x68] sm:$0xff]
      %v271 = vld [vmem:[%s163 + $0x78] sm:$0xff]
      %v272 = vld [vmem:[%s163 + $0x80] sm:$0xff]
      %v273 = vld [vmem:[%s163 + $0x90] sm:$0xff]
      %v274 = vld [vmem:[%s163 + $0x98] sm:$0xff]
      %v275 = vld [vmem:[%s163 + $0xa8] sm:$0xff]
      %v276 = vld [vmem:[%s163 + $0xb0] sm:$0xff]
      %v277 = vld [vmem:[%s163 + $0xc0] sm:$0xff]
      %v278 = vld [vmem:[%s163 + $0xc8] sm:$0xff]
      %v279 = vld [vmem:[%s163 + $0xd8] sm:$0xff]
      %v280 = vld [vmem:[%s163 + $0xe0] sm:$0xff]
      %v281 = vld [vmem:[%s163 + $0xf0] sm:$0xff]
      %v282 = vld [vmem:[%s163 + $0xf8] sm:$0xff]
      %v283 = vld [vmem:[%s163 + $0x108] sm:$0xff]
      %v284 = vld [vmem:[%s163 + $0x110] sm:$0xff]
      %v285 = vld [vmem:[%s163 + $0x120] sm:$0xff]
      %v286 = vld [vmem:[%s163 + $0x128] sm:$0xff]
      %v287 = vld [vmem:[%s163 + $0x138] sm:$0xff]
      %v288 = vld [vmem:[%s163 + $0x140] sm:$0xff]
      %v289 = vld [vmem:[%s163 + $0x150] sm:$0xff]
      %v290 = vld [vmem:[%s163 + $0x158] sm:$0xff]
      %v291 = vld [vmem:[%s163 + $0x168] sm:$0xff]
      %v292 = vld [vmem:[%s163 + $0x170] sm:$0xff]
      %v293 = vld [vmem:[%s163 + $0x1] sm:$0xff]
      %v294 = vld [vmem:[%s163 + $0x9] sm:$0xff]
      %v295 = vld [vmem:[%s163 + $0x19] sm:$0xff]
      %v296 = vld [vmem:[%s163 + $0x21] sm:$0xff]
      %v297 = vld [vmem:[%s163 + $0x31] sm:$0xff]
      %v298 = vld [vmem:[%s163 + $0x39] sm:$0xff]
      %v299 = vld [vmem:[%s163 + $0x49] sm:$0xff]
      %v300 = vld [vmem:[%s163 + $0x51] sm:$0xff]
      %v301 = vld [vmem:[%s163 + $0x61] sm:$0xff]
      %v302 = vld [vmem:[%s163 + $0x69] sm:$0xff]
      %v303 = vld [vmem:[%s163 + $0x79] sm:$0xff]
      %v304 = vld [vmem:[%s163 + $0x81] sm:$0xff]
      %v305 = vld [vmem:[%s163 + $0x91] sm:$0xff]
      %v306 = vld [vmem:[%s163 + $0x99] sm:$0xff]
      %v307 = vld [vmem:[%s163 + $0xa9] sm:$0xff]
      %v308 = vld [vmem:[%s163 + $0xb1] sm:$0xff]
      %v309 = vld [vmem:[%s163 + $0xc1] sm:$0xff]
      %v310 = vld [vmem:[%s163 + $0xc9] sm:$0xff]
      %v311 = vld [vmem:[%s163 + $0xd9] sm:$0xff]
      %v312 = vld [vmem:[%s163 + $0xe1] sm:$0xff]
      %v313 = vld [vmem:[%s163 + $0xf1] sm:$0xff]
      %v314 = vld [vmem:[%s163 + $0xf9] sm:$0xff]
      %v315 = vld [vmem:[%s163 + $0x109] sm:$0xff]
      %v316 = vld [vmem:[%s163 + $0x111] sm:$0xff]
      %v317 = vld [vmem:[%s163 + $0x121] sm:$0xff]
      %v318 = vld [vmem:[%s163 + $0x129] sm:$0xff]
      %v319 = vld [vmem:[%s163 + $0x139] sm:$0xff]
      %v320 = vld [vmem:[%s163 + $0x141] sm:$0xff]
      %v321 = vld [vmem:[%s163 + $0x151] sm:$0xff]
      %v322 = vld [vmem:[%s163 + $0x159] sm:$0xff]
      %v323 = vld [vmem:[%s163 + $0x169] sm:$0xff]
      %v324 = vld [vmem:[%s163 + $0x171] sm:$0xff]
      %v325 = vmax.f32 %v261, %v293
      %v326 = vmax.f32 %v262, %v294
      %v327 = vmax.f32 %v263, %v295
      %v328 = vmax.f32 %v264, %v296
      %v329 = vmax.f32 %v265, %v297
      %v330 = vmax.f32 %v266, %v298
      %v331 = vmax.f32 %v267, %v299
      %v332 = vmax.f32 %v268, %v300
      %v333 = vmax.f32 %v269, %v301
      %v334 = vmax.f32 %v270, %v302
      %v335 = vmax.f32 %v271, %v303
      %v336 = vmax.f32 %v272, %v304
      %v337 = vmax.f32 %v273, %v305
      %v338 = vmax.f32 %v274, %v306
      %v339 = vmax.f32 %v275, %v307
      %v340 = vmax.f32 %v276, %v308
      %v341 = vmax.f32 %v277, %v309
      %v342 = vmax.f32 %v278, %v310
      %v343 = vmax.f32 %v279, %v311
      %v344 = vmax.f32 %v280, %v312
      %v345 = vmax.f32 %v281, %v313
      %v346 = vmax.f32 %v282, %v314
      %v347 = vmax.f32 %v283, %v315
      %v348 = vmax.f32 %v284, %v316
      %v349 = vmax.f32 %v285, %v317
      %v350 = vmax.f32 %v286, %v318
      %v351 = vmax.f32 %v287, %v319
      %v352 = vmax.f32 %v288, %v320
      %v353 = vmax.f32 %v289, %v321
      %v354 = vmax.f32 %v290, %v322
      %v355 = vmax.f32 %v291, %v323
      %v356 = vmax.f32 %v292, %v324
      %v357 = vld [vmem:[%s163 + $0x2] sm:$0xff]
      %v358 = vld [vmem:[%s163 + $0xa] sm:$0xff]
      %v359 = vld [vmem:[%s163 + $0x1a] sm:$0xff]
      %v360 = vld [vmem:[%s163 + $0x22] sm:$0xff]
      %v361 = vld [vmem:[%s163 + $0x32] sm:$0xff]
      %v362 = vld [vmem:[%s163 + $0x3a] sm:$0xff]
      %v363 = vld [vmem:[%s163 + $0x4a] sm:$0xff]
      %v364 = vld [vmem:[%s163 + $0x52] sm:$0xff]
      %v365 = vld [vmem:[%s163 + $0x62] sm:$0xff]
      %v366 = vld [vmem:[%s163 + $0x6a] sm:$0xff]
      %v367 = vld [vmem:[%s163 + $0x7a] sm:$0xff]
      %v368 = vld [vmem:[%s163 + $0x82] sm:$0xff]
      %v369 = vld [vmem:[%s163 + $0x92] sm:$0xff]
      %v370 = vld [vmem:[%s163 + $0x9a] sm:$0xff]
      %v371 = vld [vmem:[%s163 + $0xaa] sm:$0xff]
      %v372 = vld [vmem:[%s163 + $0xb2] sm:$0xff]
      %v373 = vld [vmem:[%s163 + $0xc2] sm:$0xff]
      %v374 = vld [vmem:[%s163 + $0xca] sm:$0xff]
      %v375 = vld [vmem:[%s163 + $0xda] sm:$0xff]
      %v376 = vld [vmem:[%s163 + $0xe2] sm:$0xff]
      %v377 = vld [vmem:[%s163 + $0xf2] sm:$0xff]
      %v378 = vld [vmem:[%s163 + $0xfa] sm:$0xff]
      %v379 = vld [vmem:[%s163 + $0x10a] sm:$0xff]
      %v380 = vld [vmem:[%s163 + $0x112] sm:$0xff]
      %v381 = vld [vmem:[%s163 + $0x122] sm:$0xff]
      %v382 = vld [vmem:[%s163 + $0x12a] sm:$0xff]
      %v383 = vld [vmem:[%s163 + $0x13a] sm:$0xff]
      %v384 = vld [vmem:[%s163 + $0x142] sm:$0xff]
      %v385 = vld [vmem:[%s163 + $0x152] sm:$0xff]
      %v386 = vld [vmem:[%s163 + $0x15a] sm:$0xff]
      %v387 = vld [vmem:[%s163 + $0x16a] sm:$0xff]
      %v388 = vld [vmem:[%s163 + $0x172] sm:$0xff]
      %v389 = vmax.f32 %v325, %v357
      %v390 = vmax.f32 %v326, %v358
      %v391 = vmax.f32 %v327, %v359
      %v392 = vmax.f32 %v328, %v360
      %v393 = vmax.f32 %v329, %v361
      %v394 = vmax.f32 %v330, %v362
      %v395 = vmax.f32 %v331, %v363
      %v396 = vmax.f32 %v332, %v364
      %v397 = vmax.f32 %v333, %v365
      %v398 = vmax.f32 %v334, %v366
      %v399 = vmax.f32 %v335, %v367
      %v400 = vmax.f32 %v336, %v368
      %v401 = vmax.f32 %v337, %v369
      %v402 = vmax.f32 %v338, %v370
      %v403 = vmax.f32 %v339, %v371
      %v404 = vmax.f32 %v340, %v372
      %v405 = vmax.f32 %v341, %v373
      %v406 = vmax.f32 %v342, %v374
      %v407 = vmax.f32 %v343, %v375
      %v408 = vmax.f32 %v344, %v376
      %v409 = vmax.f32 %v345, %v377
      %v410 = vmax.f32 %v346, %v378
      %v411 = vmax.f32 %v347, %v379
      %v412 = vmax.f32 %v348, %v380
      %v413 = vmax.f32 %v349, %v381
      %v414 = vmax.f32 %v350, %v382
      %v415 = vmax.f32 %v351, %v383
      %v416 = vmax.f32 %v352, %v384
      %v417 = vmax.f32 %v353, %v385
      %v418 = vmax.f32 %v354, %v386
      %v419 = vmax.f32 %v355, %v387
      %v420 = vmax.f32 %v356, %v388
      %v421 = vld [vmem:[%s163 + $0x3] sm:$0xff]
      %v422 = vld [vmem:[%s163 + $0xb] sm:$0xff]
      %v423 = vld [vmem:[%s163 + $0x1b] sm:$0xff]
      %v424 = vld [vmem:[%s163 + $0x23] sm:$0xff]
      %v425 = vld [vmem:[%s163 + $0x33] sm:$0xff]
      %v426 = vld [vmem:[%s163 + $0x3b] sm:$0xff]
      %v427 = vld [vmem:[%s163 + $0x4b] sm:$0xff]
      %v428 = vld [vmem:[%s163 + $0x53] sm:$0xff]
      %v429 = vld [vmem:[%s163 + $0x63] sm:$0xff]
      %v430 = vld [vmem:[%s163 + $0x6b] sm:$0xff]
      %v431 = vld [vmem:[%s163 + $0x7b] sm:$0xff]
      %v432 = vld [vmem:[%s163 + $0x83] sm:$0xff]
      %v433 = vld [vmem:[%s163 + $0x93] sm:$0xff]
      %v434 = vld [vmem:[%s163 + $0x9b] sm:$0xff]
      %v435 = vld [vmem:[%s163 + $0xab] sm:$0xff]
      %v436 = vld [vmem:[%s163 + $0xb3] sm:$0xff]
      %v437 = vld [vmem:[%s163 + $0xc3] sm:$0xff]
      %v438 = vld [vmem:[%s163 + $0xcb] sm:$0xff]
      %v439 = vld [vmem:[%s163 + $0xdb] sm:$0xff]
      %v440 = vld [vmem:[%s163 + $0xe3] sm:$0xff]
      %v441 = vld [vmem:[%s163 + $0xf3] sm:$0xff]
      %v442 = vld [vmem:[%s163 + $0xfb] sm:$0xff]
      %v443 = vld [vmem:[%s163 + $0x10b] sm:$0xff]
      %v444 = vld [vmem:[%s163 + $0x113] sm:$0xff]
      %v445 = vld [vmem:[%s163 + $0x123] sm:$0xff]
      %v446 = vld [vmem:[%s163 + $0x12b] sm:$0xff]
      %v447 = vld [vmem:[%s163 + $0x13b] sm:$0xff]
      %v448 = vld [vmem:[%s163 + $0x143] sm:$0xff]
      %v449 = vld [vmem:[%s163 + $0x153] sm:$0xff]
      %v450 = vld [vmem:[%s163 + $0x15b] sm:$0xff]
      %v451 = vld [vmem:[%s163 + $0x16b] sm:$0xff]
      %v452 = vld [vmem:[%s163 + $0x173] sm:$0xff]
      %v453 = vmax.f32 %v389, %v421
      %v454 = vmax.f32 %v390, %v422
      %v455 = vmax.f32 %v391, %v423
      %v456 = vmax.f32 %v392, %v424
      %v457 = vmax.f32 %v393, %v425
      %v458 = vmax.f32 %v394, %v426
      %v459 = vmax.f32 %v395, %v427
      %v460 = vmax.f32 %v396, %v428
      %v461 = vmax.f32 %v397, %v429
      %v462 = vmax.f32 %v398, %v430
      %v463 = vmax.f32 %v399, %v431
      %v464 = vmax.f32 %v400, %v432
      %v465 = vmax.f32 %v401, %v433
      %v466 = vmax.f32 %v402, %v434
      %v467 = vmax.f32 %v403, %v435
      %v468 = vmax.f32 %v404, %v436
      %v469 = vmax.f32 %v405, %v437
      %v470 = vmax.f32 %v406, %v438
      %v471 = vmax.f32 %v407, %v439
      %v472 = vmax.f32 %v408, %v440
      %v473 = vmax.f32 %v409, %v441
      %v474 = vmax.f32 %v410, %v442
      %v475 = vmax.f32 %v411, %v443
      %v476 = vmax.f32 %v412, %v444
      %v477 = vmax.f32 %v413, %v445
      %v478 = vmax.f32 %v414, %v446
      %v479 = vmax.f32 %v415, %v447
      %v480 = vmax.f32 %v416, %v448
      %v481 = vmax.f32 %v417, %v449
      %v482 = vmax.f32 %v418, %v450
      %v483 = vmax.f32 %v419, %v451
      %v484 = vmax.f32 %v420, %v452
      %v485 = vld [vmem:[%s163 + $0x4] sm:$0xff]
      %v486 = vld [vmem:[%s163 + $0xc] sm:$0xff]
      %v487 = vld [vmem:[%s163 + $0x1c] sm:$0xff]
      %v488 = vld [vmem:[%s163 + $0x24] sm:$0xff]
      %v489 = vld [vmem:[%s163 + $0x34] sm:$0xff]
      %v490 = vld [vmem:[%s163 + $0x3c] sm:$0xff]
      %v491 = vld [vmem:[%s163 + $0x4c] sm:$0xff]
      %v492 = vld [vmem:[%s163 + $0x54] sm:$0xff]
      %v493 = vld [vmem:[%s163 + $0x64] sm:$0xff]
      %v494 = vld [vmem:[%s163 + $0x6c] sm:$0xff]
      %v495 = vld [vmem:[%s163 + $0x7c] sm:$0xff]
      %v496 = vld [vmem:[%s163 + $0x84] sm:$0xff]
      %v497 = vld [vmem:[%s163 + $0x94] sm:$0xff]
      %v498 = vld [vmem:[%s163 + $0x9c] sm:$0xff]
      %v499 = vld [vmem:[%s163 + $0xac] sm:$0xff]
      %v500 = vld [vmem:[%s163 + $0xb4] sm:$0xff]
      %v501 = vld [vmem:[%s163 + $0xc4] sm:$0xff]
      %v502 = vld [vmem:[%s163 + $0xcc] sm:$0xff]
      %v503 = vld [vmem:[%s163 + $0xdc] sm:$0xff]
      %v504 = vld [vmem:[%s163 + $0xe4] sm:$0xff]
      %v505 = vld [vmem:[%s163 + $0xf4] sm:$0xff]
      %v506 = vld [vmem:[%s163 + $0xfc] sm:$0xff]
      %v507 = vld [vmem:[%s163 + $0x10c] sm:$0xff]
      %v508 = vld [vmem:[%s163 + $0x114] sm:$0xff]
      %v509 = vld [vmem:[%s163 + $0x124] sm:$0xff]
      %v510 = vld [vmem:[%s163 + $0x12c] sm:$0xff]
      %v511 = vld [vmem:[%s163 + $0x13c] sm:$0xff]
      %v512 = vld [vmem:[%s163 + $0x144] sm:$0xff]
      %v513 = vld [vmem:[%s163 + $0x154] sm:$0xff]
      %v514 = vld [vmem:[%s163 + $0x15c] sm:$0xff]
      %v515 = vld [vmem:[%s163 + $0x16c] sm:$0xff]
      %v516 = vld [vmem:[%s163 + $0x174] sm:$0xff]
      %v517 = vmax.f32 %v453, %v485
      %v518 = vmax.f32 %v454, %v486
      %v519 = vmax.f32 %v455, %v487
      %v520 = vmax.f32 %v456, %v488
      %v521 = vmax.f32 %v457, %v489
      %v522 = vmax.f32 %v458, %v490
      %v523 = vmax.f32 %v459, %v491
      %v524 = vmax.f32 %v460, %v492
      %v525 = vmax.f32 %v461, %v493
      %v526 = vmax.f32 %v462, %v494
      %v527 = vmax.f32 %v463, %v495
      %v528 = vmax.f32 %v464, %v496
      %v529 = vmax.f32 %v465, %v497
      %v530 = vmax.f32 %v466, %v498
      %v531 = vmax.f32 %v467, %v499
      %v532 = vmax.f32 %v468, %v500
      %v533 = vmax.f32 %v469, %v501
      %v534 = vmax.f32 %v470, %v502
      %v535 = vmax.f32 %v471, %v503
      %v536 = vmax.f32 %v472, %v504
      %v537 = vmax.f32 %v473, %v505
      %v538 = vmax.f32 %v474, %v506
      %v539 = vmax.f32 %v475, %v507
      %v540 = vmax.f32 %v476, %v508
      %v541 = vmax.f32 %v477, %v509
      %v542 = vmax.f32 %v478, %v510
      %v543 = vmax.f32 %v479, %v511
      %v544 = vmax.f32 %v480, %v512
      %v545 = vmax.f32 %v481, %v513
      %v546 = vmax.f32 %v482, %v514
      %v547 = vmax.f32 %v483, %v515
      %v548 = vmax.f32 %v484, %v516
      %549 = vst.msk [vmem:[%s163 + $0x2] sm:$0xff] %vm148, %v517
      %550 = vst.msk [vmem:[%s163 + $0xa] sm:$0xff] %vm148, %v518
      %551 = vst.msk [vmem:[%s163 + $0x1a] sm:$0xff] %vm148, %v519
      %552 = vst.msk [vmem:[%s163 + $0x22] sm:$0xff] %vm148, %v520
      %553 = vst.msk [vmem:[%s163 + $0x32] sm:$0xff] %vm148, %v521
      %554 = vst.msk [vmem:[%s163 + $0x3a] sm:$0xff] %vm148, %v522
      %555 = vst.msk [vmem:[%s163 + $0x4a] sm:$0xff] %vm148, %v523
      %556 = vst.msk [vmem:[%s163 + $0x52] sm:$0xff] %vm148, %v524
      %557 = vst.msk [vmem:[%s163 + $0x62] sm:$0xff] %vm148, %v525
      %558 = vst.msk [vmem:[%s163 + $0x6a] sm:$0xff] %vm148, %v526
      %559 = vst.msk [vmem:[%s163 + $0x7a] sm:$0xff] %vm148, %v527
      %560 = vst.msk [vmem:[%s163 + $0x82] sm:$0xff] %vm148, %v528
      %561 = vst.msk [vmem:[%s163 + $0x92] sm:$0xff] %vm148, %v529
      %562 = vst.msk [vmem:[%s163 + $0x9a] sm:$0xff] %vm148, %v530
      %563 = vst.msk [vmem:[%s163 + $0xaa] sm:$0xff] %vm148, %v531
      %564 = vst.msk [vmem:[%s163 + $0xb2] sm:$0xff] %vm148, %v532
      %565 = vst.msk [vmem:[%s163 + $0xc2] sm:$0xff] %vm148, %v533
      %566 = vst.msk [vmem:[%s163 + $0xca] sm:$0xff] %vm148, %v534
      %567 = vst.msk [vmem:[%s163 + $0xda] sm:$0xff] %vm148, %v535
      %568 = vst.msk [vmem:[%s163 + $0xe2] sm:$0xff] %vm148, %v536
      %569 = vst.msk [vmem:[%s163 + $0xf2] sm:$0xff] %vm148, %v537
      %570 = vst.msk [vmem:[%s163 + $0xfa] sm:$0xff] %vm148, %v538
      %571 = vst.msk [vmem:[%s163 + $0x10a] sm:$0xff] %vm148, %v539
      %572 = vst.msk [vmem:[%s163 + $0x112] sm:$0xff] %vm148, %v540
      %573 = vst.msk [vmem:[%s163 + $0x122] sm:$0xff] %vm148, %v541
      %574 = vst.msk [vmem:[%s163 + $0x12a] sm:$0xff] %vm148, %v542
      %575 = vst.msk [vmem:[%s163 + $0x13a] sm:$0xff] %vm148, %v543
      %576 = vst.msk [vmem:[%s163 + $0x142] sm:$0xff] %vm148, %v544
      %577 = vst.msk [vmem:[%s163 + $0x152] sm:$0xff] %vm148, %v545
      %578 = vst.msk [vmem:[%s163 + $0x15a] sm:$0xff] %vm148, %v546
      %579 = vst.msk [vmem:[%s163 + $0x16a] sm:$0xff] %vm148, %v547
      %580 = vst.msk [vmem:[%s163 + $0x172] sm:$0xff] %vm148, %v548
      %v581 = vld [vmem:[#allocation2 + $0x2] sm:$0xff]
      %v582 = vld [vmem:[#allocation2 + $0xa] sm:$0xff]
      %v583 = vld [vmem:[#allocation2 + $0x1a] sm:$0xff]
      %v584 = vld [vmem:[#allocation2 + $0x22] sm:$0xff]
      %v585 = vld [vmem:[#allocation2 + $0x32] sm:$0xff]
      %v586 = vld [vmem:[#allocation2 + $0x3a] sm:$0xff]
      %v587 = vld [vmem:[#allocation2 + $0x4a] sm:$0xff]
      %v588 = vld [vmem:[#allocation2 + $0x52] sm:$0xff]
      %v589 = vld [vmem:[#allocation2 + $0x62] sm:$0xff]
      %v590 = vld [vmem:[#allocation2 + $0x6a] sm:$0xff]
      %v591 = vld [vmem:[#allocation2 + $0x7a] sm:$0xff]
      %v592 = vld [vmem:[#allocation2 + $0x82] sm:$0xff]
      %v593 = vld [vmem:[#allocation2 + $0x92] sm:$0xff]
      %v594 = vld [vmem:[#allocation2 + $0x9a] sm:$0xff]
      %v595 = vld [vmem:[#allocation2 + $0xaa] sm:$0xff]
      %v596 = vld [vmem:[#allocation2 + $0xb2] sm:$0xff]
      %v597 = vld [vmem:[#allocation2 + $0xc2] sm:$0xff]
      %v598 = vld [vmem:[#allocation2 + $0xca] sm:$0xff]
      %v599 = vld [vmem:[#allocation2 + $0xda] sm:$0xff]
      %v600 = vld [vmem:[#allocation2 + $0xe2] sm:$0xff]
      %v601 = vld [vmem:[#allocation2 + $0xf2] sm:$0xff]
      %v602 = vld [vmem:[#allocation2 + $0xfa] sm:$0xff]
      %v603 = vld [vmem:[#allocation2 + $0x10a] sm:$0xff]
      %v604 = vld [vmem:[#allocation2 + $0x112] sm:$0xff]
      %v605 = vld [vmem:[#allocation2 + $0x122] sm:$0xff]
      %v606 = vld [vmem:[#allocation2 + $0x12a] sm:$0xff]
      %v607 = vld [vmem:[#allocation2 + $0x13a] sm:$0xff]
      %v608 = vld [vmem:[#allocation2 + $0x142] sm:$0xff]
      %v609 = vld [vmem:[#allocation2 + $0x152] sm:$0xff]
      %v610 = vld [vmem:[#allocation2 + $0x15a] sm:$0xff]
      %v611 = vld [vmem:[#allocation2 + $0x16a] sm:$0xff]
      %v612 = vld [vmem:[#allocation2 + $0x172] sm:$0xff]
      %s613 = scalar_lea.vmem [#allocation2], 24
      %v614 = vld [vmem:[%s613 + $0x2] sm:$0xff]
      %v615 = vld [vmem:[%s613 + $0xa] sm:$0xff]
      %v616 = vld [vmem:[%s613 + $0x1a] sm:$0xff]
      %v617 = vld [vmem:[%s613 + $0x22] sm:$0xff]
      %v618 = vld [vmem:[%s613 + $0x32] sm:$0xff]
      %v619 = vld [vmem:[%s613 + $0x3a] sm:$0xff]
      %v620 = vld [vmem:[%s613 + $0x4a] sm:$0xff]
      %v621 = vld [vmem:[%s613 + $0x52] sm:$0xff]
      %v622 = vld [vmem:[%s613 + $0x62] sm:$0xff]
      %v623 = vld [vmem:[%s613 + $0x6a] sm:$0xff]
      %v624 = vld [vmem:[%s613 + $0x7a] sm:$0xff]
      %v625 = vld [vmem:[%s613 + $0x82] sm:$0xff]
      %v626 = vld [vmem:[%s613 + $0x92] sm:$0xff]
      %v627 = vld [vmem:[%s613 + $0x9a] sm:$0xff]
      %v628 = vld [vmem:[%s613 + $0xaa] sm:$0xff]
      %v629 = vld [vmem:[%s613 + $0xb2] sm:$0xff]
      %v630 = vld [vmem:[%s613 + $0xc2] sm:$0xff]
      %v631 = vld [vmem:[%s613 + $0xca] sm:$0xff]
      %v632 = vld [vmem:[%s613 + $0xda] sm:$0xff]
      %v633 = vld [vmem:[%s613 + $0xe2] sm:$0xff]
      %v634 = vld [vmem:[%s613 + $0xf2] sm:$0xff]
      %v635 = vld [vmem:[%s613 + $0xfa] sm:$0xff]
      %v636 = vld [vmem:[%s613 + $0x10a] sm:$0xff]
      %v637 = vld [vmem:[%s613 + $0x112] sm:$0xff]
      %v638 = vld [vmem:[%s613 + $0x122] sm:$0xff]
      %v639 = vld [vmem:[%s613 + $0x12a] sm:$0xff]
      %v640 = vld [vmem:[%s613 + $0x13a] sm:$0xff]
      %v641 = vld [vmem:[%s613 + $0x142] sm:$0xff]
      %v642 = vld [vmem:[%s613 + $0x152] sm:$0xff]
      %v643 = vld [vmem:[%s613 + $0x15a] sm:$0xff]
      %v644 = vld [vmem:[%s613 + $0x16a] sm:$0xff]
      %v645 = vld [vmem:[%s613 + $0x172] sm:$0xff]
      %v646 = vmax.f32 %v581, %v614
      %v647 = vmax.f32 %v582, %v615
      %v648 = vmax.f32 %v583, %v616
      %v649 = vmax.f32 %v584, %v617
      %v650 = vmax.f32 %v585, %v618
      %v651 = vmax.f32 %v586, %v619
      %v652 = vmax.f32 %v587, %v620
      %v653 = vmax.f32 %v588, %v621
      %v654 = vmax.f32 %v589, %v622
      %v655 = vmax.f32 %v590, %v623
      %v656 = vmax.f32 %v591, %v624
      %v657 = vmax.f32 %v592, %v625
      %v658 = vmax.f32 %v593, %v626
      %v659 = vmax.f32 %v594, %v627
      %v660 = vmax.f32 %v595, %v628
      %v661 = vmax.f32 %v596, %v629
      %v662 = vmax.f32 %v597, %v630
      %v663 = vmax.f32 %v598, %v631
      %v664 = vmax.f32 %v599, %v632
      %v665 = vmax.f32 %v600, %v633
      %v666 = vmax.f32 %v601, %v634
      %v667 = vmax.f32 %v602, %v635
      %v668 = vmax.f32 %v603, %v636
      %v669 = vmax.f32 %v604, %v637
      %v670 = vmax.f32 %v605, %v638
      %v671 = vmax.f32 %v606, %v639
      %v672 = vmax.f32 %v607, %v640
      %v673 = vmax.f32 %v608, %v641
      %v674 = vmax.f32 %v609, %v642
      %v675 = vmax.f32 %v610, %v643
      %v676 = vmax.f32 %v611, %v644
      %v677 = vmax.f32 %v612, %v645
      %v678 = vld [vmem:[%s163 + $0x2] sm:$0xff]
      %v679 = vld [vmem:[%s163 + $0xa] sm:$0xff]
      %v680 = vld [vmem:[%s163 + $0x1a] sm:$0xff]
      %v681 = vld [vmem:[%s163 + $0x22] sm:$0xff]
      %v682 = vld [vmem:[%s163 + $0x32] sm:$0xff]
      %v683 = vld [vmem:[%s163 + $0x3a] sm:$0xff]
      %v684 = vld [vmem:[%s163 + $0x4a] sm:$0xff]
      %v685 = vld [vmem:[%s163 + $0x52] sm:$0xff]
      %v686 = vld [vmem:[%s163 + $0x62] sm:$0xff]
      %v687 = vld [vmem:[%s163 + $0x6a] sm:$0xff]
      %v688 = vld [vmem:[%s163 + $0x7a] sm:$0xff]
      %v689 = vld [vmem:[%s163 + $0x82] sm:$0xff]
      %v690 = vld [vmem:[%s163 + $0x92] sm:$0xff]
      %v691 = vld [vmem:[%s163 + $0x9a] sm:$0xff]
      %v692 = vld [vmem:[%s163 + $0xaa] sm:$0xff]
      %v693 = vld [vmem:[%s163 + $0xb2] sm:$0xff]
      %v694 = vld [vmem:[%s163 + $0xc2] sm:$0xff]
      %v695 = vld [vmem:[%s163 + $0xca] sm:$0xff]
      %v696 = vld [vmem:[%s163 + $0xda] sm:$0xff]
      %v697 = vld [vmem:[%s163 + $0xe2] sm:$0xff]
      %v698 = vld [vmem:[%s163 + $0xf2] sm:$0xff]
      %v699 = vld [vmem:[%s163 + $0xfa] sm:$0xff]
      %v700 = vld [vmem:[%s163 + $0x10a] sm:$0xff]
      %v701 = vld [vmem:[%s163 + $0x112] sm:$0xff]
      %v702 = vld [vmem:[%s163 + $0x122] sm:$0xff]
      %v703 = vld [vmem:[%s163 + $0x12a] sm:$0xff]
      %v704 = vld [vmem:[%s163 + $0x13a] sm:$0xff]
      %v705 = vld [vmem:[%s163 + $0x142] sm:$0xff]
      %v706 = vld [vmem:[%s163 + $0x152] sm:$0xff]
      %v707 = vld [vmem:[%s163 + $0x15a] sm:$0xff]
      %v708 = vld [vmem:[%s163 + $0x16a] sm:$0xff]
      %v709 = vld [vmem:[%s163 + $0x172] sm:$0xff]
      %v710 = vmax.f32 %v646, %v678
      %v711 = vmax.f32 %v647, %v679
      %v712 = vmax.f32 %v648, %v680
      %v713 = vmax.f32 %v649, %v681
      %v714 = vmax.f32 %v650, %v682
      %v715 = vmax.f32 %v651, %v683
      %v716 = vmax.f32 %v652, %v684
      %v717 = vmax.f32 %v653, %v685
      %v718 = vmax.f32 %v654, %v686
      %v719 = vmax.f32 %v655, %v687
      %v720 = vmax.f32 %v656, %v688
      %v721 = vmax.f32 %v657, %v689
      %v722 = vmax.f32 %v658, %v690
      %v723 = vmax.f32 %v659, %v691
      %v724 = vmax.f32 %v660, %v692
      %v725 = vmax.f32 %v661, %v693
      %v726 = vmax.f32 %v662, %v694
      %v727 = vmax.f32 %v663, %v695
      %v728 = vmax.f32 %v664, %v696
      %v729 = vmax.f32 %v665, %v697
      %v730 = vmax.f32 %v666, %v698
      %v731 = vmax.f32 %v667, %v699
      %v732 = vmax.f32 %v668, %v700
      %v733 = vmax.f32 %v669, %v701
      %v734 = vmax.f32 %v670, %v702
      %v735 = vmax.f32 %v671, %v703
      %v736 = vmax.f32 %v672, %v704
      %v737 = vmax.f32 %v673, %v705
      %v738 = vmax.f32 %v674, %v706
      %v739 = vmax.f32 %v675, %v707
      %v740 = vmax.f32 %v676, %v708
      %v741 = vmax.f32 %v677, %v709
      %s742 = scalar_lea.vmem [#allocation2], 72
      %v743 = vld [vmem:[%s742 + $0x2] sm:$0xff]
      %v744 = vld [vmem:[%s742 + $0xa] sm:$0xff]
      %v745 = vld [vmem:[%s742 + $0x1a] sm:$0xff]
      %v746 = vld [vmem:[%s742 + $0x22] sm:$0xff]
      %v747 = vld [vmem:[%s742 + $0x32] sm:$0xff]
      %v748 = vld [vmem:[%s742 + $0x3a] sm:$0xff]
      %v749 = vld [vmem:[%s742 + $0x4a] sm:$0xff]
      %v750 = vld [vmem:[%s742 + $0x52] sm:$0xff]
      %v751 = vld [vmem:[%s742 + $0x62] sm:$0xff]
      %v752 = vld [vmem:[%s742 + $0x6a] sm:$0xff]
      %v753 = vld [vmem:[%s742 + $0x7a] sm:$0xff]
      %v754 = vld [vmem:[%s742 + $0x82] sm:$0xff]
      %v755 = vld [vmem:[%s742 + $0x92] sm:$0xff]
      %v756 = vld [vmem:[%s742 + $0x9a] sm:$0xff]
      %v757 = vld [vmem:[%s742 + $0xaa] sm:$0xff]
      %v758 = vld [vmem:[%s742 + $0xb2] sm:$0xff]
      %v759 = vld [vmem:[%s742 + $0xc2] sm:$0xff]
      %v760 = vld [vmem:[%s742 + $0xca] sm:$0xff]
      %v761 = vld [vmem:[%s742 + $0xda] sm:$0xff]
      %v762 = vld [vmem:[%s742 + $0xe2] sm:$0xff]
      %v763 = vld [vmem:[%s742 + $0xf2] sm:$0xff]
      %v764 = vld [vmem:[%s742 + $0xfa] sm:$0xff]
      %v765 = vld [vmem:[%s742 + $0x10a] sm:$0xff]
      %v766 = vld [vmem:[%s742 + $0x112] sm:$0xff]
      %v767 = vld [vmem:[%s742 + $0x122] sm:$0xff]
      %v768 = vld [vmem:[%s742 + $0x12a] sm:$0xff]
      %v769 = vld [vmem:[%s742 + $0x13a] sm:$0xff]
      %v770 = vld [vmem:[%s742 + $0x142] sm:$0xff]
      %v771 = vld [vmem:[%s742 + $0x152] sm:$0xff]
      %v772 = vld [vmem:[%s742 + $0x15a] sm:$0xff]
      %v773 = vld [vmem:[%s742 + $0x16a] sm:$0xff]
      %v774 = vld [vmem:[%s742 + $0x172] sm:$0xff]
      %v775 = vmax.f32 %v710, %v743
      %v776 = vmax.f32 %v711, %v744
      %v777 = vmax.f32 %v712, %v745
      %v778 = vmax.f32 %v713, %v746
      %v779 = vmax.f32 %v714, %v747
      %v780 = vmax.f32 %v715, %v748
      %v781 = vmax.f32 %v716, %v749
      %v782 = vmax.f32 %v717, %v750
      %v783 = vmax.f32 %v718, %v751
      %v784 = vmax.f32 %v719, %v752
      %v785 = vmax.f32 %v720, %v753
      %v786 = vmax.f32 %v721, %v754
      %v787 = vmax.f32 %v722, %v755
      %v788 = vmax.f32 %v723, %v756
      %v789 = vmax.f32 %v724, %v757
      %v790 = vmax.f32 %v725, %v758
      %v791 = vmax.f32 %v726, %v759
      %v792 = vmax.f32 %v727, %v760
      %v793 = vmax.f32 %v728, %v761
      %v794 = vmax.f32 %v729, %v762
      %v795 = vmax.f32 %v730, %v763
      %v796 = vmax.f32 %v731, %v764
      %v797 = vmax.f32 %v732, %v765
      %v798 = vmax.f32 %v733, %v766
      %v799 = vmax.f32 %v734, %v767
      %v800 = vmax.f32 %v735, %v768
      %v801 = vmax.f32 %v736, %v769
      %v802 = vmax.f32 %v737, %v770
      %v803 = vmax.f32 %v738, %v771
      %v804 = vmax.f32 %v739, %v772
      %v805 = vmax.f32 %v740, %v773
      %v806 = vmax.f32 %v741, %v774
      %s807 = scalar_lea.vmem [#allocation2], 96
      %v808 = vld [vmem:[%s807 + $0x2] sm:$0xff]
      %v809 = vld [vmem:[%s807 + $0xa] sm:$0xff]
      %v810 = vld [vmem:[%s807 + $0x1a] sm:$0xff]
      %v811 = vld [vmem:[%s807 + $0x22] sm:$0xff]
      %v812 = vld [vmem:[%s807 + $0x32] sm:$0xff]
      %v813 = vld [vmem:[%s807 + $0x3a] sm:$0xff]
      %v814 = vld [vmem:[%s807 + $0x4a] sm:$0xff]
      %v815 = vld [vmem:[%s807 + $0x52] sm:$0xff]
      %v816 = vld [vmem:[%s807 + $0x62] sm:$0xff]
      %v817 = vld [vmem:[%s807 + $0x6a] sm:$0xff]
      %v818 = vld [vmem:[%s807 + $0x7a] sm:$0xff]
      %v819 = vld [vmem:[%s807 + $0x82] sm:$0xff]
      %v820 = vld [vmem:[%s807 + $0x92] sm:$0xff]
      %v821 = vld [vmem:[%s807 + $0x9a] sm:$0xff]
      %v822 = vld [vmem:[%s807 + $0xaa] sm:$0xff]
      %v823 = vld [vmem:[%s807 + $0xb2] sm:$0xff]
      %v824 = vld [vmem:[%s807 + $0xc2] sm:$0xff]
      %v825 = vld [vmem:[%s807 + $0xca] sm:$0xff]
      %v826 = vld [vmem:[%s807 + $0xda] sm:$0xff]
      %v827 = vld [vmem:[%s807 + $0xe2] sm:$0xff]
      %v828 = vld [vmem:[%s807 + $0xf2] sm:$0xff]
      %v829 = vld [vmem:[%s807 + $0xfa] sm:$0xff]
      %v830 = vld [vmem:[%s807 + $0x10a] sm:$0xff]
      %v831 = vld [vmem:[%s807 + $0x112] sm:$0xff]
      %v832 = vld [vmem:[%s807 + $0x122] sm:$0xff]
      %v833 = vld [vmem:[%s807 + $0x12a] sm:$0xff]
      %v834 = vld [vmem:[%s807 + $0x13a] sm:$0xff]
      %v835 = vld [vmem:[%s807 + $0x142] sm:$0xff]
      %v836 = vld [vmem:[%s807 + $0x152] sm:$0xff]
      %v837 = vld [vmem:[%s807 + $0x15a] sm:$0xff]
      %v838 = vld [vmem:[%s807 + $0x16a] sm:$0xff]
      %v839 = vld [vmem:[%s807 + $0x172] sm:$0xff]
      %v840 = vmax.f32 %v775, %v808
      %v841 = vmax.f32 %v776, %v809
      %v842 = vmax.f32 %v777, %v810
      %v843 = vmax.f32 %v778, %v811
      %v844 = vmax.f32 %v779, %v812
      %v845 = vmax.f32 %v780, %v813
      %v846 = vmax.f32 %v781, %v814
      %v847 = vmax.f32 %v782, %v815
      %v848 = vmax.f32 %v783, %v816
      %v849 = vmax.f32 %v784, %v817
      %v850 = vmax.f32 %v785, %v818
      %v851 = vmax.f32 %v786, %v819
      %v852 = vmax.f32 %v787, %v820
      %v853 = vmax.f32 %v788, %v821
      %v854 = vmax.f32 %v789, %v822
      %v855 = vmax.f32 %v790, %v823
      %v856 = vmax.f32 %v791, %v824
      %v857 = vmax.f32 %v792, %v825
      %v858 = vmax.f32 %v793, %v826
      %v859 = vmax.f32 %v794, %v827
      %v860 = vmax.f32 %v795, %v828
      %v861 = vmax.f32 %v796, %v829
      %v862 = vmax.f32 %v797, %v830
      %v863 = vmax.f32 %v798, %v831
      %v864 = vmax.f32 %v799, %v832
      %v865 = vmax.f32 %v800, %v833
      %v866 = vmax.f32 %v801, %v834
      %v867 = vmax.f32 %v802, %v835
      %v868 = vmax.f32 %v803, %v836
      %v869 = vmax.f32 %v804, %v837
      %v870 = vmax.f32 %v805, %v838
      %v871 = vmax.f32 %v806, %v839
      %872 = vst.msk [vmem:[%s163 + $0x2] sm:$0xff] %vm148, %v840
      %873 = vst.msk [vmem:[%s163 + $0xa] sm:$0xff] %vm148, %v841
      %874 = vst.msk [vmem:[%s163 + $0x1a] sm:$0xff] %vm148, %v842
      %875 = vst.msk [vmem:[%s163 + $0x22] sm:$0xff] %vm148, %v843
      %876 = vst.msk [vmem:[%s163 + $0x32] sm:$0xff] %vm148, %v844
      %877 = vst.msk [vmem:[%s163 + $0x3a] sm:$0xff] %vm148, %v845
      %878 = vst.msk [vmem:[%s163 + $0x4a] sm:$0xff] %vm148, %v846
      %879 = vst.msk [vmem:[%s163 + $0x52] sm:$0xff] %vm148, %v847
      %880 = vst.msk [vmem:[%s163 + $0x62] sm:$0xff] %vm148, %v848
      %881 = vst.msk [vmem:[%s163 + $0x6a] sm:$0xff] %vm148, %v849
      %882 = vst.msk [vmem:[%s163 + $0x7a] sm:$0xff] %vm148, %v850
      %883 = vst.msk [vmem:[%s163 + $0x82] sm:$0xff] %vm148, %v851
      %884 = vst.msk [vmem:[%s163 + $0x92] sm:$0xff] %vm148, %v852
      %885 = vst.msk [vmem:[%s163 + $0x9a] sm:$0xff] %vm148, %v853
      %886 = vst.msk [vmem:[%s163 + $0xaa] sm:$0xff] %vm148, %v854
      %887 = vst.msk [vmem:[%s163 + $0xb2] sm:$0xff] %vm148, %v855
      %888 = vst.msk [vmem:[%s163 + $0xc2] sm:$0xff] %vm148, %v856
      %889 = vst.msk [vmem:[%s163 + $0xca] sm:$0xff] %vm148, %v857
      %890 = vst.msk [vmem:[%s163 + $0xda] sm:$0xff] %vm148, %v858
      %891 = vst.msk [vmem:[%s163 + $0xe2] sm:$0xff] %vm148, %v859
      %892 = vst.msk [vmem:[%s163 + $0xf2] sm:$0xff] %vm148, %v860
      %893 = vst.msk [vmem:[%s163 + $0xfa] sm:$0xff] %vm148, %v861
      %894 = vst.msk [vmem:[%s163 + $0x10a] sm:$0xff] %vm148, %v862
      %895 = vst.msk [vmem:[%s163 + $0x112] sm:$0xff] %vm148, %v863
      %896 = vst.msk [vmem:[%s163 + $0x122] sm:$0xff] %vm148, %v864
      %897 = vst.msk [vmem:[%s163 + $0x12a] sm:$0xff] %vm148, %v865
      %898 = vst.msk [vmem:[%s163 + $0x13a] sm:$0xff] %vm148, %v866
      %899 = vst.msk [vmem:[%s163 + $0x142] sm:$0xff] %vm148, %v867
      %900 = vst.msk [vmem:[%s163 + $0x152] sm:$0xff] %vm148, %v868
      %901 = vst.msk [vmem:[%s163 + $0x15a] sm:$0xff] %vm148, %v869
      %902 = vst.msk [vmem:[%s163 + $0x16a] sm:$0xff] %vm148, %v870
      %903 = vst.msk [vmem:[%s163 + $0x172] sm:$0xff] %vm148, %v871
      %v904 = vld [vmem:[%s163] sm:$0xff]
      %v905 = vld [vmem:[%s163 + $0x8] sm:$0xff]
      %v906 = vld [vmem:[%s163 + $0x18] sm:$0xff]
      %v907 = vld [vmem:[%s163 + $0x20] sm:$0xff]
      %v908 = vld [vmem:[%s163 + $0x30] sm:$0xff]
      %v909 = vld [vmem:[%s163 + $0x38] sm:$0xff]
      %v910 = vld [vmem:[%s163 + $0x48] sm:$0xff]
      %v911 = vld [vmem:[%s163 + $0x50] sm:$0xff]
      %v912 = vld [vmem:[%s163 + $0x60] sm:$0xff]
      %v913 = vld [vmem:[%s163 + $0x68] sm:$0xff]
      %v914 = vld [vmem:[%s163 + $0x78] sm:$0xff]
      %v915 = vld [vmem:[%s163 + $0x80] sm:$0xff]
      %v916 = vld [vmem:[%s163 + $0x90] sm:$0xff]
      %v917 = vld [vmem:[%s163 + $0x98] sm:$0xff]
      %v918 = vld [vmem:[%s163 + $0xa8] sm:$0xff]
      %v919 = vld [vmem:[%s163 + $0xb0] sm:$0xff]
      %v920 = vld [vmem:[%s163 + $0xc0] sm:$0xff]
      %v921 = vld [vmem:[%s163 + $0xc8] sm:$0xff]
      %v922 = vld [vmem:[%s163 + $0xd8] sm:$0xff]
      %v923 = vld [vmem:[%s163 + $0xe0] sm:$0xff]
      %v924 = vld [vmem:[%s163 + $0xf0] sm:$0xff]
      %v925 = vld [vmem:[%s163 + $0xf8] sm:$0xff]
      %v926 = vld [vmem:[%s163 + $0x108] sm:$0xff]
      %v927 = vld [vmem:[%s163 + $0x110] sm:$0xff]
      %v928 = vld [vmem:[%s163 + $0x120] sm:$0xff]
      %v929 = vld [vmem:[%s163 + $0x128] sm:$0xff]
      %v930 = vld [vmem:[%s163 + $0x138] sm:$0xff]
      %v931 = vld [vmem:[%s163 + $0x140] sm:$0xff]
      %v932 = vld [vmem:[%s163 + $0x150] sm:$0xff]
      %v933 = vld [vmem:[%s163 + $0x158] sm:$0xff]
      %v934 = vld [vmem:[%s163 + $0x168] sm:$0xff]
      %v935 = vld [vmem:[%s163 + $0x170] sm:$0xff]
      %v936 = vld [vmem:[%s163 + $0x1] sm:$0xff]
      %v937 = vld [vmem:[%s163 + $0x9] sm:$0xff]
      %v938 = vld [vmem:[%s163 + $0x19] sm:$0xff]
      %v939 = vld [vmem:[%s163 + $0x21] sm:$0xff]
      %v940 = vld [vmem:[%s163 + $0x31] sm:$0xff]
      %v941 = vld [vmem:[%s163 + $0x39] sm:$0xff]
      %v942 = vld [vmem:[%s163 + $0x49] sm:$0xff]
      %v943 = vld [vmem:[%s163 + $0x51] sm:$0xff]
      %v944 = vld [vmem:[%s163 + $0x61] sm:$0xff]
      %v945 = vld [vmem:[%s163 + $0x69] sm:$0xff]
      %v946 = vld [vmem:[%s163 + $0x79] sm:$0xff]
      %v947 = vld [vmem:[%s163 + $0x81] sm:$0xff]
      %v948 = vld [vmem:[%s163 + $0x91] sm:$0xff]
      %v949 = vld [vmem:[%s163 + $0x99] sm:$0xff]
      %v950 = vld [vmem:[%s163 + $0xa9] sm:$0xff]
      %v951 = vld [vmem:[%s163 + $0xb1] sm:$0xff]
      %v952 = vld [vmem:[%s163 + $0xc1] sm:$0xff]
      %v953 = vld [vmem:[%s163 + $0xc9] sm:$0xff]
      %v954 = vld [vmem:[%s163 + $0xd9] sm:$0xff]
      %v955 = vld [vmem:[%s163 + $0xe1] sm:$0xff]
      %v956 = vld [vmem:[%s163 + $0xf1] sm:$0xff]
      %v957 = vld [vmem:[%s163 + $0xf9] sm:$0xff]
      %v958 = vld [vmem:[%s163 + $0x109] sm:$0xff]
      %v959 = vld [vmem:[%s163 + $0x111] sm:$0xff]
      %v960 = vld [vmem:[%s163 + $0x121] sm:$0xff]
      %v961 = vld [vmem:[%s163 + $0x129] sm:$0xff]
      %v962 = vld [vmem:[%s163 + $0x139] sm:$0xff]
      %v963 = vld [vmem:[%s163 + $0x141] sm:$0xff]
      %v964 = vld [vmem:[%s163 + $0x151] sm:$0xff]
      %v965 = vld [vmem:[%s163 + $0x159] sm:$0xff]
      %v966 = vld [vmem:[%s163 + $0x169] sm:$0xff]
      %v967 = vld [vmem:[%s163 + $0x171] sm:$0xff]
      %v968 = vmax.f32 %v904, %v936
      %v969 = vmax.f32 %v905, %v937
      %v970 = vmax.f32 %v906, %v938
      %v971 = vmax.f32 %v907, %v939
      %v972 = vmax.f32 %v908, %v940
      %v973 = vmax.f32 %v909, %v941
      %v974 = vmax.f32 %v910, %v942
      %v975 = vmax.f32 %v911, %v943
      %v976 = vmax.f32 %v912, %v944
      %v977 = vmax.f32 %v913, %v945
      %v978 = vmax.f32 %v914, %v946
      %v979 = vmax.f32 %v915, %v947
      %v980 = vmax.f32 %v916, %v948
      %v981 = vmax.f32 %v917, %v949
      %v982 = vmax.f32 %v918, %v950
      %v983 = vmax.f32 %v919, %v951
      %v984 = vmax.f32 %v920, %v952
      %v985 = vmax.f32 %v921, %v953
      %v986 = vmax.f32 %v922, %v954
      %v987 = vmax.f32 %v923, %v955
      %v988 = vmax.f32 %v924, %v956
      %v989 = vmax.f32 %v925, %v957
      %v990 = vmax.f32 %v926, %v958
      %v991 = vmax.f32 %v927, %v959
      %v992 = vmax.f32 %v928, %v960
      %v993 = vmax.f32 %v929, %v961
      %v994 = vmax.f32 %v930, %v962
      %v995 = vmax.f32 %v931, %v963
      %v996 = vmax.f32 %v932, %v964
      %v997 = vmax.f32 %v933, %v965
      %v998 = vmax.f32 %v934, %v966
      %v999 = vmax.f32 %v935, %v967
      %v1000 = vld [vmem:[%s163 + $0x2] sm:$0xff]
      %v1001 = vld [vmem:[%s163 + $0xa] sm:$0xff]
      %v1002 = vld [vmem:[%s163 + $0x1a] sm:$0xff]
      %v1003 = vld [vmem:[%s163 + $0x22] sm:$0xff]
      %v1004 = vld [vmem:[%s163 + $0x32] sm:$0xff]
      %v1005 = vld [vmem:[%s163 + $0x3a] sm:$0xff]
      %v1006 = vld [vmem:[%s163 + $0x4a] sm:$0xff]
      %v1007 = vld [vmem:[%s163 + $0x52] sm:$0xff]
      %v1008 = vld [vmem:[%s163 + $0x62] sm:$0xff]
      %v1009 = vld [vmem:[%s163 + $0x6a] sm:$0xff]
      %v1010 = vld [vmem:[%s163 + $0x7a] sm:$0xff]
      %v1011 = vld [vmem:[%s163 + $0x82] sm:$0xff]
      %v1012 = vld [vmem:[%s163 + $0x92] sm:$0xff]
      %v1013 = vld [vmem:[%s163 + $0x9a] sm:$0xff]
      %v1014 = vld [vmem:[%s163 + $0xaa] sm:$0xff]
      %v1015 = vld [vmem:[%s163 + $0xb2] sm:$0xff]
      %v1016 = vld [vmem:[%s163 + $0xc2] sm:$0xff]
      %v1017 = vld [vmem:[%s163 + $0xca] sm:$0xff]
      %v1018 = vld [vmem:[%s163 + $0xda] sm:$0xff]
      %v1019 = vld [vmem:[%s163 + $0xe2] sm:$0xff]
      %v1020 = vld [vmem:[%s163 + $0xf2] sm:$0xff]
      %v1021 = vld [vmem:[%s163 + $0xfa] sm:$0xff]
      %v1022 = vld [vmem:[%s163 + $0x10a] sm:$0xff]
      %v1023 = vld [vmem:[%s163 + $0x112] sm:$0xff]
      %v1024 = vld [vmem:[%s163 + $0x122] sm:$0xff]
      %v1025 = vld [vmem:[%s163 + $0x12a] sm:$0xff]
      %v1026 = vld [vmem:[%s163 + $0x13a] sm:$0xff]
      %v1027 = vld [vmem:[%s163 + $0x142] sm:$0xff]
      %v1028 = vld [vmem:[%s163 + $0x152] sm:$0xff]
      %v1029 = vld [vmem:[%s163 + $0x15a] sm:$0xff]
      %v1030 = vld [vmem:[%s163 + $0x16a] sm:$0xff]
      %v1031 = vld [vmem:[%s163 + $0x172] sm:$0xff]
      %v1032 = vmax.f32 %v968, %v1000
      %v1033 = vmax.f32 %v969, %v1001
      %v1034 = vmax.f32 %v970, %v1002
      %v1035 = vmax.f32 %v971, %v1003
      %v1036 = vmax.f32 %v972, %v1004
      %v1037 = vmax.f32 %v973, %v1005
      %v1038 = vmax.f32 %v974, %v1006
      %v1039 = vmax.f32 %v975, %v1007
      %v1040 = vmax.f32 %v976, %v1008
      %v1041 = vmax.f32 %v977, %v1009
      %v1042 = vmax.f32 %v978, %v1010
      %v1043 = vmax.f32 %v979, %v1011
      %v1044 = vmax.f32 %v980, %v1012
      %v1045 = vmax.f32 %v981, %v1013
      %v1046 = vmax.f32 %v982, %v1014
      %v1047 = vmax.f32 %v983, %v1015
      %v1048 = vmax.f32 %v984, %v1016
      %v1049 = vmax.f32 %v985, %v1017
      %v1050 = vmax.f32 %v986, %v1018
      %v1051 = vmax.f32 %v987, %v1019
      %v1052 = vmax.f32 %v988, %v1020
      %v1053 = vmax.f32 %v989, %v1021
      %v1054 = vmax.f32 %v990, %v1022
      %v1055 = vmax.f32 %v991, %v1023
      %v1056 = vmax.f32 %v992, %v1024
      %v1057 = vmax.f32 %v993, %v1025
      %v1058 = vmax.f32 %v994, %v1026
      %v1059 = vmax.f32 %v995, %v1027
      %v1060 = vmax.f32 %v996, %v1028
      %v1061 = vmax.f32 %v997, %v1029
      %v1062 = vmax.f32 %v998, %v1030
      %v1063 = vmax.f32 %v999, %v1031
      %v1064 = vld [vmem:[%s163 + $0x3] sm:$0xff]
      %v1065 = vld [vmem:[%s163 + $0xb] sm:$0xff]
      %v1066 = vld [vmem:[%s163 + $0x1b] sm:$0xff]
      %v1067 = vld [vmem:[%s163 + $0x23] sm:$0xff]
      %v1068 = vld [vmem:[%s163 + $0x33] sm:$0xff]
      %v1069 = vld [vmem:[%s163 + $0x3b] sm:$0xff]
      %v1070 = vld [vmem:[%s163 + $0x4b] sm:$0xff]
      %v1071 = vld [vmem:[%s163 + $0x53] sm:$0xff]
      %v1072 = vld [vmem:[%s163 + $0x63] sm:$0xff]
      %v1073 = vld [vmem:[%s163 + $0x6b] sm:$0xff]
      %v1074 = vld [vmem:[%s163 + $0x7b] sm:$0xff]
      %v1075 = vld [vmem:[%s163 + $0x83] sm:$0xff]
      %v1076 = vld [vmem:[%s163 + $0x93] sm:$0xff]
      %v1077 = vld [vmem:[%s163 + $0x9b] sm:$0xff]
      %v1078 = vld [vmem:[%s163 + $0xab] sm:$0xff]
      %v1079 = vld [vmem:[%s163 + $0xb3] sm:$0xff]
      %v1080 = vld [vmem:[%s163 + $0xc3] sm:$0xff]
      %v1081 = vld [vmem:[%s163 + $0xcb] sm:$0xff]
      %v1082 = vld [vmem:[%s163 + $0xdb] sm:$0xff]
      %v1083 = vld [vmem:[%s163 + $0xe3] sm:$0xff]
      %v1084 = vld [vmem:[%s163 + $0xf3] sm:$0xff]
      %v1085 = vld [vmem:[%s163 + $0xfb] sm:$0xff]
      %v1086 = vld [vmem:[%s163 + $0x10b] sm:$0xff]
      %v1087 = vld [vmem:[%s163 + $0x113] sm:$0xff]
      %v1088 = vld [vmem:[%s163 + $0x123] sm:$0xff]
      %v1089 = vld [vmem:[%s163 + $0x12b] sm:$0xff]
      %v1090 = vld [vmem:[%s163 + $0x13b] sm:$0xff]
      %v1091 = vld [vmem:[%s163 + $0x143] sm:$0xff]
      %v1092 = vld [vmem:[%s163 + $0x153] sm:$0xff]
      %v1093 = vld [vmem:[%s163 + $0x15b] sm:$0xff]
      %v1094 = vld [vmem:[%s163 + $0x16b] sm:$0xff]
      %v1095 = vld [vmem:[%s163 + $0x173] sm:$0xff]
      %v1096 = vmax.f32 %v1032, %v1064
      %v1097 = vmax.f32 %v1033, %v1065
      %v1098 = vmax.f32 %v1034, %v1066
      %v1099 = vmax.f32 %v1035, %v1067
      %v1100 = vmax.f32 %v1036, %v1068
      %v1101 = vmax.f32 %v1037, %v1069
      %v1102 = vmax.f32 %v1038, %v1070
      %v1103 = vmax.f32 %v1039, %v1071
      %v1104 = vmax.f32 %v1040, %v1072
      %v1105 = vmax.f32 %v1041, %v1073
      %v1106 = vmax.f32 %v1042, %v1074
      %v1107 = vmax.f32 %v1043, %v1075
      %v1108 = vmax.f32 %v1044, %v1076
      %v1109 = vmax.f32 %v1045, %v1077
      %v1110 = vmax.f32 %v1046, %v1078
      %v1111 = vmax.f32 %v1047, %v1079
      %v1112 = vmax.f32 %v1048, %v1080
      %v1113 = vmax.f32 %v1049, %v1081
      %v1114 = vmax.f32 %v1050, %v1082
      %v1115 = vmax.f32 %v1051, %v1083
      %v1116 = vmax.f32 %v1052, %v1084
      %v1117 = vmax.f32 %v1053, %v1085
      %v1118 = vmax.f32 %v1054, %v1086
      %v1119 = vmax.f32 %v1055, %v1087
      %v1120 = vmax.f32 %v1056, %v1088
      %v1121 = vmax.f32 %v1057, %v1089
      %v1122 = vmax.f32 %v1058, %v1090
      %v1123 = vmax.f32 %v1059, %v1091
      %v1124 = vmax.f32 %v1060, %v1092
      %v1125 = vmax.f32 %v1061, %v1093
      %v1126 = vmax.f32 %v1062, %v1094
      %v1127 = vmax.f32 %v1063, %v1095
      %v1128 = vld [vmem:[%s163 + $0x4] sm:$0xff]
      %v1129 = vld [vmem:[%s163 + $0xc] sm:$0xff]
      %v1130 = vld [vmem:[%s163 + $0x1c] sm:$0xff]
      %v1131 = vld [vmem:[%s163 + $0x24] sm:$0xff]
      %v1132 = vld [vmem:[%s163 + $0x34] sm:$0xff]
      %v1133 = vld [vmem:[%s163 + $0x3c] sm:$0xff]
      %v1134 = vld [vmem:[%s163 + $0x4c] sm:$0xff]
      %v1135 = vld [vmem:[%s163 + $0x54] sm:$0xff]
      %v1136 = vld [vmem:[%s163 + $0x64] sm:$0xff]
      %v1137 = vld [vmem:[%s163 + $0x6c] sm:$0xff]
      %v1138 = vld [vmem:[%s163 + $0x7c] sm:$0xff]
      %v1139 = vld [vmem:[%s163 + $0x84] sm:$0xff]
      %v1140 = vld [vmem:[%s163 + $0x94] sm:$0xff]
      %v1141 = vld [vmem:[%s163 + $0x9c] sm:$0xff]
      %v1142 = vld [vmem:[%s163 + $0xac] sm:$0xff]
      %v1143 = vld [vmem:[%s163 + $0xb4] sm:$0xff]
      %v1144 = vld [vmem:[%s163 + $0xc4] sm:$0xff]
      %v1145 = vld [vmem:[%s163 + $0xcc] sm:$0xff]
      %v1146 = vld [vmem:[%s163 + $0xdc] sm:$0xff]
      %v1147 = vld [vmem:[%s163 + $0xe4] sm:$0xff]
      %v1148 = vld [vmem:[%s163 + $0xf4] sm:$0xff]
      %v1149 = vld [vmem:[%s163 + $0xfc] sm:$0xff]
      %v1150 = vld [vmem:[%s163 + $0x10c] sm:$0xff]
      %v1151 = vld [vmem:[%s163 + $0x114] sm:$0xff]
      %v1152 = vld [vmem:[%s163 + $0x124] sm:$0xff]
      %v1153 = vld [vmem:[%s163 + $0x12c] sm:$0xff]
      %v1154 = vld [vmem:[%s163 + $0x13c] sm:$0xff]
      %v1155 = vld [vmem:[%s163 + $0x144] sm:$0xff]
      %v1156 = vld [vmem:[%s163 + $0x154] sm:$0xff]
      %v1157 = vld [vmem:[%s163 + $0x15c] sm:$0xff]
      %v1158 = vld [vmem:[%s163 + $0x16c] sm:$0xff]
      %v1159 = vld [vmem:[%s163 + $0x174] sm:$0xff]
      %v1160 = vmax.f32 %v1096, %v1128
      %v1161 = vmax.f32 %v1097, %v1129
      %v1162 = vmax.f32 %v1098, %v1130
      %v1163 = vmax.f32 %v1099, %v1131
      %v1164 = vmax.f32 %v1100, %v1132
      %v1165 = vmax.f32 %v1101, %v1133
      %v1166 = vmax.f32 %v1102, %v1134
      %v1167 = vmax.f32 %v1103, %v1135
      %v1168 = vmax.f32 %v1104, %v1136
      %v1169 = vmax.f32 %v1105, %v1137
      %v1170 = vmax.f32 %v1106, %v1138
      %v1171 = vmax.f32 %v1107, %v1139
      %v1172 = vmax.f32 %v1108, %v1140
      %v1173 = vmax.f32 %v1109, %v1141
      %v1174 = vmax.f32 %v1110, %v1142
      %v1175 = vmax.f32 %v1111, %v1143
      %v1176 = vmax.f32 %v1112, %v1144
      %v1177 = vmax.f32 %v1113, %v1145
      %v1178 = vmax.f32 %v1114, %v1146
      %v1179 = vmax.f32 %v1115, %v1147
      %v1180 = vmax.f32 %v1116, %v1148
      %v1181 = vmax.f32 %v1117, %v1149
      %v1182 = vmax.f32 %v1118, %v1150
      %v1183 = vmax.f32 %v1119, %v1151
      %v1184 = vmax.f32 %v1120, %v1152
      %v1185 = vmax.f32 %v1121, %v1153
      %v1186 = vmax.f32 %v1122, %v1154
      %v1187 = vmax.f32 %v1123, %v1155
      %v1188 = vmax.f32 %v1124, %v1156
      %v1189 = vmax.f32 %v1125, %v1157
      %v1190 = vmax.f32 %v1126, %v1158
      %v1191 = vmax.f32 %v1127, %v1159
      %1192 = vst.msk [vmem:[%s163 + $0x2] sm:$0xff] %vm148, %v1160
      %1193 = vst.msk [vmem:[%s163 + $0xa] sm:$0xff] %vm148, %v1161
      %1194 = vst.msk [vmem:[%s163 + $0x1a] sm:$0xff] %vm148, %v1162
      %1195 = vst.msk [vmem:[%s163 + $0x22] sm:$0xff] %vm148, %v1163
      %1196 = vst.msk [vmem:[%s163 + $0x32] sm:$0xff] %vm148, %v1164
      %1197 = vst.msk [vmem:[%s163 + $0x3a] sm:$0xff] %vm148, %v1165
      %1198 = vst.msk [vmem:[%s163 + $0x4a] sm:$0xff] %vm148, %v1166
      %1199 = vst.msk [vmem:[%s163 + $0x52] sm:$0xff] %vm148, %v1167
      %1200 = vst.msk [vmem:[%s163 + $0x62] sm:$0xff] %vm148, %v1168
      %1201 = vst.msk [vmem:[%s163 + $0x6a] sm:$0xff] %vm148, %v1169
      %1202 = vst.msk [vmem:[%s163 + $0x7a] sm:$0xff] %vm148, %v1170
      %1203 = vst.msk [vmem:[%s163 + $0x82] sm:$0xff] %vm148, %v1171
      %1204 = vst.msk [vmem:[%s163 + $0x92] sm:$0xff] %vm148, %v1172
      %1205 = vst.msk [vmem:[%s163 + $0x9a] sm:$0xff] %vm148, %v1173
      %1206 = vst.msk [vmem:[%s163 + $0xaa] sm:$0xff] %vm148, %v1174
      %1207 = vst.msk [vmem:[%s163 + $0xb2] sm:$0xff] %vm148, %v1175
      %1208 = vst.msk [vmem:[%s163 + $0xc2] sm:$0xff] %vm148, %v1176
      %1209 = vst.msk [vmem:[%s163 + $0xca] sm:$0xff] %vm148, %v1177
      %1210 = vst.msk [vmem:[%s163 + $0xda] sm:$0xff] %vm148, %v1178
      %1211 = vst.msk [vmem:[%s163 + $0xe2] sm:$0xff] %vm148, %v1179
      %1212 = vst.msk [vmem:[%s163 + $0xf2] sm:$0xff] %vm148, %v1180
      %1213 = vst.msk [vmem:[%s163 + $0xfa] sm:$0xff] %vm148, %v1181
      %1214 = vst.msk [vmem:[%s163 + $0x10a] sm:$0xff] %vm148, %v1182
      %1215 = vst.msk [vmem:[%s163 + $0x112] sm:$0xff] %vm148, %v1183
      %1216 = vst.msk [vmem:[%s163 + $0x122] sm:$0xff] %vm148, %v1184
      %1217 = vst.msk [vmem:[%s163 + $0x12a] sm:$0xff] %vm148, %v1185
      %1218 = vst.msk [vmem:[%s163 + $0x13a] sm:$0xff] %vm148, %v1186
      %1219 = vst.msk [vmem:[%s163 + $0x142] sm:$0xff] %vm148, %v1187
      %1220 = vst.msk [vmem:[%s163 + $0x152] sm:$0xff] %vm148, %v1188
      %1221 = vst.msk [vmem:[%s163 + $0x15a] sm:$0xff] %vm148, %v1189
      %1222 = vst.msk [vmem:[%s163 + $0x16a] sm:$0xff] %vm148, %v1190
      %1223 = vst.msk [vmem:[%s163 + $0x172] sm:$0xff] %vm148, %v1191
      %v1224 = vld [vmem:[#allocation2 + $0x2] sm:$0xff]
      %v1225 = vld [vmem:[#allocation2 + $0xa] sm:$0xff]
      %v1226 = vld [vmem:[#allocation2 + $0x1a] sm:$0xff]
      %v1227 = vld [vmem:[#allocation2 + $0x22] sm:$0xff]
      %v1228 = vld [vmem:[#allocation2 + $0x32] sm:$0xff]
      %v1229 = vld [vmem:[#allocation2 + $0x3a] sm:$0xff]
      %v1230 = vld [vmem:[#allocation2 + $0x4a] sm:$0xff]
      %v1231 = vld [vmem:[#allocation2 + $0x52] sm:$0xff]
      %v1232 = vld [vmem:[#allocation2 + $0x62] sm:$0xff]
      %v1233 = vld [vmem:[#allocation2 + $0x6a] sm:$0xff]
      %v1234 = vld [vmem:[#allocation2 + $0x7a] sm:$0xff]
      %v1235 = vld [vmem:[#allocation2 + $0x82] sm:$0xff]
      %v1236 = vld [vmem:[#allocation2 + $0x92] sm:$0xff]
      %v1237 = vld [vmem:[#allocation2 + $0x9a] sm:$0xff]
      %v1238 = vld [vmem:[#allocation2 + $0xaa] sm:$0xff]
      %v1239 = vld [vmem:[#allocation2 + $0xb2] sm:$0xff]
      %v1240 = vld [vmem:[#allocation2 + $0xc2] sm:$0xff]
      %v1241 = vld [vmem:[#allocation2 + $0xca] sm:$0xff]
      %v1242 = vld [vmem:[#allocation2 + $0xda] sm:$0xff]
      %v1243 = vld [vmem:[#allocation2 + $0xe2] sm:$0xff]
      %v1244 = vld [vmem:[#allocation2 + $0xf2] sm:$0xff]
      %v1245 = vld [vmem:[#allocation2 + $0xfa] sm:$0xff]
      %v1246 = vld [vmem:[#allocation2 + $0x10a] sm:$0xff]
      %v1247 = vld [vmem:[#allocation2 + $0x112] sm:$0xff]
      %v1248 = vld [vmem:[#allocation2 + $0x122] sm:$0xff]
      %v1249 = vld [vmem:[#allocation2 + $0x12a] sm:$0xff]
      %v1250 = vld [vmem:[#allocation2 + $0x13a] sm:$0xff]
      %v1251 = vld [vmem:[#allocation2 + $0x142] sm:$0xff]
      %v1252 = vld [vmem:[#allocation2 + $0x152] sm:$0xff]
      %v1253 = vld [vmem:[#allocation2 + $0x15a] sm:$0xff]
      %v1254 = vld [vmem:[#allocation2 + $0x16a] sm:$0xff]
      %v1255 = vld [vmem:[#allocation2 + $0x172] sm:$0xff]
      %v1256 = vld [vmem:[%s613 + $0x2] sm:$0xff]
      %v1257 = vld [vmem:[%s613 + $0xa] sm:$0xff]
      %v1258 = vld [vmem:[%s613 + $0x1a] sm:$0xff]
      %v1259 = vld [vmem:[%s613 + $0x22] sm:$0xff]
      %v1260 = vld [vmem:[%s613 + $0x32] sm:$0xff]
      %v1261 = vld [vmem:[%s613 + $0x3a] sm:$0xff]
      %v1262 = vld [vmem:[%s613 + $0x4a] sm:$0xff]
      %v1263 = vld [vmem:[%s613 + $0x52] sm:$0xff]
      %v1264 = vld [vmem:[%s613 + $0x62] sm:$0xff]
      %v1265 = vld [vmem:[%s613 + $0x6a] sm:$0xff]
      %v1266 = vld [vmem:[%s613 + $0x7a] sm:$0xff]
      %v1267 = vld [vmem:[%s613 + $0x82] sm:$0xff]
      %v1268 = vld [vmem:[%s613 + $0x92] sm:$0xff]
      %v1269 = vld [vmem:[%s613 + $0x9a] sm:$0xff]
      %v1270 = vld [vmem:[%s613 + $0xaa] sm:$0xff]
      %v1271 = vld [vmem:[%s613 + $0xb2] sm:$0xff]
      %v1272 = vld [vmem:[%s613 + $0xc2] sm:$0xff]
      %v1273 = vld [vmem:[%s613 + $0xca] sm:$0xff]
      %v1274 = vld [vmem:[%s613 + $0xda] sm:$0xff]
      %v1275 = vld [vmem:[%s613 + $0xe2] sm:$0xff]
      %v1276 = vld [vmem:[%s613 + $0xf2] sm:$0xff]
      %v1277 = vld [vmem:[%s613 + $0xfa] sm:$0xff]
      %v1278 = vld [vmem:[%s613 + $0x10a] sm:$0xff]
      %v1279 = vld [vmem:[%s613 + $0x112] sm:$0xff]
      %v1280 = vld [vmem:[%s613 + $0x122] sm:$0xff]
      %v1281 = vld [vmem:[%s613 + $0x12a] sm:$0xff]
      %v1282 = vld [vmem:[%s613 + $0x13a] sm:$0xff]
      %v1283 = vld [vmem:[%s613 + $0x142] sm:$0xff]
      %v1284 = vld [vmem:[%s613 + $0x152] sm:$0xff]
      %v1285 = vld [vmem:[%s613 + $0x15a] sm:$0xff]
      %v1286 = vld [vmem:[%s613 + $0x16a] sm:$0xff]
      %v1287 = vld [vmem:[%s613 + $0x172] sm:$0xff]
      %v1288 = vmax.f32 %v1224, %v1256
      %v1289 = vmax.f32 %v1225, %v1257
      %v1290 = vmax.f32 %v1226, %v1258
      %v1291 = vmax.f32 %v1227, %v1259
      %v1292 = vmax.f32 %v1228, %v1260
      %v1293 = vmax.f32 %v1229, %v1261
      %v1294 = vmax.f32 %v1230, %v1262
      %v1295 = vmax.f32 %v1231, %v1263
      %v1296 = vmax.f32 %v1232, %v1264
      %v1297 = vmax.f32 %v1233, %v1265
      %v1298 = vmax.f32 %v1234, %v1266
      %v1299 = vmax.f32 %v1235, %v1267
      %v1300 = vmax.f32 %v1236, %v1268
      %v1301 = vmax.f32 %v1237, %v1269
      %v1302 = vmax.f32 %v1238, %v1270
      %v1303 = vmax.f32 %v1239, %v1271
      %v1304 = vmax.f32 %v1240, %v1272
      %v1305 = vmax.f32 %v1241, %v1273
      %v1306 = vmax.f32 %v1242, %v1274
      %v1307 = vmax.f32 %v1243, %v1275
      %v1308 = vmax.f32 %v1244, %v1276
      %v1309 = vmax.f32 %v1245, %v1277
      %v1310 = vmax.f32 %v1246, %v1278
      %v1311 = vmax.f32 %v1247, %v1279
      %v1312 = vmax.f32 %v1248, %v1280
      %v1313 = vmax.f32 %v1249, %v1281
      %v1314 = vmax.f32 %v1250, %v1282
      %v1315 = vmax.f32 %v1251, %v1283
      %v1316 = vmax.f32 %v1252, %v1284
      %v1317 = vmax.f32 %v1253, %v1285
      %v1318 = vmax.f32 %v1254, %v1286
      %v1319 = vmax.f32 %v1255, %v1287
      %v1320 = vld [vmem:[%s163 + $0x2] sm:$0xff]
      %v1321 = vld [vmem:[%s163 + $0xa] sm:$0xff]
      %v1322 = vld [vmem:[%s163 + $0x1a] sm:$0xff]
      %v1323 = vld [vmem:[%s163 + $0x22] sm:$0xff]
      %v1324 = vld [vmem:[%s163 + $0x32] sm:$0xff]
      %v1325 = vld [vmem:[%s163 + $0x3a] sm:$0xff]
      %v1326 = vld [vmem:[%s163 + $0x4a] sm:$0xff]
      %v1327 = vld [vmem:[%s163 + $0x52] sm:$0xff]
      %v1328 = vld [vmem:[%s163 + $0x62] sm:$0xff]
      %v1329 = vld [vmem:[%s163 + $0x6a] sm:$0xff]
      %v1330 = vld [vmem:[%s163 + $0x7a] sm:$0xff]
      %v1331 = vld [vmem:[%s163 + $0x82] sm:$0xff]
      %v1332 = vld [vmem:[%s163 + $0x92] sm:$0xff]
      %v1333 = vld [vmem:[%s163 + $0x9a] sm:$0xff]
      %v1334 = vld [vmem:[%s163 + $0xaa] sm:$0xff]
      %v1335 = vld [vmem:[%s163 + $0xb2] sm:$0xff]
      %v1336 = vld [vmem:[%s163 + $0xc2] sm:$0xff]
      %v1337 = vld [vmem:[%s163 + $0xca] sm:$0xff]
      %v1338 = vld [vmem:[%s163 + $0xda] sm:$0xff]
      %v1339 = vld [vmem:[%s163 + $0xe2] sm:$0xff]
      %v1340 = vld [vmem:[%s163 + $0xf2] sm:$0xff]
      %v1341 = vld [vmem:[%s163 + $0xfa] sm:$0xff]
      %v1342 = vld [vmem:[%s163 + $0x10a] sm:$0xff]
      %v1343 = vld [vmem:[%s163 + $0x112] sm:$0xff]
      %v1344 = vld [vmem:[%s163 + $0x122] sm:$0xff]
      %v1345 = vld [vmem:[%s163 + $0x12a] sm:$0xff]
      %v1346 = vld [vmem:[%s163 + $0x13a] sm:$0xff]
      %v1347 = vld [vmem:[%s163 + $0x142] sm:$0xff]
      %v1348 = vld [vmem:[%s163 + $0x152] sm:$0xff]
      %v1349 = vld [vmem:[%s163 + $0x15a] sm:$0xff]
      %v1350 = vld [vmem:[%s163 + $0x16a] sm:$0xff]
      %v1351 = vld [vmem:[%s163 + $0x172] sm:$0xff]
      %v1352 = vmax.f32 %v1288, %v1320
      %v1353 = vmax.f32 %v1289, %v1321
      %v1354 = vmax.f32 %v1290, %v1322
      %v1355 = vmax.f32 %v1291, %v1323
      %v1356 = vmax.f32 %v1292, %v1324
      %v1357 = vmax.f32 %v1293, %v1325
      %v1358 = vmax.f32 %v1294, %v1326
      %v1359 = vmax.f32 %v1295, %v1327
      %v1360 = vmax.f32 %v1296, %v1328
      %v1361 = vmax.f32 %v1297, %v1329
      %v1362 = vmax.f32 %v1298, %v1330
      %v1363 = vmax.f32 %v1299, %v1331
      %v1364 = vmax.f32 %v1300, %v1332
      %v1365 = vmax.f32 %v1301, %v1333
      %v1366 = vmax.f32 %v1302, %v1334
      %v1367 = vmax.f32 %v1303, %v1335
      %v1368 = vmax.f32 %v1304, %v1336
      %v1369 = vmax.f32 %v1305, %v1337
      %v1370 = vmax.f32 %v1306, %v1338
      %v1371 = vmax.f32 %v1307, %v1339
      %v1372 = vmax.f32 %v1308, %v1340
      %v1373 = vmax.f32 %v1309, %v1341
      %v1374 = vmax.f32 %v1310, %v1342
      %v1375 = vmax.f32 %v1311, %v1343
      %v1376 = vmax.f32 %v1312, %v1344
      %v1377 = vmax.f32 %v1313, %v1345
      %v1378 = vmax.f32 %v1314, %v1346
      %v1379 = vmax.f32 %v1315, %v1347
      %v1380 = vmax.f32 %v1316, %v1348
      %v1381 = vmax.f32 %v1317, %v1349
      %v1382 = vmax.f32 %v1318, %v1350
      %v1383 = vmax.f32 %v1319, %v1351
      %v1384 = vld [vmem:[%s742 + $0x2] sm:$0xff]
      %v1385 = vld [vmem:[%s742 + $0xa] sm:$0xff]
      %v1386 = vld [vmem:[%s742 + $0x1a] sm:$0xff]
      %v1387 = vld [vmem:[%s742 + $0x22] sm:$0xff]
      %v1388 = vld [vmem:[%s742 + $0x32] sm:$0xff]
      %v1389 = vld [vmem:[%s742 + $0x3a] sm:$0xff]
      %v1390 = vld [vmem:[%s742 + $0x4a] sm:$0xff]
      %v1391 = vld [vmem:[%s742 + $0x52] sm:$0xff]
      %v1392 = vld [vmem:[%s742 + $0x62] sm:$0xff]
      %v1393 = vld [vmem:[%s742 + $0x6a] sm:$0xff]
      %v1394 = vld [vmem:[%s742 + $0x7a] sm:$0xff]
      %v1395 = vld [vmem:[%s742 + $0x82] sm:$0xff]
      %v1396 = vld [vmem:[%s742 + $0x92] sm:$0xff]
      %v1397 = vld [vmem:[%s742 + $0x9a] sm:$0xff]
      %v1398 = vld [vmem:[%s742 + $0xaa] sm:$0xff]
      %v1399 = vld [vmem:[%s742 + $0xb2] sm:$0xff]
      %v1400 = vld [vmem:[%s742 + $0xc2] sm:$0xff]
      %v1401 = vld [vmem:[%s742 + $0xca] sm:$0xff]
      %v1402 = vld [vmem:[%s742 + $0xda] sm:$0xff]
      %v1403 = vld [vmem:[%s742 + $0xe2] sm:$0xff]
      %v1404 = vld [vmem:[%s742 + $0xf2] sm:$0xff]
      %v1405 = vld [vmem:[%s742 + $0xfa] sm:$0xff]
      %v1406 = vld [vmem:[%s742 + $0x10a] sm:$0xff]
      %v1407 = vld [vmem:[%s742 + $0x112] sm:$0xff]
      %v1408 = vld [vmem:[%s742 + $0x122] sm:$0xff]
      %v1409 = vld [vmem:[%s742 + $0x12a] sm:$0xff]
      %v1410 = vld [vmem:[%s742 + $0x13a] sm:$0xff]
      %v1411 = vld [vmem:[%s742 + $0x142] sm:$0xff]
      %v1412 = vld [vmem:[%s742 + $0x152] sm:$0xff]
      %v1413 = vld [vmem:[%s742 + $0x15a] sm:$0xff]
      %v1414 = vld [vmem:[%s742 + $0x16a] sm:$0xff]
      %v1415 = vld [vmem:[%s742 + $0x172] sm:$0xff]
      %v1416 = vmax.f32 %v1352, %v1384
      %v1417 = vmax.f32 %v1353, %v1385
      %v1418 = vmax.f32 %v1354, %v1386
      %v1419 = vmax.f32 %v1355, %v1387
      %v1420 = vmax.f32 %v1356, %v1388
      %v1421 = vmax.f32 %v1357, %v1389
      %v1422 = vmax.f32 %v1358, %v1390
      %v1423 = vmax.f32 %v1359, %v1391
      %v1424 = vmax.f32 %v1360, %v1392
      %v1425 = vmax.f32 %v1361, %v1393
      %v1426 = vmax.f32 %v1362, %v1394
      %v1427 = vmax.f32 %v1363, %v1395
      %v1428 = vmax.f32 %v1364, %v1396
      %v1429 = vmax.f32 %v1365, %v1397
      %v1430 = vmax.f32 %v1366, %v1398
      %v1431 = vmax.f32 %v1367, %v1399
      %v1432 = vmax.f32 %v1368, %v1400
      %v1433 = vmax.f32 %v1369, %v1401
      %v1434 = vmax.f32 %v1370, %v1402
      %v1435 = vmax.f32 %v1371, %v1403
      %v1436 = vmax.f32 %v1372, %v1404
      %v1437 = vmax.f32 %v1373, %v1405
      %v1438 = vmax.f32 %v1374, %v1406
      %v1439 = vmax.f32 %v1375, %v1407
      %v1440 = vmax.f32 %v1376, %v1408
      %v1441 = vmax.f32 %v1377, %v1409
      %v1442 = vmax.f32 %v1378, %v1410
      %v1443 = vmax.f32 %v1379, %v1411
      %v1444 = vmax.f32 %v1380, %v1412
      %v1445 = vmax.f32 %v1381, %v1413
      %v1446 = vmax.f32 %v1382, %v1414
      %v1447 = vmax.f32 %v1383, %v1415
      %v1448 = vld [vmem:[%s807 + $0x2] sm:$0xff]
      %v1449 = vld [vmem:[%s807 + $0xa] sm:$0xff]
      %v1450 = vld [vmem:[%s807 + $0x1a] sm:$0xff]
      %v1451 = vld [vmem:[%s807 + $0x22] sm:$0xff]
      %v1452 = vld [vmem:[%s807 + $0x32] sm:$0xff]
      %v1453 = vld [vmem:[%s807 + $0x3a] sm:$0xff]
      %v1454 = vld [vmem:[%s807 + $0x4a] sm:$0xff]
      %v1455 = vld [vmem:[%s807 + $0x52] sm:$0xff]
      %v1456 = vld [vmem:[%s807 + $0x62] sm:$0xff]
      %v1457 = vld [vmem:[%s807 + $0x6a] sm:$0xff]
      %v1458 = vld [vmem:[%s807 + $0x7a] sm:$0xff]
      %v1459 = vld [vmem:[%s807 + $0x82] sm:$0xff]
      %v1460 = vld [vmem:[%s807 + $0x92] sm:$0xff]
      %v1461 = vld [vmem:[%s807 + $0x9a] sm:$0xff]
      %v1462 = vld [vmem:[%s807 + $0xaa] sm:$0xff]
      %v1463 = vld [vmem:[%s807 + $0xb2] sm:$0xff]
      %v1464 = vld [vmem:[%s807 + $0xc2] sm:$0xff]
      %v1465 = vld [vmem:[%s807 + $0xca] sm:$0xff]
      %v1466 = vld [vmem:[%s807 + $0xda] sm:$0xff]
      %v1467 = vld [vmem:[%s807 + $0xe2] sm:$0xff]
      %v1468 = vld [vmem:[%s807 + $0xf2] sm:$0xff]
      %v1469 = vld [vmem:[%s807 + $0xfa] sm:$0xff]
      %v1470 = vld [vmem:[%s807 + $0x10a] sm:$0xff]
      %v1471 = vld [vmem:[%s807 + $0x112] sm:$0xff]
      %v1472 = vld [vmem:[%s807 + $0x122] sm:$0xff]
      %v1473 = vld [vmem:[%s807 + $0x12a] sm:$0xff]
      %v1474 = vld [vmem:[%s807 + $0x13a] sm:$0xff]
      %v1475 = vld [vmem:[%s807 + $0x142] sm:$0xff]
      %v1476 = vld [vmem:[%s807 + $0x152] sm:$0xff]
      %v1477 = vld [vmem:[%s807 + $0x15a] sm:$0xff]
      %v1478 = vld [vmem:[%s807 + $0x16a] sm:$0xff]
      %v1479 = vld [vmem:[%s807 + $0x172] sm:$0xff]
      %v1480 = vmax.f32 %v1416, %v1448
      %v1481 = vmax.f32 %v1417, %v1449
      %v1482 = vmax.f32 %v1418, %v1450
      %v1483 = vmax.f32 %v1419, %v1451
      %v1484 = vmax.f32 %v1420, %v1452
      %v1485 = vmax.f32 %v1421, %v1453
      %v1486 = vmax.f32 %v1422, %v1454
      %v1487 = vmax.f32 %v1423, %v1455
      %v1488 = vmax.f32 %v1424, %v1456
      %v1489 = vmax.f32 %v1425, %v1457
      %v1490 = vmax.f32 %v1426, %v1458
      %v1491 = vmax.f32 %v1427, %v1459
      %v1492 = vmax.f32 %v1428, %v1460
      %v1493 = vmax.f32 %v1429, %v1461
      %v1494 = vmax.f32 %v1430, %v1462
      %v1495 = vmax.f32 %v1431, %v1463
      %v1496 = vmax.f32 %v1432, %v1464
      %v1497 = vmax.f32 %v1433, %v1465
      %v1498 = vmax.f32 %v1434, %v1466
      %v1499 = vmax.f32 %v1435, %v1467
      %v1500 = vmax.f32 %v1436, %v1468
      %v1501 = vmax.f32 %v1437, %v1469
      %v1502 = vmax.f32 %v1438, %v1470
      %v1503 = vmax.f32 %v1439, %v1471
      %v1504 = vmax.f32 %v1440, %v1472
      %v1505 = vmax.f32 %v1441, %v1473
      %v1506 = vmax.f32 %v1442, %v1474
      %v1507 = vmax.f32 %v1443, %v1475
      %v1508 = vmax.f32 %v1444, %v1476
      %v1509 = vmax.f32 %v1445, %v1477
      %v1510 = vmax.f32 %v1446, %v1478
      %v1511 = vmax.f32 %v1447, %v1479
      %1512 = vst.msk [vmem:[%s163 + $0x2] sm:$0xff] %vm148, %v1480
      %1513 = vst.msk [vmem:[%s163 + $0xa] sm:$0xff] %vm148, %v1481
      %1514 = vst.msk [vmem:[%s163 + $0x1a] sm:$0xff] %vm148, %v1482
      %1515 = vst.msk [vmem:[%s163 + $0x22] sm:$0xff] %vm148, %v1483
      %1516 = vst.msk [vmem:[%s163 + $0x32] sm:$0xff] %vm148, %v1484
      %1517 = vst.msk [vmem:[%s163 + $0x3a] sm:$0xff] %vm148, %v1485
      %1518 = vst.msk [vmem:[%s163 + $0x4a] sm:$0xff] %vm148, %v1486
      %1519 = vst.msk [vmem:[%s163 + $0x52] sm:$0xff] %vm148, %v1487
      %1520 = vst.msk [vmem:[%s163 + $0x62] sm:$0xff] %vm148, %v1488
      %1521 = vst.msk [vmem:[%s163 + $0x6a] sm:$0xff] %vm148, %v1489
      %1522 = vst.msk [vmem:[%s163 + $0x7a] sm:$0xff] %vm148, %v1490
      %1523 = vst.msk [vmem:[%s163 + $0x82] sm:$0xff] %vm148, %v1491
      %1524 = vst.msk [vmem:[%s163 + $0x92] sm:$0xff] %vm148, %v1492
      %1525 = vst.msk [vmem:[%s163 + $0x9a] sm:$0xff] %vm148, %v1493
      %1526 = vst.msk [vmem:[%s163 + $0xaa] sm:$0xff] %vm148, %v1494
      %1527 = vst.msk [vmem:[%s163 + $0xb2] sm:$0xff] %vm148, %v1495
      %1528 = vst.msk [vmem:[%s163 + $0xc2] sm:$0xff] %vm148, %v1496
      %1529 = vst.msk [vmem:[%s163 + $0xca] sm:$0xff] %vm148, %v1497
      %1530 = vst.msk [vmem:[%s163 + $0xda] sm:$0xff] %vm148, %v1498
      %1531 = vst.msk [vmem:[%s163 + $0xe2] sm:$0xff] %vm148, %v1499
      %1532 = vst.msk [vmem:[%s163 + $0xf2] sm:$0xff] %vm148, %v1500
      %1533 = vst.msk [vmem:[%s163 + $0xfa] sm:$0xff] %vm148, %v1501
      %1534 = vst.msk [vmem:[%s163 + $0x10a] sm:$0xff] %vm148, %v1502
      %1535 = vst.msk [vmem:[%s163 + $0x112] sm:$0xff] %vm148, %v1503
      %1536 = vst.msk [vmem:[%s163 + $0x122] sm:$0xff] %vm148, %v1504
      %1537 = vst.msk [vmem:[%s163 + $0x12a] sm:$0xff] %vm148, %v1505
      %1538 = vst.msk [vmem:[%s163 + $0x13a] sm:$0xff] %vm148, %v1506
      %1539 = vst.msk [vmem:[%s163 + $0x142] sm:$0xff] %vm148, %v1507
      %1540 = vst.msk [vmem:[%s163 + $0x152] sm:$0xff] %vm148, %v1508
      %1541 = vst.msk [vmem:[%s163 + $0x15a] sm:$0xff] %vm148, %v1509
      %1542 = vst.msk [vmem:[%s163 + $0x16a] sm:$0xff] %vm148, %v1510
      %1543 = vst.msk [vmem:[%s163 + $0x172] sm:$0xff] %vm148, %v1511
      %v1544 = vld [vmem:[%s163] sm:$0xff]
      %v1545 = vld [vmem:[%s163 + $0x8] sm:$0xff]
      %v1546 = vld [vmem:[%s163 + $0x18] sm:$0xff]
      %v1547 = vld [vmem:[%s163 + $0x20] sm:$0xff]
      %v1548 = vld [vmem:[%s163 + $0x30] sm:$0xff]
      %v1549 = vld [vmem:[%s163 + $0x38] sm:$0xff]
      %v1550 = vld [vmem:[%s163 + $0x48] sm:$0xff]
      %v1551 = vld [vmem:[%s163 + $0x50] sm:$0xff]
      %v1552 = vld [vmem:[%s163 + $0x60] sm:$0xff]
      %v1553 = vld [vmem:[%s163 + $0x68] sm:$0xff]
      %v1554 = vld [vmem:[%s163 + $0x78] sm:$0xff]
      %v1555 = vld [vmem:[%s163 + $0x80] sm:$0xff]
      %v1556 = vld [vmem:[%s163 + $0x90] sm:$0xff]
      %v1557 = vld [vmem:[%s163 + $0x98] sm:$0xff]
      %v1558 = vld [vmem:[%s163 + $0xa8] sm:$0xff]
      %v1559 = vld [vmem:[%s163 + $0xb0] sm:$0xff]
      %v1560 = vld [vmem:[%s163 + $0xc0] sm:$0xff]
      %v1561 = vld [vmem:[%s163 + $0xc8] sm:$0xff]
      %v1562 = vld [vmem:[%s163 + $0xd8] sm:$0xff]
      %v1563 = vld [vmem:[%s163 + $0xe0] sm:$0xff]
      %v1564 = vld [vmem:[%s163 + $0xf0] sm:$0xff]
      %v1565 = vld [vmem:[%s163 + $0xf8] sm:$0xff]
      %v1566 = vld [vmem:[%s163 + $0x108] sm:$0xff]
      %v1567 = vld [vmem:[%s163 + $0x110] sm:$0xff]
      %v1568 = vld [vmem:[%s163 + $0x120] sm:$0xff]
      %v1569 = vld [vmem:[%s163 + $0x128] sm:$0xff]
      %v1570 = vld [vmem:[%s163 + $0x138] sm:$0xff]
      %v1571 = vld [vmem:[%s163 + $0x140] sm:$0xff]
      %v1572 = vld [vmem:[%s163 + $0x150] sm:$0xff]
      %v1573 = vld [vmem:[%s163 + $0x158] sm:$0xff]
      %v1574 = vld [vmem:[%s163 + $0x168] sm:$0xff]
      %v1575 = vld [vmem:[%s163 + $0x170] sm:$0xff]
      %v1576 = vld [vmem:[%s163 + $0x1] sm:$0xff]
      %v1577 = vld [vmem:[%s163 + $0x9] sm:$0xff]
      %v1578 = vld [vmem:[%s163 + $0x19] sm:$0xff]
      %v1579 = vld [vmem:[%s163 + $0x21] sm:$0xff]
      %v1580 = vld [vmem:[%s163 + $0x31] sm:$0xff]
      %v1581 = vld [vmem:[%s163 + $0x39] sm:$0xff]
      %v1582 = vld [vmem:[%s163 + $0x49] sm:$0xff]
      %v1583 = vld [vmem:[%s163 + $0x51] sm:$0xff]
      %v1584 = vld [vmem:[%s163 + $0x61] sm:$0xff]
      %v1585 = vld [vmem:[%s163 + $0x69] sm:$0xff]
      %v1586 = vld [vmem:[%s163 + $0x79] sm:$0xff]
      %v1587 = vld [vmem:[%s163 + $0x81] sm:$0xff]
      %v1588 = vld [vmem:[%s163 + $0x91] sm:$0xff]
      %v1589 = vld [vmem:[%s163 + $0x99] sm:$0xff]
      %v1590 = vld [vmem:[%s163 + $0xa9] sm:$0xff]
      %v1591 = vld [vmem:[%s163 + $0xb1] sm:$0xff]
      %v1592 = vld [vmem:[%s163 + $0xc1] sm:$0xff]
      %v1593 = vld [vmem:[%s163 + $0xc9] sm:$0xff]
      %v1594 = vld [vmem:[%s163 + $0xd9] sm:$0xff]
      %v1595 = vld [vmem:[%s163 + $0xe1] sm:$0xff]
      %v1596 = vld [vmem:[%s163 + $0xf1] sm:$0xff]
      %v1597 = vld [vmem:[%s163 + $0xf9] sm:$0xff]
      %v1598 = vld [vmem:[%s163 + $0x109] sm:$0xff]
      %v1599 = vld [vmem:[%s163 + $0x111] sm:$0xff]
      %v1600 = vld [vmem:[%s163 + $0x121] sm:$0xff]
      %v1601 = vld [vmem:[%s163 + $0x129] sm:$0xff]
      %v1602 = vld [vmem:[%s163 + $0x139] sm:$0xff]
      %v1603 = vld [vmem:[%s163 + $0x141] sm:$0xff]
      %v1604 = vld [vmem:[%s163 + $0x151] sm:$0xff]
      %v1605 = vld [vmem:[%s163 + $0x159] sm:$0xff]
      %v1606 = vld [vmem:[%s163 + $0x169] sm:$0xff]
      %v1607 = vld [vmem:[%s163 + $0x171] sm:$0xff]
      %v1608 = vmax.f32 %v1544, %v1576
      %v1609 = vmax.f32 %v1545, %v1577
      %v1610 = vmax.f32 %v1546, %v1578
      %v1611 = vmax.f32 %v1547, %v1579
      %v1612 = vmax.f32 %v1548, %v1580
      %v1613 = vmax.f32 %v1549, %v1581
      %v1614 = vmax.f32 %v1550, %v1582
      %v1615 = vmax.f32 %v1551, %v1583
      %v1616 = vmax.f32 %v1552, %v1584
      %v1617 = vmax.f32 %v1553, %v1585
      %v1618 = vmax.f32 %v1554, %v1586
      %v1619 = vmax.f32 %v1555, %v1587
      %v1620 = vmax.f32 %v1556, %v1588
      %v1621 = vmax.f32 %v1557, %v1589
      %v1622 = vmax.f32 %v1558, %v1590
      %v1623 = vmax.f32 %v1559, %v1591
      %v1624 = vmax.f32 %v1560, %v1592
      %v1625 = vmax.f32 %v1561, %v1593
      %v1626 = vmax.f32 %v1562, %v1594
      %v1627 = vmax.f32 %v1563, %v1595
      %v1628 = vmax.f32 %v1564, %v1596
      %v1629 = vmax.f32 %v1565, %v1597
      %v1630 = vmax.f32 %v1566, %v1598
      %v1631 = vmax.f32 %v1567, %v1599
      %v1632 = vmax.f32 %v1568, %v1600
      %v1633 = vmax.f32 %v1569, %v1601
      %v1634 = vmax.f32 %v1570, %v1602
      %v1635 = vmax.f32 %v1571, %v1603
      %v1636 = vmax.f32 %v1572, %v1604
      %v1637 = vmax.f32 %v1573, %v1605
      %v1638 = vmax.f32 %v1574, %v1606
      %v1639 = vmax.f32 %v1575, %v1607
      %v1640 = vld [vmem:[%s163 + $0x2] sm:$0xff]
      %v1641 = vld [vmem:[%s163 + $0xa] sm:$0xff]
      %v1642 = vld [vmem:[%s163 + $0x1a] sm:$0xff]
      %v1643 = vld [vmem:[%s163 + $0x22] sm:$0xff]
      %v1644 = vld [vmem:[%s163 + $0x32] sm:$0xff]
      %v1645 = vld [vmem:[%s163 + $0x3a] sm:$0xff]
      %v1646 = vld [vmem:[%s163 + $0x4a] sm:$0xff]
      %v1647 = vld [vmem:[%s163 + $0x52] sm:$0xff]
      %v1648 = vld [vmem:[%s163 + $0x62] sm:$0xff]
      %v1649 = vld [vmem:[%s163 + $0x6a] sm:$0xff]
      %v1650 = vld [vmem:[%s163 + $0x7a] sm:$0xff]
      %v1651 = vld [vmem:[%s163 + $0x82] sm:$0xff]
      %v1652 = vld [vmem:[%s163 + $0x92] sm:$0xff]
      %v1653 = vld [vmem:[%s163 + $0x9a] sm:$0xff]
      %v1654 = vld [vmem:[%s163 + $0xaa] sm:$0xff]
      %v1655 = vld [vmem:[%s163 + $0xb2] sm:$0xff]
      %v1656 = vld [vmem:[%s163 + $0xc2] sm:$0xff]
      %v1657 = vld [vmem:[%s163 + $0xca] sm:$0xff]
      %v1658 = vld [vmem:[%s163 + $0xda] sm:$0xff]
      %v1659 = vld [vmem:[%s163 + $0xe2] sm:$0xff]
      %v1660 = vld [vmem:[%s163 + $0xf2] sm:$0xff]
      %v1661 = vld [vmem:[%s163 + $0xfa] sm:$0xff]
      %v1662 = vld [vmem:[%s163 + $0x10a] sm:$0xff]
      %v1663 = vld [vmem:[%s163 + $0x112] sm:$0xff]
      %v1664 = vld [vmem:[%s163 + $0x122] sm:$0xff]
      %v1665 = vld [vmem:[%s163 + $0x12a] sm:$0xff]
      %v1666 = vld [vmem:[%s163 + $0x13a] sm:$0xff]
      %v1667 = vld [vmem:[%s163 + $0x142] sm:$0xff]
      %v1668 = vld [vmem:[%s163 + $0x152] sm:$0xff]
      %v1669 = vld [vmem:[%s163 + $0x15a] sm:$0xff]
      %v1670 = vld [vmem:[%s163 + $0x16a] sm:$0xff]
      %v1671 = vld [vmem:[%s163 + $0x172] sm:$0xff]
      %v1672 = vmax.f32 %v1608, %v1640
      %v1673 = vmax.f32 %v1609, %v1641
      %v1674 = vmax.f32 %v1610, %v1642
      %v1675 = vmax.f32 %v1611, %v1643
      %v1676 = vmax.f32 %v1612, %v1644
      %v1677 = vmax.f32 %v1613, %v1645
      %v1678 = vmax.f32 %v1614, %v1646
      %v1679 = vmax.f32 %v1615, %v1647
      %v1680 = vmax.f32 %v1616, %v1648
      %v1681 = vmax.f32 %v1617, %v1649
      %v1682 = vmax.f32 %v1618, %v1650
      %v1683 = vmax.f32 %v1619, %v1651
      %v1684 = vmax.f32 %v1620, %v1652
      %v1685 = vmax.f32 %v1621, %v1653
      %v1686 = vmax.f32 %v1622, %v1654
      %v1687 = vmax.f32 %v1623, %v1655
      %v1688 = vmax.f32 %v1624, %v1656
      %v1689 = vmax.f32 %v1625, %v1657
      %v1690 = vmax.f32 %v1626, %v1658
      %v1691 = vmax.f32 %v1627, %v1659
      %v1692 = vmax.f32 %v1628, %v1660
      %v1693 = vmax.f32 %v1629, %v1661
      %v1694 = vmax.f32 %v1630, %v1662
      %v1695 = vmax.f32 %v1631, %v1663
      %v1696 = vmax.f32 %v1632, %v1664
      %v1697 = vmax.f32 %v1633, %v1665
      %v1698 = vmax.f32 %v1634, %v1666
      %v1699 = vmax.f32 %v1635, %v1667
      %v1700 = vmax.f32 %v1636, %v1668
      %v1701 = vmax.f32 %v1637, %v1669
      %v1702 = vmax.f32 %v1638, %v1670
      %v1703 = vmax.f32 %v1639, %v1671
      %v1704 = vld [vmem:[%s163 + $0x3] sm:$0xff]
      %v1705 = vld [vmem:[%s163 + $0xb] sm:$0xff]
      %v1706 = vld [vmem:[%s163 + $0x1b] sm:$0xff]
      %v1707 = vld [vmem:[%s163 + $0x23] sm:$0xff]
      %v1708 = vld [vmem:[%s163 + $0x33] sm:$0xff]
      %v1709 = vld [vmem:[%s163 + $0x3b] sm:$0xff]
      %v1710 = vld [vmem:[%s163 + $0x4b] sm:$0xff]
      %v1711 = vld [vmem:[%s163 + $0x53] sm:$0xff]
      %v1712 = vld [vmem:[%s163 + $0x63] sm:$0xff]
      %v1713 = vld [vmem:[%s163 + $0x6b] sm:$0xff]
      %v1714 = vld [vmem:[%s163 + $0x7b] sm:$0xff]
      %v1715 = vld [vmem:[%s163 + $0x83] sm:$0xff]
      %v1716 = vld [vmem:[%s163 + $0x93] sm:$0xff]
      %v1717 = vld [vmem:[%s163 + $0x9b] sm:$0xff]
      %v1718 = vld [vmem:[%s163 + $0xab] sm:$0xff]
      %v1719 = vld [vmem:[%s163 + $0xb3] sm:$0xff]
      %v1720 = vld [vmem:[%s163 + $0xc3] sm:$0xff]
      %v1721 = vld [vmem:[%s163 + $0xcb] sm:$0xff]
      %v1722 = vld [vmem:[%s163 + $0xdb] sm:$0xff]
      %v1723 = vld [vmem:[%s163 + $0xe3] sm:$0xff]
      %v1724 = vld [vmem:[%s163 + $0xf3] sm:$0xff]
      %v1725 = vld [vmem:[%s163 + $0xfb] sm:$0xff]
      %v1726 = vld [vmem:[%s163 + $0x10b] sm:$0xff]
      %v1727 = vld [vmem:[%s163 + $0x113] sm:$0xff]
      %v1728 = vld [vmem:[%s163 + $0x123] sm:$0xff]
      %v1729 = vld [vmem:[%s163 + $0x12b] sm:$0xff]
      %v1730 = vld [vmem:[%s163 + $0x13b] sm:$0xff]
      %v1731 = vld [vmem:[%s163 + $0x143] sm:$0xff]
      %v1732 = vld [vmem:[%s163 + $0x153] sm:$0xff]
      %v1733 = vld [vmem:[%s163 + $0x15b] sm:$0xff]
      %v1734 = vld [vmem:[%s163 + $0x16b] sm:$0xff]
      %v1735 = vld [vmem:[%s163 + $0x173] sm:$0xff]
      %v1736 = vmax.f32 %v1672, %v1704
      %v1737 = vmax.f32 %v1673, %v1705
      %v1738 = vmax.f32 %v1674, %v1706
      %v1739 = vmax.f32 %v1675, %v1707
      %v1740 = vmax.f32 %v1676, %v1708
      %v1741 = vmax.f32 %v1677, %v1709
      %v1742 = vmax.f32 %v1678, %v1710
      %v1743 = vmax.f32 %v1679, %v1711
      %v1744 = vmax.f32 %v1680, %v1712
      %v1745 = vmax.f32 %v1681, %v1713
      %v1746 = vmax.f32 %v1682, %v1714
      %v1747 = vmax.f32 %v1683, %v1715
      %v1748 = vmax.f32 %v1684, %v1716
      %v1749 = vmax.f32 %v1685, %v1717
      %v1750 = vmax.f32 %v1686, %v1718
      %v1751 = vmax.f32 %v1687, %v1719
      %v1752 = vmax.f32 %v1688, %v1720
      %v1753 = vmax.f32 %v1689, %v1721
      %v1754 = vmax.f32 %v1690, %v1722
      %v1755 = vmax.f32 %v1691, %v1723
      %v1756 = vmax.f32 %v1692, %v1724
      %v1757 = vmax.f32 %v1693, %v1725
      %v1758 = vmax.f32 %v1694, %v1726
      %v1759 = vmax.f32 %v1695, %v1727
      %v1760 = vmax.f32 %v1696, %v1728
      %v1761 = vmax.f32 %v1697, %v1729
      %v1762 = vmax.f32 %v1698, %v1730
      %v1763 = vmax.f32 %v1699, %v1731
      %v1764 = vmax.f32 %v1700, %v1732
      %v1765 = vmax.f32 %v1701, %v1733
      %v1766 = vmax.f32 %v1702, %v1734
      %v1767 = vmax.f32 %v1703, %v1735
      %v1768 = vld [vmem:[%s163 + $0x4] sm:$0xff]
      %v1769 = vld [vmem:[%s163 + $0xc] sm:$0xff]
      %v1770 = vld [vmem:[%s163 + $0x1c] sm:$0xff]
      %v1771 = vld [vmem:[%s163 + $0x24] sm:$0xff]
      %v1772 = vld [vmem:[%s163 + $0x34] sm:$0xff]
      %v1773 = vld [vmem:[%s163 + $0x3c] sm:$0xff]
      %v1774 = vld [vmem:[%s163 + $0x4c] sm:$0xff]
      %v1775 = vld [vmem:[%s163 + $0x54] sm:$0xff]
      %v1776 = vld [vmem:[%s163 + $0x64] sm:$0xff]
      %v1777 = vld [vmem:[%s163 + $0x6c] sm:$0xff]
      %v1778 = vld [vmem:[%s163 + $0x7c] sm:$0xff]
      %v1779 = vld [vmem:[%s163 + $0x84] sm:$0xff]
      %v1780 = vld [vmem:[%s163 + $0x94] sm:$0xff]
      %v1781 = vld [vmem:[%s163 + $0x9c] sm:$0xff]
      %v1782 = vld [vmem:[%s163 + $0xac] sm:$0xff]
      %v1783 = vld [vmem:[%s163 + $0xb4] sm:$0xff]
      %v1784 = vld [vmem:[%s163 + $0xc4] sm:$0xff]
      %v1785 = vld [vmem:[%s163 + $0xcc] sm:$0xff]
      %v1786 = vld [vmem:[%s163 + $0xdc] sm:$0xff]
      %v1787 = vld [vmem:[%s163 + $0xe4] sm:$0xff]
      %v1788 = vld [vmem:[%s163 + $0xf4] sm:$0xff]
      %v1789 = vld [vmem:[%s163 + $0xfc] sm:$0xff]
      %v1790 = vld [vmem:[%s163 + $0x10c] sm:$0xff]
      %v1791 = vld [vmem:[%s163 + $0x114] sm:$0xff]
      %v1792 = vld [vmem:[%s163 + $0x124] sm:$0xff]
      %v1793 = vld [vmem:[%s163 + $0x12c] sm:$0xff]
      %v1794 = vld [vmem:[%s163 + $0x13c] sm:$0xff]
      %v1795 = vld [vmem:[%s163 + $0x144] sm:$0xff]
      %v1796 = vld [vmem:[%s163 + $0x154] sm:$0xff]
      %v1797 = vld [vmem:[%s163 + $0x15c] sm:$0xff]
      %v1798 = vld [vmem:[%s163 + $0x16c] sm:$0xff]
      %v1799 = vld [vmem:[%s163 + $0x174] sm:$0xff]
      %v1800 = vmax.f32 %v1736, %v1768
      %v1801 = vmax.f32 %v1737, %v1769
      %v1802 = vmax.f32 %v1738, %v1770
      %v1803 = vmax.f32 %v1739, %v1771
      %v1804 = vmax.f32 %v1740, %v1772
      %v1805 = vmax.f32 %v1741, %v1773
      %v1806 = vmax.f32 %v1742, %v1774
      %v1807 = vmax.f32 %v1743, %v1775
      %v1808 = vmax.f32 %v1744, %v1776
      %v1809 = vmax.f32 %v1745, %v1777
      %v1810 = vmax.f32 %v1746, %v1778
      %v1811 = vmax.f32 %v1747, %v1779
      %v1812 = vmax.f32 %v1748, %v1780
      %v1813 = vmax.f32 %v1749, %v1781
      %v1814 = vmax.f32 %v1750, %v1782
      %v1815 = vmax.f32 %v1751, %v1783
      %v1816 = vmax.f32 %v1752, %v1784
      %v1817 = vmax.f32 %v1753, %v1785
      %v1818 = vmax.f32 %v1754, %v1786
      %v1819 = vmax.f32 %v1755, %v1787
      %v1820 = vmax.f32 %v1756, %v1788
      %v1821 = vmax.f32 %v1757, %v1789
      %v1822 = vmax.f32 %v1758, %v1790
      %v1823 = vmax.f32 %v1759, %v1791
      %v1824 = vmax.f32 %v1760, %v1792
      %v1825 = vmax.f32 %v1761, %v1793
      %v1826 = vmax.f32 %v1762, %v1794
      %v1827 = vmax.f32 %v1763, %v1795
      %v1828 = vmax.f32 %v1764, %v1796
      %v1829 = vmax.f32 %v1765, %v1797
      %v1830 = vmax.f32 %v1766, %v1798
      %v1831 = vmax.f32 %v1767, %v1799
      %1832 = vst.msk [vmem:[%s163 + $0x2] sm:$0xff] %vm148, %v1800
      %1833 = vst.msk [vmem:[%s163 + $0xa] sm:$0xff] %vm148, %v1801
      %1834 = vst.msk [vmem:[%s163 + $0x1a] sm:$0xff] %vm148, %v1802
      %1835 = vst.msk [vmem:[%s163 + $0x22] sm:$0xff] %vm148, %v1803
      %1836 = vst.msk [vmem:[%s163 + $0x32] sm:$0xff] %vm148, %v1804
      %1837 = vst.msk [vmem:[%s163 + $0x3a] sm:$0xff] %vm148, %v1805
      %1838 = vst.msk [vmem:[%s163 + $0x4a] sm:$0xff] %vm148, %v1806
      %1839 = vst.msk [vmem:[%s163 + $0x52] sm:$0xff] %vm148, %v1807
      %1840 = vst.msk [vmem:[%s163 + $0x62] sm:$0xff] %vm148, %v1808
      %1841 = vst.msk [vmem:[%s163 + $0x6a] sm:$0xff] %vm148, %v1809
      %1842 = vst.msk [vmem:[%s163 + $0x7a] sm:$0xff] %vm148, %v1810
      %1843 = vst.msk [vmem:[%s163 + $0x82] sm:$0xff] %vm148, %v1811
      %1844 = vst.msk [vmem:[%s163 + $0x92] sm:$0xff] %vm148, %v1812
      %1845 = vst.msk [vmem:[%s163 + $0x9a] sm:$0xff] %vm148, %v1813
      %1846 = vst.msk [vmem:[%s163 + $0xaa] sm:$0xff] %vm148, %v1814
      %1847 = vst.msk [vmem:[%s163 + $0xb2] sm:$0xff] %vm148, %v1815
      %1848 = vst.msk [vmem:[%s163 + $0xc2] sm:$0xff] %vm148, %v1816
      %1849 = vst.msk [vmem:[%s163 + $0xca] sm:$0xff] %vm148, %v1817
      %1850 = vst.msk [vmem:[%s163 + $0xda] sm:$0xff] %vm148, %v1818
      %1851 = vst.msk [vmem:[%s163 + $0xe2] sm:$0xff] %vm148, %v1819
      %1852 = vst.msk [vmem:[%s163 + $0xf2] sm:$0xff] %vm148, %v1820
      %1853 = vst.msk [vmem:[%s163 + $0xfa] sm:$0xff] %vm148, %v1821
      %1854 = vst.msk [vmem:[%s163 + $0x10a] sm:$0xff] %vm148, %v1822
      %1855 = vst.msk [vmem:[%s163 + $0x112] sm:$0xff] %vm148, %v1823
      %1856 = vst.msk [vmem:[%s163 + $0x122] sm:$0xff] %vm148, %v1824
      %1857 = vst.msk [vmem:[%s163 + $0x12a] sm:$0xff] %vm148, %v1825
      %1858 = vst.msk [vmem:[%s163 + $0x13a] sm:$0xff] %vm148, %v1826
      %1859 = vst.msk [vmem:[%s163 + $0x142] sm:$0xff] %vm148, %v1827
      %1860 = vst.msk [vmem:[%s163 + $0x152] sm:$0xff] %vm148, %v1828
      %1861 = vst.msk [vmem:[%s163 + $0x15a] sm:$0xff] %vm148, %v1829
      %1862 = vst.msk [vmem:[%s163 + $0x16a] sm:$0xff] %vm148, %v1830
      %1863 = vst.msk [vmem:[%s163 + $0x172] sm:$0xff] %vm148, %v1831
      %v1864 = vld [vmem:[#allocation2 + $0x2] sm:$0xff]
      %v1865 = vld [vmem:[#allocation2 + $0xa] sm:$0xff]
      %v1866 = vld [vmem:[#allocation2 + $0x1a] sm:$0xff]
      %v1867 = vld [vmem:[#allocation2 + $0x22] sm:$0xff]
      %v1868 = vld [vmem:[#allocation2 + $0x32] sm:$0xff]
      %v1869 = vld [vmem:[#allocation2 + $0x3a] sm:$0xff]
      %v1870 = vld [vmem:[#allocation2 + $0x4a] sm:$0xff]
      %v1871 = vld [vmem:[#allocation2 + $0x52] sm:$0xff]
      %v1872 = vld [vmem:[#allocation2 + $0x62] sm:$0xff]
      %v1873 = vld [vmem:[#allocation2 + $0x6a] sm:$0xff]
      %v1874 = vld [vmem:[#allocation2 + $0x7a] sm:$0xff]
      %v1875 = vld [vmem:[#allocation2 + $0x82] sm:$0xff]
      %v1876 = vld [vmem:[#allocation2 + $0x92] sm:$0xff]
      %v1877 = vld [vmem:[#allocation2 + $0x9a] sm:$0xff]
      %v1878 = vld [vmem:[#allocation2 + $0xaa] sm:$0xff]
      %v1879 = vld [vmem:[#allocation2 + $0xb2] sm:$0xff]
      %v1880 = vld [vmem:[#allocation2 + $0xc2] sm:$0xff]
      %v1881 = vld [vmem:[#allocation2 + $0xca] sm:$0xff]
      %v1882 = vld [vmem:[#allocation2 + $0xda] sm:$0xff]
      %v1883 = vld [vmem:[#allocation2 + $0xe2] sm:$0xff]
      %v1884 = vld [vmem:[#allocation2 + $0xf2] sm:$0xff]
      %v1885 = vld [vmem:[#allocation2 + $0xfa] sm:$0xff]
      %v1886 = vld [vmem:[#allocation2 + $0x10a] sm:$0xff]
      %v1887 = vld [vmem:[#allocation2 + $0x112] sm:$0xff]
      %v1888 = vld [vmem:[#allocation2 + $0x122] sm:$0xff]
      %v1889 = vld [vmem:[#allocation2 + $0x12a] sm:$0xff]
      %v1890 = vld [vmem:[#allocation2 + $0x13a] sm:$0xff]
      %v1891 = vld [vmem:[#allocation2 + $0x142] sm:$0xff]
      %v1892 = vld [vmem:[#allocation2 + $0x152] sm:$0xff]
      %v1893 = vld [vmem:[#allocation2 + $0x15a] sm:$0xff]
      %v1894 = vld [vmem:[#allocation2 + $0x16a] sm:$0xff]
      %v1895 = vld [vmem:[#allocation2 + $0x172] sm:$0xff]
      %v1896 = vld [vmem:[%s613 + $0x2] sm:$0xff]
      %v1897 = vld [vmem:[%s613 + $0xa] sm:$0xff]
      %v1898 = vld [vmem:[%s613 + $0x1a] sm:$0xff]
      %v1899 = vld [vmem:[%s613 + $0x22] sm:$0xff]
      %v1900 = vld [vmem:[%s613 + $0x32] sm:$0xff]
      %v1901 = vld [vmem:[%s613 + $0x3a] sm:$0xff]
      %v1902 = vld [vmem:[%s613 + $0x4a] sm:$0xff]
      %v1903 = vld [vmem:[%s613 + $0x52] sm:$0xff]
      %v1904 = vld [vmem:[%s613 + $0x62] sm:$0xff]
      %v1905 = vld [vmem:[%s613 + $0x6a] sm:$0xff]
      %v1906 = vld [vmem:[%s613 + $0x7a] sm:$0xff]
      %v1907 = vld [vmem:[%s613 + $0x82] sm:$0xff]
      %v1908 = vld [vmem:[%s613 + $0x92] sm:$0xff]
      %v1909 = vld [vmem:[%s613 + $0x9a] sm:$0xff]
      %v1910 = vld [vmem:[%s613 + $0xaa] sm:$0xff]
      %v1911 = vld [vmem:[%s613 + $0xb2] sm:$0xff]
      %v1912 = vld [vmem:[%s613 + $0xc2] sm:$0xff]
      %v1913 = vld [vmem:[%s613 + $0xca] sm:$0xff]
      %v1914 = vld [vmem:[%s613 + $0xda] sm:$0xff]
      %v1915 = vld [vmem:[%s613 + $0xe2] sm:$0xff]
      %v1916 = vld [vmem:[%s613 + $0xf2] sm:$0xff]
      %v1917 = vld [vmem:[%s613 + $0xfa] sm:$0xff]
      %v1918 = vld [vmem:[%s613 + $0x10a] sm:$0xff]
      %v1919 = vld [vmem:[%s613 + $0x112] sm:$0xff]
      %v1920 = vld [vmem:[%s613 + $0x122] sm:$0xff]
      %v1921 = vld [vmem:[%s613 + $0x12a] sm:$0xff]
      %v1922 = vld [vmem:[%s613 + $0x13a] sm:$0xff]
      %v1923 = vld [vmem:[%s613 + $0x142] sm:$0xff]
      %v1924 = vld [vmem:[%s613 + $0x152] sm:$0xff]
      %v1925 = vld [vmem:[%s613 + $0x15a] sm:$0xff]
      %v1926 = vld [vmem:[%s613 + $0x16a] sm:$0xff]
      %v1927 = vld [vmem:[%s613 + $0x172] sm:$0xff]
      %v1928 = vmax.f32 %v1864, %v1896
      %v1929 = vmax.f32 %v1865, %v1897
      %v1930 = vmax.f32 %v1866, %v1898
      %v1931 = vmax.f32 %v1867, %v1899
      %v1932 = vmax.f32 %v1868, %v1900
      %v1933 = vmax.f32 %v1869, %v1901
      %v1934 = vmax.f32 %v1870, %v1902
      %v1935 = vmax.f32 %v1871, %v1903
      %v1936 = vmax.f32 %v1872, %v1904
      %v1937 = vmax.f32 %v1873, %v1905
      %v1938 = vmax.f32 %v1874, %v1906
      %v1939 = vmax.f32 %v1875, %v1907
      %v1940 = vmax.f32 %v1876, %v1908
      %v1941 = vmax.f32 %v1877, %v1909
      %v1942 = vmax.f32 %v1878, %v1910
      %v1943 = vmax.f32 %v1879, %v1911
      %v1944 = vmax.f32 %v1880, %v1912
      %v1945 = vmax.f32 %v1881, %v1913
      %v1946 = vmax.f32 %v1882, %v1914
      %v1947 = vmax.f32 %v1883, %v1915
      %v1948 = vmax.f32 %v1884, %v1916
      %v1949 = vmax.f32 %v1885, %v1917
      %v1950 = vmax.f32 %v1886, %v1918
      %v1951 = vmax.f32 %v1887, %v1919
      %v1952 = vmax.f32 %v1888, %v1920
      %v1953 = vmax.f32 %v1889, %v1921
      %v1954 = vmax.f32 %v1890, %v1922
      %v1955 = vmax.f32 %v1891, %v1923
      %v1956 = vmax.f32 %v1892, %v1924
      %v1957 = vmax.f32 %v1893, %v1925
      %v1958 = vmax.f32 %v1894, %v1926
      %v1959 = vmax.f32 %v1895, %v1927
      %v1960 = vld [vmem:[%s163 + $0x2] sm:$0xff]
      %v1961 = vld [vmem:[%s163 + $0xa] sm:$0xff]
      %v1962 = vld [vmem:[%s163 + $0x1a] sm:$0xff]
      %v1963 = vld [vmem:[%s163 + $0x22] sm:$0xff]
      %v1964 = vld [vmem:[%s163 + $0x32] sm:$0xff]
      %v1965 = vld [vmem:[%s163 + $0x3a] sm:$0xff]
      %v1966 = vld [vmem:[%s163 + $0x4a] sm:$0xff]
      %v1967 = vld [vmem:[%s163 + $0x52] sm:$0xff]
      %v1968 = vld [vmem:[%s163 + $0x62] sm:$0xff]
      %v1969 = vld [vmem:[%s163 + $0x6a] sm:$0xff]
      %v1970 = vld [vmem:[%s163 + $0x7a] sm:$0xff]
      %v1971 = vld [vmem:[%s163 + $0x82] sm:$0xff]
      %v1972 = vld [vmem:[%s163 + $0x92] sm:$0xff]
      %v1973 = vld [vmem:[%s163 + $0x9a] sm:$0xff]
      %v1974 = vld [vmem:[%s163 + $0xaa] sm:$0xff]
      %v1975 = vld [vmem:[%s163 + $0xb2] sm:$0xff]
      %v1976 = vld [vmem:[%s163 + $0xc2] sm:$0xff]
      %v1977 = vld [vmem:[%s163 + $0xca] sm:$0xff]
      %v1978 = vld [vmem:[%s163 + $0xda] sm:$0xff]
      %v1979 = vld [vmem:[%s163 + $0xe2] sm:$0xff]
      %v1980 = vld [vmem:[%s163 + $0xf2] sm:$0xff]
      %v1981 = vld [vmem:[%s163 + $0xfa] sm:$0xff]
      %v1982 = vld [vmem:[%s163 + $0x10a] sm:$0xff]
      %v1983 = vld [vmem:[%s163 + $0x112] sm:$0xff]
      %v1984 = vld [vmem:[%s163 + $0x122] sm:$0xff]
      %v1985 = vld [vmem:[%s163 + $0x12a] sm:$0xff]
      %v1986 = vld [vmem:[%s163 + $0x13a] sm:$0xff]
      %v1987 = vld [vmem:[%s163 + $0x142] sm:$0xff]
      %v1988 = vld [vmem:[%s163 + $0x152] sm:$0xff]
      %v1989 = vld [vmem:[%s163 + $0x15a] sm:$0xff]
      %v1990 = vld [vmem:[%s163 + $0x16a] sm:$0xff]
      %v1991 = vld [vmem:[%s163 + $0x172] sm:$0xff]
      %v1992 = vmax.f32 %v1928, %v1960
      %v1993 = vmax.f32 %v1929, %v1961
      %v1994 = vmax.f32 %v1930, %v1962
      %v1995 = vmax.f32 %v1931, %v1963
      %v1996 = vmax.f32 %v1932, %v1964
      %v1997 = vmax.f32 %v1933, %v1965
      %v1998 = vmax.f32 %v1934, %v1966
      %v1999 = vmax.f32 %v1935, %v1967
      %v2000 = vmax.f32 %v1936, %v1968
      %v2001 = vmax.f32 %v1937, %v1969
      %v2002 = vmax.f32 %v1938, %v1970
      %v2003 = vmax.f32 %v1939, %v1971
      %v2004 = vmax.f32 %v1940, %v1972
      %v2005 = vmax.f32 %v1941, %v1973
      %v2006 = vmax.f32 %v1942, %v1974
      %v2007 = vmax.f32 %v1943, %v1975
      %v2008 = vmax.f32 %v1944, %v1976
      %v2009 = vmax.f32 %v1945, %v1977
      %v2010 = vmax.f32 %v1946, %v1978
      %v2011 = vmax.f32 %v1947, %v1979
      %v2012 = vmax.f32 %v1948, %v1980
      %v2013 = vmax.f32 %v1949, %v1981
      %v2014 = vmax.f32 %v1950, %v1982
      %v2015 = vmax.f32 %v1951, %v1983
      %v2016 = vmax.f32 %v1952, %v1984
      %v2017 = vmax.f32 %v1953, %v1985
      %v2018 = vmax.f32 %v1954, %v1986
      %v2019 = vmax.f32 %v1955, %v1987
      %v2020 = vmax.f32 %v1956, %v1988
      %v2021 = vmax.f32 %v1957, %v1989
      %v2022 = vmax.f32 %v1958, %v1990
      %v2023 = vmax.f32 %v1959, %v1991
      %v2024 = vld [vmem:[%s742 + $0x2] sm:$0xff]
      %v2025 = vld [vmem:[%s742 + $0xa] sm:$0xff]
      %v2026 = vld [vmem:[%s742 + $0x1a] sm:$0xff]
      %v2027 = vld [vmem:[%s742 + $0x22] sm:$0xff]
      %v2028 = vld [vmem:[%s742 + $0x32] sm:$0xff]
      %v2029 = vld [vmem:[%s742 + $0x3a] sm:$0xff]
      %v2030 = vld [vmem:[%s742 + $0x4a] sm:$0xff]
      %v2031 = vld [vmem:[%s742 + $0x52] sm:$0xff]
      %v2032 = vld [vmem:[%s742 + $0x62] sm:$0xff]
      %v2033 = vld [vmem:[%s742 + $0x6a] sm:$0xff]
      %v2034 = vld [vmem:[%s742 + $0x7a] sm:$0xff]
      %v2035 = vld [vmem:[%s742 + $0x82] sm:$0xff]
      %v2036 = vld [vmem:[%s742 + $0x92] sm:$0xff]
      %v2037 = vld [vmem:[%s742 + $0x9a] sm:$0xff]
      %v2038 = vld [vmem:[%s742 + $0xaa] sm:$0xff]
      %v2039 = vld [vmem:[%s742 + $0xb2] sm:$0xff]
      %v2040 = vld [vmem:[%s742 + $0xc2] sm:$0xff]
      %v2041 = vld [vmem:[%s742 + $0xca] sm:$0xff]
      %v2042 = vld [vmem:[%s742 + $0xda] sm:$0xff]
      %v2043 = vld [vmem:[%s742 + $0xe2] sm:$0xff]
      %v2044 = vld [vmem:[%s742 + $0xf2] sm:$0xff]
      %v2045 = vld [vmem:[%s742 + $0xfa] sm:$0xff]
      %v2046 = vld [vmem:[%s742 + $0x10a] sm:$0xff]
      %v2047 = vld [vmem:[%s742 + $0x112] sm:$0xff]
      %v2048 = vld [vmem:[%s742 + $0x122] sm:$0xff]
      %v2049 = vld [vmem:[%s742 + $0x12a] sm:$0xff]
      %v2050 = vld [vmem:[%s742 + $0x13a] sm:$0xff]
      %v2051 = vld [vmem:[%s742 + $0x142] sm:$0xff]
      %v2052 = vld [vmem:[%s742 + $0x152] sm:$0xff]
      %v2053 = vld [vmem:[%s742 + $0x15a] sm:$0xff]
      %v2054 = vld [vmem:[%s742 + $0x16a] sm:$0xff]
      %v2055 = vld [vmem:[%s742 + $0x172] sm:$0xff]
      %v2056 = vmax.f32 %v1992, %v2024
      %v2057 = vmax.f32 %v1993, %v2025
      %v2058 = vmax.f32 %v1994, %v2026
      %v2059 = vmax.f32 %v1995, %v2027
      %v2060 = vmax.f32 %v1996, %v2028
      %v2061 = vmax.f32 %v1997, %v2029
      %v2062 = vmax.f32 %v1998, %v2030
      %v2063 = vmax.f32 %v1999, %v2031
      %v2064 = vmax.f32 %v2000, %v2032
      %v2065 = vmax.f32 %v2001, %v2033
      %v2066 = vmax.f32 %v2002, %v2034
      %v2067 = vmax.f32 %v2003, %v2035
      %v2068 = vmax.f32 %v2004, %v2036
      %v2069 = vmax.f32 %v2005, %v2037
      %v2070 = vmax.f32 %v2006, %v2038
      %v2071 = vmax.f32 %v2007, %v2039
      %v2072 = vmax.f32 %v2008, %v2040
      %v2073 = vmax.f32 %v2009, %v2041
      %v2074 = vmax.f32 %v2010, %v2042
      %v2075 = vmax.f32 %v2011, %v2043
      %v2076 = vmax.f32 %v2012, %v2044
      %v2077 = vmax.f32 %v2013, %v2045
      %v2078 = vmax.f32 %v2014, %v2046
      %v2079 = vmax.f32 %v2015, %v2047
      %v2080 = vmax.f32 %v2016, %v2048
      %v2081 = vmax.f32 %v2017, %v2049
      %v2082 = vmax.f32 %v2018, %v2050
      %v2083 = vmax.f32 %v2019, %v2051
      %v2084 = vmax.f32 %v2020, %v2052
      %v2085 = vmax.f32 %v2021, %v2053
      %v2086 = vmax.f32 %v2022, %v2054
      %v2087 = vmax.f32 %v2023, %v2055
      %v2088 = vld [vmem:[%s807 + $0x2] sm:$0xff]
      %v2089 = vld [vmem:[%s807 + $0xa] sm:$0xff]
      %v2090 = vld [vmem:[%s807 + $0x1a] sm:$0xff]
      %v2091 = vld [vmem:[%s807 + $0x22] sm:$0xff]
      %v2092 = vld [vmem:[%s807 + $0x32] sm:$0xff]
      %v2093 = vld [vmem:[%s807 + $0x3a] sm:$0xff]
      %v2094 = vld [vmem:[%s807 + $0x4a] sm:$0xff]
      %v2095 = vld [vmem:[%s807 + $0x52] sm:$0xff]
      %v2096 = vld [vmem:[%s807 + $0x62] sm:$0xff]
      %v2097 = vld [vmem:[%s807 + $0x6a] sm:$0xff]
      %v2098 = vld [vmem:[%s807 + $0x7a] sm:$0xff]
      %v2099 = vld [vmem:[%s807 + $0x82] sm:$0xff]
      %v2100 = vld [vmem:[%s807 + $0x92] sm:$0xff]
      %v2101 = vld [vmem:[%s807 + $0x9a] sm:$0xff]
      %v2102 = vld [vmem:[%s807 + $0xaa] sm:$0xff]
      %v2103 = vld [vmem:[%s807 + $0xb2] sm:$0xff]
      %v2104 = vld [vmem:[%s807 + $0xc2] sm:$0xff]
      %v2105 = vld [vmem:[%s807 + $0xca] sm:$0xff]
      %v2106 = vld [vmem:[%s807 + $0xda] sm:$0xff]
      %v2107 = vld [vmem:[%s807 + $0xe2] sm:$0xff]
      %v2108 = vld [vmem:[%s807 + $0xf2] sm:$0xff]
      %v2109 = vld [vmem:[%s807 + $0xfa] sm:$0xff]
      %v2110 = vld [vmem:[%s807 + $0x10a] sm:$0xff]
      %v2111 = vld [vmem:[%s807 + $0x112] sm:$0xff]
      %v2112 = vld [vmem:[%s807 + $0x122] sm:$0xff]
      %v2113 = vld [vmem:[%s807 + $0x12a] sm:$0xff]
      %v2114 = vld [vmem:[%s807 + $0x13a] sm:$0xff]
      %v2115 = vld [vmem:[%s807 + $0x142] sm:$0xff]
      %v2116 = vld [vmem:[%s807 + $0x152] sm:$0xff]
      %v2117 = vld [vmem:[%s807 + $0x15a] sm:$0xff]
      %v2118 = vld [vmem:[%s807 + $0x16a] sm:$0xff]
      %v2119 = vld [vmem:[%s807 + $0x172] sm:$0xff]
      %v2120 = vmax.f32 %v2056, %v2088
      %v2121 = vmax.f32 %v2057, %v2089
      %v2122 = vmax.f32 %v2058, %v2090
      %v2123 = vmax.f32 %v2059, %v2091
      %v2124 = vmax.f32 %v2060, %v2092
      %v2125 = vmax.f32 %v2061, %v2093
      %v2126 = vmax.f32 %v2062, %v2094
      %v2127 = vmax.f32 %v2063, %v2095
      %v2128 = vmax.f32 %v2064, %v2096
      %v2129 = vmax.f32 %v2065, %v2097
      %v2130 = vmax.f32 %v2066, %v2098
      %v2131 = vmax.f32 %v2067, %v2099
      %v2132 = vmax.f32 %v2068, %v2100
      %v2133 = vmax.f32 %v2069, %v2101
      %v2134 = vmax.f32 %v2070, %v2102
      %v2135 = vmax.f32 %v2071, %v2103
      %v2136 = vmax.f32 %v2072, %v2104
      %v2137 = vmax.f32 %v2073, %v2105
      %v2138 = vmax.f32 %v2074, %v2106
      %v2139 = vmax.f32 %v2075, %v2107
      %v2140 = vmax.f32 %v2076, %v2108
      %v2141 = vmax.f32 %v2077, %v2109
      %v2142 = vmax.f32 %v2078, %v2110
      %v2143 = vmax.f32 %v2079, %v2111
      %v2144 = vmax.f32 %v2080, %v2112
      %v2145 = vmax.f32 %v2081, %v2113
      %v2146 = vmax.f32 %v2082, %v2114
      %v2147 = vmax.f32 %v2083, %v2115
      %v2148 = vmax.f32 %v2084, %v2116
      %v2149 = vmax.f32 %v2085, %v2117
      %v2150 = vmax.f32 %v2086, %v2118
      %v2151 = vmax.f32 %v2087, %v2119
      %2152 = vst.msk [vmem:[%s147] sm:$0xff] %vm148, %v197
      %2153 = vst.msk [vmem:[%s147 + $0x8] sm:$0xff] %vm148, %v198
      %2154 = vst.msk [vmem:[%s147 + $0x10] sm:$0xff] %vm148, %v199
      %2155 = vst.msk [vmem:[%s147 + $0x18] sm:$0xff] %vm148, %v200
      %2156 = vst.msk [vmem:[%s147 + $0x20] sm:$0xff] %vm148, %v201
      %2157 = vst.msk [vmem:[%s147 + $0x28] sm:$0xff] %vm148, %v202
      %2158 = vst.msk [vmem:[%s147 + $0x30] sm:$0xff] %vm148, %v203
      %2159 = vst.msk [vmem:[%s147 + $0x38] sm:$0xff] %vm148, %v204
      %2160 = vst.msk [vmem:[%s147 + $0x40] sm:$0xff] %vm148, %v205
      %2161 = vst.msk [vmem:[%s147 + $0x48] sm:$0xff] %vm148, %v206
      %2162 = vst.msk [vmem:[%s147 + $0x50] sm:$0xff] %vm148, %v207
      %2163 = vst.msk [vmem:[%s147 + $0x58] sm:$0xff] %vm148, %v208
      %2164 = vst.msk [vmem:[%s147 + $0x60] sm:$0xff] %vm148, %v209
      %2165 = vst.msk [vmem:[%s147 + $0x68] sm:$0xff] %vm148, %v210
      %2166 = vst.msk [vmem:[%s147 + $0x70] sm:$0xff] %vm148, %v211
      %2167 = vst.msk [vmem:[%s147 + $0x78] sm:$0xff] %vm148, %v212
      %2168 = vst.msk [vmem:[%s147 + $0x80] sm:$0xff] %vm148, %v213
      %2169 = vst.msk [vmem:[%s147 + $0x88] sm:$0xff] %vm148, %v214
      %2170 = vst.msk [vmem:[%s147 + $0x90] sm:$0xff] %vm148, %v215
      %2171 = vst.msk [vmem:[%s147 + $0x98] sm:$0xff] %vm148, %v216
      %2172 = vst.msk [vmem:[%s147 + $0xa0] sm:$0xff] %vm148, %v217
      %2173 = vst.msk [vmem:[%s147 + $0xa8] sm:$0xff] %vm148, %v218
      %2174 = vst.msk [vmem:[%s147 + $0xb0] sm:$0xff] %vm148, %v219
      %2175 = vst.msk [vmem:[%s147 + $0xb8] sm:$0xff] %vm148, %v220
      %2176 = vst.msk [vmem:[%s147 + $0xc0] sm:$0xff] %vm148, %v221
      %2177 = vst.msk [vmem:[%s147 + $0xc8] sm:$0xff] %vm148, %v222
      %2178 = vst.msk [vmem:[%s147 + $0xd0] sm:$0xff] %vm148, %v223
      %2179 = vst.msk [vmem:[%s147 + $0xd8] sm:$0xff] %vm148, %v224
      %2180 = vst.msk [vmem:[%s147 + $0xe0] sm:$0xff] %vm148, %v225
      %2181 = vst.msk [vmem:[%s147 + $0xe8] sm:$0xff] %vm148, %v226
      %2182 = vst.msk [vmem:[%s147 + $0xf0] sm:$0xff] %vm148, %v227
      %2183 = vst.msk [vmem:[%s147 + $0xf8] sm:$0xff] %vm148, %v228
      %s2184 = scalar_lea.vmem %s147, 256
      %2185 = vst.msk [vmem:[%s2184] sm:$0xff] %vm148, %v840
      %2186 = vst.msk [vmem:[%s2184 + $0x8] sm:$0xff] %vm148, %v841
      %2187 = vst.msk [vmem:[%s2184 + $0x10] sm:$0xff] %vm148, %v842
      %2188 = vst.msk [vmem:[%s2184 + $0x18] sm:$0xff] %vm148, %v843
      %2189 = vst.msk [vmem:[%s2184 + $0x20] sm:$0xff] %vm148, %v844
      %2190 = vst.msk [vmem:[%s2184 + $0x28] sm:$0xff] %vm148, %v845
      %2191 = vst.msk [vmem:[%s2184 + $0x30] sm:$0xff] %vm148, %v846
      %2192 = vst.msk [vmem:[%s2184 + $0x38] sm:$0xff] %vm148, %v847
      %2193 = vst.msk [vmem:[%s2184 + $0x40] sm:$0xff] %vm148, %v848
      %2194 = vst.msk [vmem:[%s2184 + $0x48] sm:$0xff] %vm148, %v849
      %2195 = vst.msk [vmem:[%s2184 + $0x50] sm:$0xff] %vm148, %v850
      %2196 = vst.msk [vmem:[%s2184 + $0x58] sm:$0xff] %vm148, %v851
      %2197 = vst.msk [vmem:[%s2184 + $0x60] sm:$0xff] %vm148, %v852
      %2198 = vst.msk [vmem:[%s2184 + $0x68] sm:$0xff] %vm148, %v853
      %2199 = vst.msk [vmem:[%s2184 + $0x70] sm:$0xff] %vm148, %v854
      %2200 = vst.msk [vmem:[%s2184 + $0x78] sm:$0xff] %vm148, %v855
      %2201 = vst.msk [vmem:[%s2184 + $0x80] sm:$0xff] %vm148, %v856
      %2202 = vst.msk [vmem:[%s2184 + $0x88] sm:$0xff] %vm148, %v857
      %2203 = vst.msk [vmem:[%s2184 + $0x90] sm:$0xff] %vm148, %v858
      %2204 = vst.msk [vmem:[%s2184 + $0x98] sm:$0xff] %vm148, %v859
      %2205 = vst.msk [vmem:[%s2184 + $0xa0] sm:$0xff] %vm148, %v860
      %2206 = vst.msk [vmem:[%s2184 + $0xa8] sm:$0xff] %vm148, %v861
      %2207 = vst.msk [vmem:[%s2184 + $0xb0] sm:$0xff] %vm148, %v862
      %2208 = vst.msk [vmem:[%s2184 + $0xb8] sm:$0xff] %vm148, %v863
      %2209 = vst.msk [vmem:[%s2184 + $0xc0] sm:$0xff] %vm148, %v864
      %2210 = vst.msk [vmem:[%s2184 + $0xc8] sm:$0xff] %vm148, %v865
      %2211 = vst.msk [vmem:[%s2184 + $0xd0] sm:$0xff] %vm148, %v866
      %2212 = vst.msk [vmem:[%s2184 + $0xd8] sm:$0xff] %vm148, %v867
      %2213 = vst.msk [vmem:[%s2184 + $0xe0] sm:$0xff] %vm148, %v868
      %2214 = vst.msk [vmem:[%s2184 + $0xe8] sm:$0xff] %vm148, %v869
      %2215 = vst.msk [vmem:[%s2184 + $0xf0] sm:$0xff] %vm148, %v870
      %2216 = vst.msk [vmem:[%s2184 + $0xf8] sm:$0xff] %vm148, %v871
      %s2217 = scalar_lea.vmem %s147, 512
      %2218 = vst.msk [vmem:[%s2217] sm:$0xff] %vm148, %v1480
      %2219 = vst.msk [vmem:[%s2217 + $0x8] sm:$0xff] %vm148, %v1481
      %2220 = vst.msk [vmem:[%s2217 + $0x10] sm:$0xff] %vm148, %v1482
      %2221 = vst.msk [vmem:[%s2217 + $0x18] sm:$0xff] %vm148, %v1483
      %2222 = vst.msk [vmem:[%s2217 + $0x20] sm:$0xff] %vm148, %v1484
      %2223 = vst.msk [vmem:[%s2217 + $0x28] sm:$0xff] %vm148, %v1485
      %2224 = vst.msk [vmem:[%s2217 + $0x30] sm:$0xff] %vm148, %v1486
      %2225 = vst.msk [vmem:[%s2217 + $0x38] sm:$0xff] %vm148, %v1487
      %2226 = vst.msk [vmem:[%s2217 + $0x40] sm:$0xff] %vm148, %v1488
      %2227 = vst.msk [vmem:[%s2217 + $0x48] sm:$0xff] %vm148, %v1489
      %2228 = vst.msk [vmem:[%s2217 + $0x50] sm:$0xff] %vm148, %v1490
      %2229 = vst.msk [vmem:[%s2217 + $0x58] sm:$0xff] %vm148, %v1491
      %2230 = vst.msk [vmem:[%s2217 + $0x60] sm:$0xff] %vm148, %v1492
      %2231 = vst.msk [vmem:[%s2217 + $0x68] sm:$0xff] %vm148, %v1493
      %2232 = vst.msk [vmem:[%s2217 + $0x70] sm:$0xff] %vm148, %v1494
      %2233 = vst.msk [vmem:[%s2217 + $0x78] sm:$0xff] %vm148, %v1495
      %2234 = vst.msk [vmem:[%s2217 + $0x80] sm:$0xff] %vm148, %v1496
      %2235 = vst.msk [vmem:[%s2217 + $0x88] sm:$0xff] %vm148, %v1497
      %2236 = vst.msk [vmem:[%s2217 + $0x90] sm:$0xff] %vm148, %v1498
      %2237 = vst.msk [vmem:[%s2217 + $0x98] sm:$0xff] %vm148, %v1499
      %2238 = vst.msk [vmem:[%s2217 + $0xa0] sm:$0xff] %vm148, %v1500
      %2239 = vst.msk [vmem:[%s2217 + $0xa8] sm:$0xff] %vm148, %v1501
      %2240 = vst.msk [vmem:[%s2217 + $0xb0] sm:$0xff] %vm148, %v1502
      %2241 = vst.msk [vmem:[%s2217 + $0xb8] sm:$0xff] %vm148, %v1503
      %2242 = vst.msk [vmem:[%s2217 + $0xc0] sm:$0xff] %vm148, %v1504
      %2243 = vst.msk [vmem:[%s2217 + $0xc8] sm:$0xff] %vm148, %v1505
      %2244 = vst.msk [vmem:[%s2217 + $0xd0] sm:$0xff] %vm148, %v1506
      %2245 = vst.msk [vmem:[%s2217 + $0xd8] sm:$0xff] %vm148, %v1507
      %2246 = vst.msk [vmem:[%s2217 + $0xe0] sm:$0xff] %vm148, %v1508
      %2247 = vst.msk [vmem:[%s2217 + $0xe8] sm:$0xff] %vm148, %v1509
      %2248 = vst.msk [vmem:[%s2217 + $0xf0] sm:$0xff] %vm148, %v1510
      %2249 = vst.msk [vmem:[%s2217 + $0xf8] sm:$0xff] %vm148, %v1511
      %s2250 = scalar_lea.vmem %s147, 768
      %2251 = vst.msk [vmem:[%s2250] sm:$0xff] %vm148, %v2120
      %2252 = vst.msk [vmem:[%s2250 + $0x8] sm:$0xff] %vm148, %v2121
      %2253 = vst.msk [vmem:[%s2250 + $0x10] sm:$0xff] %vm148, %v2122
      %2254 = vst.msk [vmem:[%s2250 + $0x18] sm:$0xff] %vm148, %v2123
      %2255 = vst.msk [vmem:[%s2250 + $0x20] sm:$0xff] %vm148, %v2124
      %2256 = vst.msk [vmem:[%s2250 + $0x28] sm:$0xff] %vm148, %v2125
      %2257 = vst.msk [vmem:[%s2250 + $0x30] sm:$0xff] %vm148, %v2126
      %2258 = vst.msk [vmem:[%s2250 + $0x38] sm:$0xff] %vm148, %v2127
      %2259 = vst.msk [vmem:[%s2250 + $0x40] sm:$0xff] %vm148, %v2128
      %2260 = vst.msk [vmem:[%s2250 + $0x48] sm:$0xff] %vm148, %v2129
      %2261 = vst.msk [vmem:[%s2250 + $0x50] sm:$0xff] %vm148, %v2130
      %2262 = vst.msk [vmem:[%s2250 + $0x58] sm:$0xff] %vm148, %v2131
      %2263 = vst.msk [vmem:[%s2250 + $0x60] sm:$0xff] %vm148, %v2132
      %2264 = vst.msk [vmem:[%s2250 + $0x68] sm:$0xff] %vm148, %v2133
      %2265 = vst.msk [vmem:[%s2250 + $0x70] sm:$0xff] %vm148, %v2134
      %2266 = vst.msk [vmem:[%s2250 + $0x78] sm:$0xff] %vm148, %v2135
      %2267 = vst.msk [vmem:[%s2250 + $0x80] sm:$0xff] %vm148, %v2136
      %2268 = vst.msk [vmem:[%s2250 + $0x88] sm:$0xff] %vm148, %v2137
      %2269 = vst.msk [vmem:[%s2250 + $0x90] sm:$0xff] %vm148, %v2138
      %2270 = vst.msk [vmem:[%s2250 + $0x98] sm:$0xff] %vm148, %v2139
      %2271 = vst.msk [vmem:[%s2250 + $0xa0] sm:$0xff] %vm148, %v2140
      %2272 = vst.msk [vmem:[%s2250 + $0xa8] sm:$0xff] %vm148, %v2141
      %2273 = vst.msk [vmem:[%s2250 + $0xb0] sm:$0xff] %vm148, %v2142
      %2274 = vst.msk [vmem:[%s2250 + $0xb8] sm:$0xff] %vm148, %v2143
      %2275 = vst.msk [vmem:[%s2250 + $0xc0] sm:$0xff] %vm148, %v2144
      %2276 = vst.msk [vmem:[%s2250 + $0xc8] sm:$0xff] %vm148, %v2145
      %2277 = vst.msk [vmem:[%s2250 + $0xd0] sm:$0xff] %vm148, %v2146
      %2278 = vst.msk [vmem:[%s2250 + $0xd8] sm:$0xff] %vm148, %v2147
      %2279 = vst.msk [vmem:[%s2250 + $0xe0] sm:$0xff] %vm148, %v2148
      %2280 = vst.msk [vmem:[%s2250 + $0xe8] sm:$0xff] %vm148, %v2149
      %2281 = vst.msk [vmem:[%s2250 + $0xf0] sm:$0xff] %vm148, %v2150
      %2282 = vst.msk [vmem:[%s2250 + $0xf8] sm:$0xff] %vm148, %v2151
      %p2283 = scmp.lt.s32.totalorder %s16, 1
      %s2284 = scalar_select %p2283, %s16, 1
      %p2285 = scmp.lt.s32.totalorder %s17, 0
      %s2286 = scalar_select %p2285, %s17, 0
      %s2287 = smul.addr %s2284, 128
      %s2288 = sadd.s32 %s2286, %s2287
      %s2289 = smul.addr %s2288, 8
      %s2290 = scalar_lea.vmem %s1, %s2289
      // Predicated region
      $region25: #{tpu_custom_call.1} parent=23 // pred_check
        %p2291 = pneg %p72
      $region26: #{tpu_custom_call.1} parent=23 // pred_check_branch
        %2293 = sbr.rel (%p2291) target = $region28
      $region27: #{tpu_custom_call.1} parent=23 // pred_region
        _
      $region28: #{tpu_custom_call.1} parent=23 // pred_fallthru
        _
    $region24: #{tpu_custom_call.1} parent=5 // pred_fallthru
      _
    %p2294 = scmp.le.s32.totalorder 2, %s7
    // Predicated region
    $region29: #{tpu_custom_call.1} parent=5 // pred_check
      %p2295 = pneg %p2294
    $region30: #{tpu_custom_call.1} parent=5 // pred_check_branch
      %2297 = sbr.rel (%p2295) target = $region32
    $region31: #{tpu_custom_call.1} parent=5 // pred_region
      %s2298 = ssub.s32 %s7, 2
      // Predicated region
      $region33: #{tpu_custom_call.1} parent=31 // pred_check
        %p2299 = pneg %p78
      $region34: #{tpu_custom_call.1} parent=31 // pred_check_branch
        %2301 = sbr.rel (%p2299) target = $region36
      $region35: #{tpu_custom_call.1} parent=31 // pred_region
        %p2302 = scmp.lt.s32.totalorder %s18, 1
        %s2303 = scalar_select %p2302, %s18, 1
        %p2304 = scmp.lt.s32.totalorder %s19, 0
        %s2305 = scalar_select %p2304, %s19, 0
        %s2306 = smul.addr %s2303, 128
        %s2307 = sadd.s32 %s2305, %s2306
        %s2308 = smul.addr %s2307, 8
        %s2309 = scalar_lea.vmem %s1, %s2308
      $region36: #{tpu_custom_call.1} parent=31 // pred_fallthru
        _
    $region32: #{tpu_custom_call.1} parent=5 // pred_fallthru
      _
  $region6: #{tpu_custom_call.1} parent=0 // loop_footer
    %s11 = sadd.s32 1, %s7
  $region7: #{tpu_custom_call.1} parent=0 // loop_footer_branch
    %6 = sbr.rel target = $region3
  $region8: #{tpu_custom_call.1} parent=0 // loop_exit
    _

</llo_original>
